<compile_context>
chip_gen: v5e
topology: v5e:2x2
jax: 0.10.0
libtpu: 0.0.40
codegen_flags: <defaults>
</compile_context>

<pallas_src>
import jax
import jax.numpy as jnp
from jax.experimental import pallas as pl
from jax.experimental.pallas import tpu as pltpu


def _fused_ensemble_kernel(x_ref, w1_ref, b1_ref, w2_ref, b2_ref, w3_ref,
                           b3_ref, o_ref):
    """Single grid step: statically unrolled over weight groups, 3 fused
    lane-dense MXU matmuls per group, f32 accumulation of the ensemble mean."""
    x = x_ref[...]                                   # (Bp, din) bf16
    G = w1_ref.shape[0]                              # python int at trace time
    acc = jnp.zeros(o_ref.shape, jnp.float32)        # (Bp, dout_pad)
    for g in range(G):                               # static unroll (G<=2)
        # Layer 1: all Eg members of group g at once: (Bp,din)@(din,Eg*32)
        h1 = jnp.dot(x, w1_ref[g], preferred_element_type=jnp.float32)
        h1 = jnp.maximum(h1 + b1_ref[g], 0.0)
        # Layer 2: block-diagonal weights keep members independent:
        # (Bp, Eg*32) @ (Eg*32, Eg*8)
        h2 = jnp.dot(h1.astype(jnp.bfloat16), w2_ref[g],
                     preferred_element_type=jnp.float32)
        h2 = jnp.maximum(h2 + b2_ref[g], 0.0)
        # Layer 3: members stacked along the contraction axis with 1/E folded
        # in -> this matmul directly accumulates the ensemble mean:
        # (Bp, Eg*8) @ (Eg*8, dout_pad)
        acc = acc + jnp.dot(h2.astype(jnp.bfloat16), w3_ref[g],
                            preferred_element_type=jnp.float32)
    o_ref[...] = acc + b3_ref[...]


def make_deep_ensemble_forward(w1, b1, w2, b2, w3, b3, *, num_groups=2):
    """One-time weight repacking + jitted forward.

    w*: (E, in, out) pre-transposed torch Linear weights; b*: (E, out).
    Returns `forward(x)` computing the ensemble-mean MLP output (B, out_dim).
    """
    E, din, h1 = w1.shape
    _, _, h2 = w2.shape
    _, _, dout = w3.shape

    # Pick a group count that keeps fused widths lane-dense (multiples of 128).
    G = num_groups
    while G > 1 and (E % G != 0 or ((E // G) * h1) % 128 != 0
                     or ((E // G) * h2) % 128 != 0):
        G -= 1
    Eg = E // G
    gw1 = Eg * h1                       # 512 for E=32, G=2
    gw2 = Eg * h2                       # 128
    dout_pad = max(128, ((dout + 127) // 128) * 128)

    # ---- one-time packing (NOT in the per-call path) -----------------------
    # Layer 1: concatenate each group's member weights along the output axis.
    w1f = jnp.transpose(w1.reshape(G, Eg, din, h1), (0, 2, 1, 3))
    w1f = w1f.reshape(G, din, gw1).astype(jnp.bfloat16)
    b1f = b1.reshape(G, 1, gw1).astype(jnp.float32)

    # Layer 2: block-diagonal so member e's h1 slice only feeds member e.
    eye = jnp.eye(Eg, dtype=w2.dtype)
    w2g = w2.reshape(G, Eg, h1, h2)
    w2bd = (eye[None, :, None, :, None] * w2g[:, :, :, None, :])
    w2bd = w2bd.reshape(G, gw1, gw2).astype(jnp.bfloat16)
    b2f = b2.reshape(G, 1, gw2).astype(jnp.float32)

    # Layer 3: stack members along the contraction axis; fold the 1/E mean in.
    w3s = w3.reshape(G, gw2, dout) / E
    w3s = jnp.pad(w3s, ((0, 0), (0, 0), (0, dout_pad - dout)))
    w3s = w3s.astype(jnp.bfloat16)
    b3f = b3.sum(axis=0) / E
    b3f = jnp.pad(b3f, (0, dout_pad - dout)).reshape(1, dout_pad)
    b3f = b3f.astype(jnp.float32)

    # Materialize the packed arrays on device once.
    w1f, b1f, w2bd, b2f, w3s, b3f = jax.block_until_ready(
        (w1f, b1f, w2bd, b2f, w3s, b3f))

    @jax.jit
    def forward(x):
        B = x.shape[0]
        x2d = x.reshape(B, -1)
        B_pad = max(8, ((B + 7) // 8) * 8)
        x_pad = jnp.pad(x2d, ((0, B_pad - B), (0, 0))).astype(jnp.bfloat16)

        out = pl.pallas_call(
            _fused_ensemble_kernel,
            out_shape=jax.ShapeDtypeStruct((B_pad, dout_pad), jnp.float32),
            grid=(1,),
            in_specs=[
                pl.BlockSpec((B_pad, din), lambda i: (0, 0)),          # x
                pl.BlockSpec((G, din, gw1), lambda i: (0, 0, 0)),      # W1 groups
                pl.BlockSpec((G, 1, gw1), lambda i: (0, 0, 0)),        # b1 groups
                pl.BlockSpec((G, gw1, gw2), lambda i: (0, 0, 0)),      # W2 block-diag
                pl.BlockSpec((G, 1, gw2), lambda i: (0, 0, 0)),        # b2 groups
                pl.BlockSpec((G, gw2, dout_pad), lambda i: (0, 0, 0)), # W3 (/E folded)
                pl.BlockSpec((1, dout_pad), lambda i: (0, 0)),         # b3 (mean)
            ],
            out_specs=pl.BlockSpec((B_pad, dout_pad), lambda i: (0, 0)),
            compiler_params=pltpu.CompilerParams(
                dimension_semantics=("arbitrary",)),
        )(x_pad, w1f, b1f, w2bd, b2f, w3s, b3f)

        return out[:B, :dout]

    return forward


def _reference(x, w1, b1, w2, b2, w3, b3):
    """Pure-JAX reference mirroring the PyTorch forward (same bf16 operand
    rounding as the kernel so products match closely; f32 accumulation)."""
    B = x.shape[0]
    x2d = x.reshape(B, -1)
    xb = x2d.astype(jnp.bfloat16)
    w1b = w1.astype(jnp.bfloat16)
    w2b = w2.astype(jnp.bfloat16)
    w3b = w3.astype(jnp.bfloat16)
    h1 = jnp.einsum('bd,edh->ebh', xb, w1b,
                    preferred_element_type=jnp.float32) + b1[:, None, :]
    h1 = jnp.maximum(h1, 0.0)
    h2 = jnp.einsum('ebh,ehk->ebk', h1.astype(jnp.bfloat16), w2b,
                    preferred_element_type=jnp.float32) + b2[:, None, :]
    h2 = jnp.maximum(h2, 0.0)
    y = jnp.einsum('ebk,eko->ebo', h2.astype(jnp.bfloat16), w3b,
                   preferred_element_type=jnp.float32) + b3[:, None, :]
    return jnp.mean(y, axis=0)


if __name__ == "__main__":
    # Module hyper-params (consistent with DeepEnsembleMLP defaults).
    num_mlps = 32
    B, C, H, W = 2, 4, 16, 16
    input_dim = C * H * W          # 1024 (x.view(x.size(0), -1))
    hidden1, hidden2 = 32, 8
    output_dim = 8

    key = jax.random.PRNGKey(0)
    keys = jax.random.split(key, 7)

    x = jax.random.normal(keys[0], (B, C, H, W), dtype=jnp.float32)

    # Deterministic synthetic parameters, stored as (E, in, out) so the kernel
    # computes y = x @ W + b (equivalent to torch Linear's x @ W.T + b).
    scale = 0.05
    w1 = scale * jax.random.normal(keys[1], (num_mlps, input_dim, hidden1), jnp.float32)
    b1 = scale * jax.random.normal(keys[2], (num_mlps, hidden1), jnp.float32)
    w2 = scale * jax.random.normal(keys[3], (num_mlps, hidden1, hidden2), jnp.float32)
    b2 = scale * jax.random.normal(keys[4], (num_mlps, hidden2), jnp.float32)
    w3 = scale * jax.random.normal(keys[5], (num_mlps, hidden2, output_dim), jnp.float32)
    b3 = scale * jax.random.normal(keys[6], (num_mlps, output_dim), jnp.float32)

    # One-time packing (kept out of the per-call hot path).
    forward = make_deep_ensemble_forward(w1, b1, w2, b2, w3, b3, num_groups=2)

    out = jax.block_until_ready(forward(x))

    ref = _reference(x, w1, b1, w2, b2, w3, b3)
    assert out.shape == (B, output_dim), out.shape
    max_diff = float(jnp.max(jnp.abs(out - ref)))
    assert jnp.allclose(out, ref, atol=1e-3, rtol=1e-2), (
        "mismatch vs reference, max abs diff = %s" % max_diff)

    print("KERNEL_OK")
</pallas_src>

<mosaic_0001>
module attributes {stable_mosaic.version = 11 : i64} {
  func.func @_fused_ensemble_kernel(%arg0: i32, %arg1: memref<8x1024xbf16, #tpu.memory_space<vmem>>, %arg2: memref<2x1024x512xbf16, #tpu.memory_space<vmem>>, %arg3: memref<2x1x512xf32, #tpu.memory_space<vmem>>, %arg4: memref<2x512x128xbf16, #tpu.memory_space<vmem>>, %arg5: memref<2x1x128xf32, #tpu.memory_space<vmem>>, %arg6: memref<2x128x128xbf16, #tpu.memory_space<vmem>>, %arg7: memref<1x128xf32, #tpu.memory_space<vmem>>, %arg8: memref<8x128xf32, #tpu.memory_space<vmem>>) attributes {dimension_semantics = [#tpu.dimension_semantics<arbitrary>], iteration_bounds = array<i64: 1>, scalar_prefetch = 0 : i64, scratch_operands = 0 : i64, tpu.core_type = #tpu.core_type<tc>, window_params = [{pipeline_mode = #tpu.pipeline_mode<synchronous>, transform_indices = @transform_0, window_bounds = array<i64: 8, 1024>}, {pipeline_mode = #tpu.pipeline_mode<synchronous>, transform_indices = @transform_1, window_bounds = array<i64: 2, 1024, 512>}, {pipeline_mode = #tpu.pipeline_mode<synchronous>, transform_indices = @transform_2, window_bounds = array<i64: 2, 1, 512>}, {pipeline_mode = #tpu.pipeline_mode<synchronous>, transform_indices = @transform_3, window_bounds = array<i64: 2, 512, 128>}, {pipeline_mode = #tpu.pipeline_mode<synchronous>, transform_indices = @transform_4, window_bounds = array<i64: 2, 1, 128>}, {pipeline_mode = #tpu.pipeline_mode<synchronous>, transform_indices = @transform_5, window_bounds = array<i64: 2, 128, 128>}, {pipeline_mode = #tpu.pipeline_mode<synchronous>, transform_indices = @transform_6, window_bounds = array<i64: 1, 128>}, {pipeline_mode = #tpu.pipeline_mode<synchronous>, transform_indices = @transform_7, window_bounds = array<i64: 8, 128>}]} {
    %c0 = arith.constant 0 : index
    %c0_0 = arith.constant 0 : index
    %0 = vector.load %arg1[%c0, %c0_0] : memref<8x1024xbf16, #tpu.memory_space<vmem>>, vector<8x1024xbf16>
    %cst = arith.constant 0.000000e+00 : f32
    %1 = vector.broadcast %cst : f32 to vector<8x128xf32>
    %c0_1 = arith.constant 0 : index
    %c0_2 = arith.constant 0 : index
    %c0_3 = arith.constant 0 : index
    %2 = vector.load %arg2[%c0_1, %c0_2, %c0_3] : memref<2x1024x512xbf16, #tpu.memory_space<vmem>>, vector<1x1024x512xbf16>
    %3 = vector.shape_cast %2 : vector<1x1024x512xbf16> to vector<1024x512xbf16>
    %cst_4 = arith.constant dense<0.000000e+00> : vector<8x512xf32>
    %4 = tpu.matmul %0, %3, %cst_4 {dimension_numbers = #tpu.dot_dimension_numbers<[1], [0], [0], [1], [0, 0, 1, 1], [], []>} : vector<8x1024xbf16>, vector<1024x512xbf16>, vector<8x512xf32> -> vector<8x512xf32>
    %c0_5 = arith.constant 0 : index
    %c0_6 = arith.constant 0 : index
    %c0_7 = arith.constant 0 : index
    %5 = vector.load %arg3[%c0_5, %c0_6, %c0_7] : memref<2x1x512xf32, #tpu.memory_space<vmem>>, vector<1x1x512xf32>
    %6 = vector.shape_cast %5 : vector<1x1x512xf32> to vector<1x512xf32>
    %7 = vector.broadcast %6 : vector<1x512xf32> to vector<8x512xf32>
    %8 = arith.addf %4, %7 : vector<8x512xf32>
    %cst_8 = arith.constant 0.000000e+00 : f32
    %9 = vector.broadcast %cst_8 : f32 to vector<8x512xf32>
    %10 = arith.maximumf %8, %9 : vector<8x512xf32>
    %11 = arith.truncf %10 : vector<8x512xf32> to vector<8x512xbf16>
    %c0_9 = arith.constant 0 : index
    %c0_10 = arith.constant 0 : index
    %c0_11 = arith.constant 0 : index
    %12 = vector.load %arg4[%c0_9, %c0_10, %c0_11] : memref<2x512x128xbf16, #tpu.memory_space<vmem>>, vector<1x512x128xbf16>
    %13 = vector.shape_cast %12 : vector<1x512x128xbf16> to vector<512x128xbf16>
    %cst_12 = arith.constant dense<0.000000e+00> : vector<8x128xf32>
    %14 = tpu.matmul %11, %13, %cst_12 {dimension_numbers = #tpu.dot_dimension_numbers<[1], [0], [0], [1], [0, 0, 1, 1], [], []>} : vector<8x512xbf16>, vector<512x128xbf16>, vector<8x128xf32> -> vector<8x128xf32>
    %c0_13 = arith.constant 0 : index
    %c0_14 = arith.constant 0 : index
    %c0_15 = arith.constant 0 : index
    %15 = vector.load %arg5[%c0_13, %c0_14, %c0_15] : memref<2x1x128xf32, #tpu.memory_space<vmem>>, vector<1x1x128xf32>
    %16 = vector.shape_cast %15 : vector<1x1x128xf32> to vector<1x128xf32>
    %17 = vector.broadcast %16 : vector<1x128xf32> to vector<8x128xf32>
    %18 = arith.addf %14, %17 : vector<8x128xf32>
    %cst_16 = arith.constant 0.000000e+00 : f32
    %19 = vector.broadcast %cst_16 : f32 to vector<8x128xf32>
    %20 = arith.maximumf %18, %19 : vector<8x128xf32>
    %21 = arith.truncf %20 : vector<8x128xf32> to vector<8x128xbf16>
    %c0_17 = arith.constant 0 : index
    %c0_18 = arith.constant 0 : index
    %c0_19 = arith.constant 0 : index
    %22 = vector.load %arg6[%c0_17, %c0_18, %c0_19] : memref<2x128x128xbf16, #tpu.memory_space<vmem>>, vector<1x128x128xbf16>
    %23 = vector.shape_cast %22 : vector<1x128x128xbf16> to vector<128x128xbf16>
    %cst_20 = arith.constant dense<0.000000e+00> : vector<8x128xf32>
    %24 = tpu.matmul %21, %23, %cst_20 {dimension_numbers = #tpu.dot_dimension_numbers<[1], [0], [0], [1], [0, 0, 1, 1], [], []>} : vector<8x128xbf16>, vector<128x128xbf16>, vector<8x128xf32> -> vector<8x128xf32>
    %25 = arith.addf %1, %24 : vector<8x128xf32>
    %c1 = arith.constant 1 : index
    %c0_21 = arith.constant 0 : index
    %c0_22 = arith.constant 0 : index
    %26 = vector.load %arg2[%c1, %c0_21, %c0_22] : memref<2x1024x512xbf16, #tpu.memory_space<vmem>>, vector<1x1024x512xbf16>
    %27 = vector.shape_cast %26 : vector<1x1024x512xbf16> to vector<1024x512xbf16>
    %cst_23 = arith.constant dense<0.000000e+00> : vector<8x512xf32>
    %28 = tpu.matmul %0, %27, %cst_23 {dimension_numbers = #tpu.dot_dimension_numbers<[1], [0], [0], [1], [0, 0, 1, 1], [], []>} : vector<8x1024xbf16>, vector<1024x512xbf16>, vector<8x512xf32> -> vector<8x512xf32>
    %c1_24 = arith.constant 1 : index
    %c0_25 = arith.constant 0 : index
    %c0_26 = arith.constant 0 : index
    %29 = vector.load %arg3[%c1_24, %c0_25, %c0_26] : memref<2x1x512xf32, #tpu.memory_space<vmem>>, vector<1x1x512xf32>
    %30 = vector.shape_cast %29 : vector<1x1x512xf32> to vector<1x512xf32>
    %31 = vector.broadcast %30 : vector<1x512xf32> to vector<8x512xf32>
    %32 = arith.addf %28, %31 : vector<8x512xf32>
    %cst_27 = arith.constant 0.000000e+00 : f32
    %33 = vector.broadcast %cst_27 : f32 to vector<8x512xf32>
    %34 = arith.maximumf %32, %33 : vector<8x512xf32>
    %35 = arith.truncf %34 : vector<8x512xf32> to vector<8x512xbf16>
    %c1_28 = arith.constant 1 : index
    %c0_29 = arith.constant 0 : index
    %c0_30 = arith.constant 0 : index
    %36 = vector.load %arg4[%c1_28, %c0_29, %c0_30] : memref<2x512x128xbf16, #tpu.memory_space<vmem>>, vector<1x512x128xbf16>
    %37 = vector.shape_cast %36 : vector<1x512x128xbf16> to vector<512x128xbf16>
    %cst_31 = arith.constant dense<0.000000e+00> : vector<8x128xf32>
    %38 = tpu.matmul %35, %37, %cst_31 {dimension_numbers = #tpu.dot_dimension_numbers<[1], [0], [0], [1], [0, 0, 1, 1], [], []>} : vector<8x512xbf16>, vector<512x128xbf16>, vector<8x128xf32> -> vector<8x128xf32>
    %c1_32 = arith.constant 1 : index
    %c0_33 = arith.constant 0 : index
    %c0_34 = arith.constant 0 : index
    %39 = vector.load %arg5[%c1_32, %c0_33, %c0_34] : memref<2x1x128xf32, #tpu.memory_space<vmem>>, vector<1x1x128xf32>
    %40 = vector.shape_cast %39 : vector<1x1x128xf32> to vector<1x128xf32>
    %41 = vector.broadcast %40 : vector<1x128xf32> to vector<8x128xf32>
    %42 = arith.addf %38, %41 : vector<8x128xf32>
    %cst_35 = arith.constant 0.000000e+00 : f32
    %43 = vector.broadcast %cst_35 : f32 to vector<8x128xf32>
    %44 = arith.maximumf %42, %43 : vector<8x128xf32>
    %45 = arith.truncf %44 : vector<8x128xf32> to vector<8x128xbf16>
    %c1_36 = arith.constant 1 : index
    %c0_37 = arith.constant 0 : index
    %c0_38 = arith.constant 0 : index
    %46 = vector.load %arg6[%c1_36, %c0_37, %c0_38] : memref<2x128x128xbf16, #tpu.memory_space<vmem>>, vector<1x128x128xbf16>
    %47 = vector.shape_cast %46 : vector<1x128x128xbf16> to vector<128x128xbf16>
    %cst_39 = arith.constant dense<0.000000e+00> : vector<8x128xf32>
    %48 = tpu.matmul %45, %47, %cst_39 {dimension_numbers = #tpu.dot_dimension_numbers<[1], [0], [0], [1], [0, 0, 1, 1], [], []>} : vector<8x128xbf16>, vector<128x128xbf16>, vector<8x128xf32> -> vector<8x128xf32>
    %49 = arith.addf %25, %48 : vector<8x128xf32>
    %c0_40 = arith.constant 0 : index
    %c0_41 = arith.constant 0 : index
    %50 = vector.load %arg7[%c0_40, %c0_41] : memref<1x128xf32, #tpu.memory_space<vmem>>, vector<1x128xf32>
    %51 = vector.broadcast %50 : vector<1x128xf32> to vector<8x128xf32>
    %52 = arith.addf %49, %51 : vector<8x128xf32>
    %c0_42 = arith.constant 0 : index
    %c0_43 = arith.constant 0 : index
    %53 = vector.load %arg8[%c0_42, %c0_43] : memref<8x128xf32, #tpu.memory_space<vmem>>, vector<8x128xf32>
    tpu.vector_store %arg8[%c0_42, %c0_43], %52 {strides = array<i32>} : memref<8x128xf32, #tpu.memory_space<vmem>>, vector<8x128xf32>,
    return
  }
  func.func @transform_0(%arg0: i32) -> (i32, i32) {
    %c0_i32 = arith.constant 0 : i32
    %c0_i32_0 = arith.constant 0 : i32
    %c0_i32_1 = arith.constant 0 : i32
    return %c0_i32, %c0_i32_0 : i32, i32
  }
  func.func @transform_1(%arg0: i32) -> (i32, i32, i32) {
    %c0_i32 = arith.constant 0 : i32
    %c0_i32_0 = arith.constant 0 : i32
    %c0_i32_1 = arith.constant 0 : i32
    %c0_i32_2 = arith.constant 0 : i32
    return %c0_i32, %c0_i32_0, %c0_i32_1 : i32, i32, i32
  }
  func.func @transform_2(%arg0: i32) -> (i32, i32, i32) {
    %c0_i32 = arith.constant 0 : i32
    %c0_i32_0 = arith.constant 0 : i32
    %c0_i32_1 = arith.constant 0 : i32
    %c0_i32_2 = arith.constant 0 : i32
    return %c0_i32, %c0_i32_0, %c0_i32_1 : i32, i32, i32
  }
  func.func @transform_3(%arg0: i32) -> (i32, i32, i32) {
    %c0_i32 = arith.constant 0 : i32
    %c0_i32_0 = arith.constant 0 : i32
    %c0_i32_1 = arith.constant 0 : i32
    %c0_i32_2 = arith.constant 0 : i32
    return %c0_i32, %c0_i32_0, %c0_i32_1 : i32, i32, i32
  }
  func.func @transform_4(%arg0: i32) -> (i32, i32, i32) {
    %c0_i32 = arith.constant 0 : i32
    %c0_i32_0 = arith.constant 0 : i32
    %c0_i32_1 = arith.constant 0 : i32
    %c0_i32_2 = arith.constant 0 : i32
    return %c0_i32, %c0_i32_0, %c0_i32_1 : i32, i32, i32
  }
  func.func @transform_5(%arg0: i32) -> (i32, i32, i32) {
    %c0_i32 = arith.constant 0 : i32
    %c0_i32_0 = arith.constant 0 : i32
    %c0_i32_1 = arith.constant 0 : i32
    %c0_i32_2 = arith.constant 0 : i32
    return %c0_i32, %c0_i32_0, %c0_i32_1 : i32, i32, i32
  }
  func.func @transform_6(%arg0: i32) -> (i32, i32) {
    %c0_i32 = arith.constant 0 : i32
    %c0_i32_0 = arith.constant 0 : i32
    %c0_i32_1 = arith.constant 0 : i32
    return %c0_i32, %c0_i32_0 : i32, i32
  }
  func.func @transform_7(%arg0: i32) -> (i32, i32) {
    %c0_i32 = arith.constant 0 : i32
    %c0_i32_0 = arith.constant 0 : i32
    %c0_i32_1 = arith.constant 0 : i32
    return %c0_i32, %c0_i32_0 : i32, i32
  }
}

</mosaic_0001>

<llo_original>
// kernel: forward.1
$region0: #{forward.1}
  #allocation0 [shape = 'u32[]', space=smem, size = 0x4, offset = 0x4, fixed_abs, tag = 'smem constant byte address 0x4 - core index']
  #allocation1 [shape = 'u32[72,128]{1,0:T(1,128)}', space=vmem, size = 0x9000, scoped, tag = 'internal scratch']
  %s0 = inlined_call_operand.vmem [shape: bf16[8,1024], index: 0, kind: input, shape index: {}]
  %s1 = inlined_call_operand.hbm [shape: bf16[2,1024,512], index: 1, kind: input, shape index: {}]
  %s2 = inlined_call_operand.hbm [shape: f32[2,1,512], index: 2, kind: input, shape index: {}]
  %s3 = inlined_call_operand.hbm [shape: bf16[2,512,128], index: 3, kind: input, shape index: {}]
  %s4 = inlined_call_operand.hbm [shape: f32[2,1,128], index: 4, kind: input, shape index: {}]
  %s5 = inlined_call_operand.hbm [shape: bf16[2,128,128], index: 5, kind: input, shape index: {}]
  %s6 = inlined_call_operand.hbm [shape: f32[1,128], index: 6, kind: input, shape index: {}]
  %s7 = inlined_call_operand.vmem [shape: f32[8,128], index: 7, kind: output, shape index: {}]
  %s8 = sld [smem:[#allocation0]]
  $region62: #{forward.1} parent=0
    _
  %s10 = ssub.s32 1, %s8
  %s11 = scalar_select 0, %s10, %s8
  $region1: #{forward.1} parent=0
    #allocation2 [shape = 'u8[2097152]{0}', space=vmem, size = 0x200000, scoped, tag = 'input window, operand 1, single buffered']
    #allocation3 [shape = 's32[1]{0}', space=sflag, size = 0x4, scoped, tag = 'scoped memory for forward.1']
    #allocation4 [shape = 'u8[4096]{0}', space=vmem, size = 0x1000, scoped, tag = 'input window, operand 2, single buffered']
    #allocation5 [shape = 's32[1]{0}', space=sflag, size = 0x4, scoped, tag = 'scoped memory for forward.1']
    #allocation6 [shape = 'u8[262144]{0}', space=vmem, size = 0x40000, scoped, tag = 'input window, operand 3, single buffered']
    #allocation7 [shape = 'u8[1024]{0}', space=vmem, size = 0x400, scoped, tag = 'input window, operand 4, single buffered']
    #allocation8 [shape = 's32[1]{0}', space=sflag, size = 0x4, scoped, tag = 'scoped memory for forward.1']
    #allocation9 [shape = 'u8[65536]{0}', space=vmem, size = 0x10000, scoped, tag = 'input window, operand 5, single buffered']
    #allocation10 [shape = 'u8[512]{0}', space=vmem, size = 0x400, scoped, tag = 'input window, operand 6, single buffered']
    #allocation11 [shape = 's32[1]{0}', space=sflag, size = 0x4, scoped, tag = 'scoped memory for forward.1']
    %12 = vsyncpa [#allocation3], 0
    %13 = vsyncpa [#allocation5], 0
    %14 = vsyncpa [#allocation8], 0
    %15 = vsyncpa [#allocation11], 0
    // Predicated region
    $region2: #{forward.1} parent=1 // pred_check
      _
    $region3: #{forward.1} parent=1 // pred_check_branch
      %17 = sbr.rel (0) target = $region5
    $region4: #{forward.1} parent=1 // pred_region
      _
    $region5: #{forward.1} parent=1 // pred_fallthru
      _
    // Predicated region
    $region6: #{forward.1} parent=1 // pred_check
      _
    $region7: #{forward.1} parent=1 // pred_check_branch
      %19 = sbr.rel (0) target = $region9
    $region8: #{forward.1} parent=1 // pred_region
      %21 = vsyncadd [#allocation3], 0
      %s22 = sshll.u32 %s1, 4
      %s23 = int_to_ptr.hbm [resolvable:$true] %s22
      %s24 = sshll.u32 [#allocation2], 4
      %s25 = int_to_ptr.vmem [resolvable:$true] %s24
      %30 = dma.hbm_to_vmem [thread:$0]  %s23, 65536, %s25, [#allocation3], 256, 256, 16
    $region9: #{forward.1} parent=1 // pred_fallthru
      _
    // Predicated region
    $region10: #{forward.1} parent=1 // pred_check
      _
    $region11: #{forward.1} parent=1 // pred_check_branch
      %32 = sbr.rel (0) target = $region13
    $region12: #{forward.1} parent=1 // pred_region
      %34 = vsyncadd [#allocation5], 0
      %s35 = sshll.u32 %s2, 4
      %s36 = int_to_ptr.hbm [resolvable:$true] %s35
      %s37 = sshll.u32 [#allocation4], 4
      %s38 = int_to_ptr.vmem [resolvable:$true] %s37
      %43 = dma.hbm_to_vmem [thread:$0]  %s36, 128, %s38, [#allocation5], 64, 64, 4
    $region13: #{forward.1} parent=1 // pred_fallthru
      _
    // Predicated region
    $region14: #{forward.1} parent=1 // pred_check
      _
    $region15: #{forward.1} parent=1 // pred_check_branch
      %45 = sbr.rel (0) target = $region17
    $region16: #{forward.1} parent=1 // pred_region
      %47 = vsyncadd [#allocation5], 0
      %s48 = sshll.u32 %s3, 4
      %s49 = int_to_ptr.hbm [resolvable:$true] %s48
      %s50 = sshll.u32 [#allocation6], 4
      %s51 = int_to_ptr.vmem [resolvable:$true] %s50
      %56 = dma.hbm_to_vmem [thread:$0]  %s49, 8192, %s51, [#allocation5], 64, 64, 4
    $region17: #{forward.1} parent=1 // pred_fallthru
      _
    // Predicated region
    $region18: #{forward.1} parent=1 // pred_check
      _
    $region19: #{forward.1} parent=1 // pred_check_branch
      %58 = sbr.rel (0) target = $region21
    $region20: #{forward.1} parent=1 // pred_region
      %60 = vsyncadd [#allocation8], 0
      %s61 = sshll.u32 %s4, 4
      %s62 = int_to_ptr.hbm [resolvable:$true] %s61
      %s63 = sshll.u32 [#allocation7], 4
      %s64 = int_to_ptr.vmem [resolvable:$true] %s63
      %69 = dma.hbm_to_vmem [thread:$0]  %s62, 32, %s64, [#allocation8], 16, 16, 1
    $region21: #{forward.1} parent=1 // pred_fallthru
      _
    // Predicated region
    $region22: #{forward.1} parent=1 // pred_check
      _
    $region23: #{forward.1} parent=1 // pred_check_branch
      %71 = sbr.rel (0) target = $region25
    $region24: #{forward.1} parent=1 // pred_region
      %73 = vsyncadd [#allocation8], 0
      %s74 = sshll.u32 %s5, 4
      %s75 = int_to_ptr.hbm [resolvable:$true] %s74
      %s76 = sshll.u32 [#allocation9], 4
      %s77 = int_to_ptr.vmem [resolvable:$true] %s76
      %82 = dma.hbm_to_vmem [thread:$0]  %s75, 2048, %s77, [#allocation8], 64, 64, 4
    $region25: #{forward.1} parent=1 // pred_fallthru
      _
    // Predicated region
    $region26: #{forward.1} parent=1 // pred_check
      _
    $region27: #{forward.1} parent=1 // pred_check_branch
      %84 = sbr.rel (0) target = $region29
    $region28: #{forward.1} parent=1 // pred_region
      %86 = vsyncadd [#allocation11], 0
      %s88 = sshll.u32 %s6, 4
      %s89 = int_to_ptr.hbm [resolvable:$true] %s88
      %s90 = sshll.u32 [#allocation10], 4
      %s91 = int_to_ptr.vmem [resolvable:$true] %s90
      %93 = dma.hbm_to_vmem [thread:$0]  %s89, 16, %s91, [#allocation11]
    $region29: #{forward.1} parent=1 // pred_fallthru
      _
    // Predicated region
    $region30: #{forward.1} parent=1 // pred_check
      _
    $region31: #{forward.1} parent=1 // pred_check_branch
      %95 = sbr.rel (0) target = $region33
    $region32: #{forward.1} parent=1 // pred_region
      %97 = dma.done [#allocation3], 65536
    $region33: #{forward.1} parent=1 // pred_fallthru
      _
    // Predicated region
    $region34: #{forward.1} parent=1 // pred_check
      _
    $region35: #{forward.1} parent=1 // pred_check_branch
      %99 = sbr.rel (0) target = $region37
    $region36: #{forward.1} parent=1 // pred_region
      %101 = dma.done [#allocation5], 128
    $region37: #{forward.1} parent=1 // pred_fallthru
      _
    // Predicated region
    $region38: #{forward.1} parent=1 // pred_check
      _
    $region39: #{forward.1} parent=1 // pred_check_branch
      %103 = sbr.rel (0) target = $region41
    $region40: #{forward.1} parent=1 // pred_region
      %105 = dma.done [#allocation5], 8192
    $region41: #{forward.1} parent=1 // pred_fallthru
      _
    // Predicated region
    $region42: #{forward.1} parent=1 // pred_check
      _
    $region43: #{forward.1} parent=1 // pred_check_branch
      %107 = sbr.rel (0) target = $region45
    $region44: #{forward.1} parent=1 // pred_region
      %109 = dma.done [#allocation8], 32
    $region45: #{forward.1} parent=1 // pred_fallthru
      _
    // Predicated region
    $region46: #{forward.1} parent=1 // pred_check
      _
    $region47: #{forward.1} parent=1 // pred_check_branch
      %111 = sbr.rel (0) target = $region49
    $region48: #{forward.1} parent=1 // pred_region
      %113 = dma.done [#allocation8], 2048
    $region49: #{forward.1} parent=1 // pred_fallthru
      _
    // Predicated region
    $region50: #{forward.1} parent=1 // pred_check
      _
    $region51: #{forward.1} parent=1 // pred_check_branch
      %115 = sbr.rel (0) target = $region53
    $region52: #{forward.1} parent=1 // pred_region
      %117 = dma.done [#allocation11], 16
    $region53: #{forward.1} parent=1 // pred_fallthru
      _
    %v118 = vld [vmem:[%s0] sm:$0xff]
    %v119 = vld [vmem:[%s0 + $0x8] sm:$0xff]
    %v120 = vld [vmem:[%s0 + $0x10] sm:$0xff]
    %v121 = vld [vmem:[%s0 + $0x18] sm:$0xff]
    %v122 = vld [vmem:[#allocation2] sm:$0xff]
    %v123 = vld [vmem:[#allocation2 + $0x8] sm:$0xff]
    %v124 = vld [vmem:[#allocation2 + $0x10] sm:$0xff]
    %v125 = vld [vmem:[#allocation2 + $0x18] sm:$0xff]
    %v126 = vld [vmem:[#allocation2 + $0x20] sm:$0xff]
    %v127 = vld [vmem:[#allocation2 + $0x28] sm:$0xff]
    %v128 = vld [vmem:[#allocation2 + $0x30] sm:$0xff]
    %v129 = vld [vmem:[#allocation2 + $0x38] sm:$0xff]
    %v130 = vld [vmem:[#allocation2 + $0x40] sm:$0xff]
    %v131 = vld [vmem:[#allocation2 + $0x48] sm:$0xff]
    %v132 = vld [vmem:[#allocation2 + $0x50] sm:$0xff]
    %v133 = vld [vmem:[#allocation2 + $0x58] sm:$0xff]
    %v134 = vld [vmem:[#allocation2 + $0x60] sm:$0xff]
    %v135 = vld [vmem:[#allocation2 + $0x68] sm:$0xff]
    %v136 = vld [vmem:[#allocation2 + $0x70] sm:$0xff]
    %v137 = vld [vmem:[#allocation2 + $0x78] sm:$0xff]
    %v138 = vld [vmem:[#allocation2 + $0x80] sm:$0xff]
    %v139 = vld [vmem:[#allocation2 + $0x88] sm:$0xff]
    %v140 = vld [vmem:[#allocation2 + $0x90] sm:$0xff]
    %v141 = vld [vmem:[#allocation2 + $0x98] sm:$0xff]
    %v142 = vld [vmem:[#allocation2 + $0xa0] sm:$0xff]
    %v143 = vld [vmem:[#allocation2 + $0xa8] sm:$0xff]
    %v144 = vld [vmem:[#allocation2 + $0xb0] sm:$0xff]
    %v145 = vld [vmem:[#allocation2 + $0xb8] sm:$0xff]
    %v146 = vld [vmem:[#allocation2 + $0xc0] sm:$0xff]
    %v147 = vld [vmem:[#allocation2 + $0xc8] sm:$0xff]
    %v148 = vld [vmem:[#allocation2 + $0xd0] sm:$0xff]
    %v149 = vld [vmem:[#allocation2 + $0xd8] sm:$0xff]
    %v150 = vld [vmem:[#allocation2 + $0xe0] sm:$0xff]
    %v151 = vld [vmem:[#allocation2 + $0xe8] sm:$0xff]
    %v152 = vld [vmem:[#allocation2 + $0xf0] sm:$0xff]
    %v153 = vld [vmem:[#allocation2 + $0xf8] sm:$0xff]
    %v154 = vld [vmem:[#allocation2 + $0x100] sm:$0xff]
    %v155 = vld [vmem:[#allocation2 + $0x108] sm:$0xff]
    %v156 = vld [vmem:[#allocation2 + $0x110] sm:$0xff]
    %v157 = vld [vmem:[#allocation2 + $0x118] sm:$0xff]
    %v158 = vld [vmem:[#allocation2 + $0x120] sm:$0xff]
    %v159 = vld [vmem:[#allocation2 + $0x128] sm:$0xff]
    %v160 = vld [vmem:[#allocation2 + $0x130] sm:$0xff]
    %v161 = vld [vmem:[#allocation2 + $0x138] sm:$0xff]
    %v162 = vld [vmem:[#allocation2 + $0x140] sm:$0xff]
    %v163 = vld [vmem:[#allocation2 + $0x148] sm:$0xff]
    %v164 = vld [vmem:[#allocation2 + $0x150] sm:$0xff]
    %v165 = vld [vmem:[#allocation2 + $0x158] sm:$0xff]
    %v166 = vld [vmem:[#allocation2 + $0x160] sm:$0xff]
    %v167 = vld [vmem:[#allocation2 + $0x168] sm:$0xff]
    %v168 = vld [vmem:[#allocation2 + $0x170] sm:$0xff]
    %v169 = vld [vmem:[#allocation2 + $0x178] sm:$0xff]
    %v170 = vld [vmem:[#allocation2 + $0x180] sm:$0xff]
    %v171 = vld [vmem:[#allocation2 + $0x188] sm:$0xff]
    %v172 = vld [vmem:[#allocation2 + $0x190] sm:$0xff]
    %v173 = vld [vmem:[#allocation2 + $0x198] sm:$0xff]
    %v174 = vld [vmem:[#allocation2 + $0x1a0] sm:$0xff]
    %v175 = vld [vmem:[#allocation2 + $0x1a8] sm:$0xff]
    %v176 = vld [vmem:[#allocation2 + $0x1b0] sm:$0xff]
    %v177 = vld [vmem:[#allocation2 + $0x1b8] sm:$0xff]
    %v178 = vld [vmem:[#allocation2 + $0x1c0] sm:$0xff]
    %v179 = vld [vmem:[#allocation2 + $0x1c8] sm:$0xff]
    %v180 = vld [vmem:[#allocation2 + $0x1d0] sm:$0xff]
    %v181 = vld [vmem:[#allocation2 + $0x1d8] sm:$0xff]
    %v182 = vld [vmem:[#allocation2 + $0x1e0] sm:$0xff]
    %v183 = vld [vmem:[#allocation2 + $0x1e8] sm:$0xff]
    %v184 = vld [vmem:[#allocation2 + $0x1f0] sm:$0xff]
    %v185 = vld [vmem:[#allocation2 + $0x1f8] sm:$0xff]
    %v186 = vld [vmem:[#allocation2 + $0x200] sm:$0xff]
    %v187 = vld [vmem:[#allocation2 + $0x208] sm:$0xff]
    %v188 = vld [vmem:[#allocation2 + $0x210] sm:$0xff]
    %v189 = vld [vmem:[#allocation2 + $0x218] sm:$0xff]
    %v190 = vld [vmem:[#allocation2 + $0x220] sm:$0xff]
    %v191 = vld [vmem:[#allocation2 + $0x228] sm:$0xff]
    %v192 = vld [vmem:[#allocation2 + $0x230] sm:$0xff]
    %v193 = vld [vmem:[#allocation2 + $0x238] sm:$0xff]
    %v194 = vld [vmem:[#allocation2 + $0x240] sm:$0xff]
    %v195 = vld [vmem:[#allocation2 + $0x248] sm:$0xff]
    %v196 = vld [vmem:[#allocation2 + $0x250] sm:$0xff]
    %v197 = vld [vmem:[#allocation2 + $0x258] sm:$0xff]
    %v198 = vld [vmem:[#allocation2 + $0x260] sm:$0xff]
    %v199 = vld [vmem:[#allocation2 + $0x268] sm:$0xff]
    %v200 = vld [vmem:[#allocation2 + $0x270] sm:$0xff]
    %v201 = vld [vmem:[#allocation2 + $0x278] sm:$0xff]
    %v202 = vld [vmem:[#allocation2 + $0x280] sm:$0xff]
    %v203 = vld [vmem:[#allocation2 + $0x288] sm:$0xff]
    %v204 = vld [vmem:[#allocation2 + $0x290] sm:$0xff]
    %v205 = vld [vmem:[#allocation2 + $0x298] sm:$0xff]
    %v206 = vld [vmem:[#allocation2 + $0x2a0] sm:$0xff]
    %v207 = vld [vmem:[#allocation2 + $0x2a8] sm:$0xff]
    %v208 = vld [vmem:[#allocation2 + $0x2b0] sm:$0xff]
    %v209 = vld [vmem:[#allocation2 + $0x2b8] sm:$0xff]
    %v210 = vld [vmem:[#allocation2 + $0x2c0] sm:$0xff]
    %v211 = vld [vmem:[#allocation2 + $0x2c8] sm:$0xff]
    %v212 = vld [vmem:[#allocation2 + $0x2d0] sm:$0xff]
    %v213 = vld [vmem:[#allocation2 + $0x2d8] sm:$0xff]
    %v214 = vld [vmem:[#allocation2 + $0x2e0] sm:$0xff]
    %v215 = vld [vmem:[#allocation2 + $0x2e8] sm:$0xff]
    %v216 = vld [vmem:[#allocation2 + $0x2f0] sm:$0xff]
    %v217 = vld [vmem:[#allocation2 + $0x2f8] sm:$0xff]
    %v218 = vld [vmem:[#allocation2 + $0x300] sm:$0xff]
    %v219 = vld [vmem:[#allocation2 + $0x308] sm:$0xff]
    %v220 = vld [vmem:[#allocation2 + $0x310] sm:$0xff]
    %v221 = vld [vmem:[#allocation2 + $0x318] sm:$0xff]
    %v222 = vld [vmem:[#allocation2 + $0x320] sm:$0xff]
    %v223 = vld [vmem:[#allocation2 + $0x328] sm:$0xff]
    %v224 = vld [vmem:[#allocation2 + $0x330] sm:$0xff]
    %v225 = vld [vmem:[#allocation2 + $0x338] sm:$0xff]
    %v226 = vld [vmem:[#allocation2 + $0x340] sm:$0xff]
    %v227 = vld [vmem:[#allocation2 + $0x348] sm:$0xff]
    %v228 = vld [vmem:[#allocation2 + $0x350] sm:$0xff]
    %v229 = vld [vmem:[#allocation2 + $0x358] sm:$0xff]
    %v230 = vld [vmem:[#allocation2 + $0x360] sm:$0xff]
    %v231 = vld [vmem:[#allocation2 + $0x368] sm:$0xff]
    %v232 = vld [vmem:[#allocation2 + $0x370] sm:$0xff]
    %v233 = vld [vmem:[#allocation2 + $0x378] sm:$0xff]
    %v234 = vld [vmem:[#allocation2 + $0x380] sm:$0xff]
    %v235 = vld [vmem:[#allocation2 + $0x388] sm:$0xff]
    %v236 = vld [vmem:[#allocation2 + $0x390] sm:$0xff]
    %v237 = vld [vmem:[#allocation2 + $0x398] sm:$0xff]
    %v238 = vld [vmem:[#allocation2 + $0x3a0] sm:$0xff]
    %v239 = vld [vmem:[#allocation2 + $0x3a8] sm:$0xff]
    %v240 = vld [vmem:[#allocation2 + $0x3b0] sm:$0xff]
    %v241 = vld [vmem:[#allocation2 + $0x3b8] sm:$0xff]
    %v242 = vld [vmem:[#allocation2 + $0x3c0] sm:$0xff]
    %v243 = vld [vmem:[#allocation2 + $0x3c8] sm:$0xff]
    %v244 = vld [vmem:[#allocation2 + $0x3d0] sm:$0xff]
    %v245 = vld [vmem:[#allocation2 + $0x3d8] sm:$0xff]
    %v246 = vld [vmem:[#allocation2 + $0x3e0] sm:$0xff]
    %v247 = vld [vmem:[#allocation2 + $0x3e8] sm:$0xff]
    %v248 = vld [vmem:[#allocation2 + $0x3f0] sm:$0xff]
    %v249 = vld [vmem:[#allocation2 + $0x3f8] sm:$0xff]
    %v250 = vld [vmem:[#allocation2 + $0x400] sm:$0xff]
    %v251 = vld [vmem:[#allocation2 + $0x408] sm:$0xff]
    %v252 = vld [vmem:[#allocation2 + $0x410] sm:$0xff]
    %v253 = vld [vmem:[#allocation2 + $0x418] sm:$0xff]
    %v254 = vld [vmem:[#allocation2 + $0x420] sm:$0xff]
    %v255 = vld [vmem:[#allocation2 + $0x428] sm:$0xff]
    %v256 = vld [vmem:[#allocation2 + $0x430] sm:$0xff]
    %v257 = vld [vmem:[#allocation2 + $0x438] sm:$0xff]
    %v258 = vld [vmem:[#allocation2 + $0x440] sm:$0xff]
    %v259 = vld [vmem:[#allocation2 + $0x448] sm:$0xff]
    %v260 = vld [vmem:[#allocation2 + $0x450] sm:$0xff]
    %v261 = vld [vmem:[#allocation2 + $0x458] sm:$0xff]
    %v262 = vld [vmem:[#allocation2 + $0x460] sm:$0xff]
    %v263 = vld [vmem:[#allocation2 + $0x468] sm:$0xff]
    %v264 = vld [vmem:[#allocation2 + $0x470] sm:$0xff]
    %v265 = vld [vmem:[#allocation2 + $0x478] sm:$0xff]
    %v266 = vld [vmem:[#allocation2 + $0x480] sm:$0xff]
    %v267 = vld [vmem:[#allocation2 + $0x488] sm:$0xff]
    %v268 = vld [vmem:[#allocation2 + $0x490] sm:$0xff]
    %v269 = vld [vmem:[#allocation2 + $0x498] sm:$0xff]
    %v270 = vld [vmem:[#allocation2 + $0x4a0] sm:$0xff]
    %v271 = vld [vmem:[#allocation2 + $0x4a8] sm:$0xff]
    %v272 = vld [vmem:[#allocation2 + $0x4b0] sm:$0xff]
    %v273 = vld [vmem:[#allocation2 + $0x4b8] sm:$0xff]
    %v274 = vld [vmem:[#allocation2 + $0x4c0] sm:$0xff]
    %v275 = vld [vmem:[#allocation2 + $0x4c8] sm:$0xff]
    %v276 = vld [vmem:[#allocation2 + $0x4d0] sm:$0xff]
    %v277 = vld [vmem:[#allocation2 + $0x4d8] sm:$0xff]
    %v278 = vld [vmem:[#allocation2 + $0x4e0] sm:$0xff]
    %v279 = vld [vmem:[#allocation2 + $0x4e8] sm:$0xff]
    %v280 = vld [vmem:[#allocation2 + $0x4f0] sm:$0xff]
    %v281 = vld [vmem:[#allocation2 + $0x4f8] sm:$0xff]
    %v282 = vld [vmem:[#allocation2 + $0x500] sm:$0xff]
    %v283 = vld [vmem:[#allocation2 + $0x508] sm:$0xff]
    %v284 = vld [vmem:[#allocation2 + $0x510] sm:$0xff]
    %v285 = vld [vmem:[#allocation2 + $0x518] sm:$0xff]
    %v286 = vld [vmem:[#allocation2 + $0x520] sm:$0xff]
    %v287 = vld [vmem:[#allocation2 + $0x528] sm:$0xff]
    %v288 = vld [vmem:[#allocation2 + $0x530] sm:$0xff]
    %v289 = vld [vmem:[#allocation2 + $0x538] sm:$0xff]
    %v290 = vld [vmem:[#allocation2 + $0x540] sm:$0xff]
    %v291 = vld [vmem:[#allocation2 + $0x548] sm:$0xff]
    %v292 = vld [vmem:[#allocation2 + $0x550] sm:$0xff]
    %v293 = vld [vmem:[#allocation2 + $0x558] sm:$0xff]
    %v294 = vld [vmem:[#allocation2 + $0x560] sm:$0xff]
    %v295 = vld [vmem:[#allocation2 + $0x568] sm:$0xff]
    %v296 = vld [vmem:[#allocation2 + $0x570] sm:$0xff]
    %v297 = vld [vmem:[#allocation2 + $0x578] sm:$0xff]
    %v298 = vld [vmem:[#allocation2 + $0x580] sm:$0xff]
    %v299 = vld [vmem:[#allocation2 + $0x588] sm:$0xff]
    %v300 = vld [vmem:[#allocation2 + $0x590] sm:$0xff]
    %v301 = vld [vmem:[#allocation2 + $0x598] sm:$0xff]
    %v302 = vld [vmem:[#allocation2 + $0x5a0] sm:$0xff]
    %v303 = vld [vmem:[#allocation2 + $0x5a8] sm:$0xff]
    %v304 = vld [vmem:[#allocation2 + $0x5b0] sm:$0xff]
    %v305 = vld [vmem:[#allocation2 + $0x5b8] sm:$0xff]
    %v306 = vld [vmem:[#allocation2 + $0x5c0] sm:$0xff]
    %v307 = vld [vmem:[#allocation2 + $0x5c8] sm:$0xff]
    %v308 = vld [vmem:[#allocation2 + $0x5d0] sm:$0xff]
    %v309 = vld [vmem:[#allocation2 + $0x5d8] sm:$0xff]
    %v310 = vld [vmem:[#allocation2 + $0x5e0] sm:$0xff]
    %v311 = vld [vmem:[#allocation2 + $0x5e8] sm:$0xff]
    %v312 = vld [vmem:[#allocation2 + $0x5f0] sm:$0xff]
    %v313 = vld [vmem:[#allocation2 + $0x5f8] sm:$0xff]
    %v314 = vld [vmem:[#allocation2 + $0x600] sm:$0xff]
    %v315 = vld [vmem:[#allocation2 + $0x608] sm:$0xff]
    %v316 = vld [vmem:[#allocation2 + $0x610] sm:$0xff]
    %v317 = vld [vmem:[#allocation2 + $0x618] sm:$0xff]
    %v318 = vld [vmem:[#allocation2 + $0x620] sm:$0xff]
    %v319 = vld [vmem:[#allocation2 + $0x628] sm:$0xff]
    %v320 = vld [vmem:[#allocation2 + $0x630] sm:$0xff]
    %v321 = vld [vmem:[#allocation2 + $0x638] sm:$0xff]
    %v322 = vld [vmem:[#allocation2 + $0x640] sm:$0xff]
    %v323 = vld [vmem:[#allocation2 + $0x648] sm:$0xff]
    %v324 = vld [vmem:[#allocation2 + $0x650] sm:$0xff]
    %v325 = vld [vmem:[#allocation2 + $0x658] sm:$0xff]
    %v326 = vld [vmem:[#allocation2 + $0x660] sm:$0xff]
    %v327 = vld [vmem:[#allocation2 + $0x668] sm:$0xff]
    %v328 = vld [vmem:[#allocation2 + $0x670] sm:$0xff]
    %v329 = vld [vmem:[#allocation2 + $0x678] sm:$0xff]
    %v330 = vld [vmem:[#allocation2 + $0x680] sm:$0xff]
    %v331 = vld [vmem:[#allocation2 + $0x688] sm:$0xff]
    %v332 = vld [vmem:[#allocation2 + $0x690] sm:$0xff]
    %v333 = vld [vmem:[#allocation2 + $0x698] sm:$0xff]
    %v334 = vld [vmem:[#allocation2 + $0x6a0] sm:$0xff]
    %v335 = vld [vmem:[#allocation2 + $0x6a8] sm:$0xff]
    %v336 = vld [vmem:[#allocation2 + $0x6b0] sm:$0xff]
    %v337 = vld [vmem:[#allocation2 + $0x6b8] sm:$0xff]
    %v338 = vld [vmem:[#allocation2 + $0x6c0] sm:$0xff]
    %v339 = vld [vmem:[#allocation2 + $0x6c8] sm:$0xff]
    %v340 = vld [vmem:[#allocation2 + $0x6d0] sm:$0xff]
    %v341 = vld [vmem:[#allocation2 + $0x6d8] sm:$0xff]
    %v342 = vld [vmem:[#allocation2 + $0x6e0] sm:$0xff]
    %v343 = vld [vmem:[#allocation2 + $0x6e8] sm:$0xff]
    %v344 = vld [vmem:[#allocation2 + $0x6f0] sm:$0xff]
    %v345 = vld [vmem:[#allocation2 + $0x6f8] sm:$0xff]
    %v346 = vld [vmem:[#allocation2 + $0x700] sm:$0xff]
    %v347 = vld [vmem:[#allocation2 + $0x708] sm:$0xff]
    %v348 = vld [vmem:[#allocation2 + $0x710] sm:$0xff]
    %v349 = vld [vmem:[#allocation2 + $0x718] sm:$0xff]
    %v350 = vld [vmem:[#allocation2 + $0x720] sm:$0xff]
    %v351 = vld [vmem:[#allocation2 + $0x728] sm:$0xff]
    %v352 = vld [vmem:[#allocation2 + $0x730] sm:$0xff]
    %v353 = vld [vmem:[#allocation2 + $0x738] sm:$0xff]
    %v354 = vld [vmem:[#allocation2 + $0x740] sm:$0xff]
    %v355 = vld [vmem:[#allocation2 + $0x748] sm:$0xff]
    %v356 = vld [vmem:[#allocation2 + $0x750] sm:$0xff]
    %v357 = vld [vmem:[#allocation2 + $0x758] sm:$0xff]
    %v358 = vld [vmem:[#allocation2 + $0x760] sm:$0xff]
    %v359 = vld [vmem:[#allocation2 + $0x768] sm:$0xff]
    %v360 = vld [vmem:[#allocation2 + $0x770] sm:$0xff]
    %v361 = vld [vmem:[#allocation2 + $0x778] sm:$0xff]
    %v362 = vld [vmem:[#allocation2 + $0x780] sm:$0xff]
    %v363 = vld [vmem:[#allocation2 + $0x788] sm:$0xff]
    %v364 = vld [vmem:[#allocation2 + $0x790] sm:$0xff]
    %v365 = vld [vmem:[#allocation2 + $0x798] sm:$0xff]
    %v366 = vld [vmem:[#allocation2 + $0x7a0] sm:$0xff]
    %v367 = vld [vmem:[#allocation2 + $0x7a8] sm:$0xff]
    %v368 = vld [vmem:[#allocation2 + $0x7b0] sm:$0xff]
    %v369 = vld [vmem:[#allocation2 + $0x7b8] sm:$0xff]
    %v370 = vld [vmem:[#allocation2 + $0x7c0] sm:$0xff]
    %v371 = vld [vmem:[#allocation2 + $0x7c8] sm:$0xff]
    %v372 = vld [vmem:[#allocation2 + $0x7d0] sm:$0xff]
    %v373 = vld [vmem:[#allocation2 + $0x7d8] sm:$0xff]
    %v374 = vld [vmem:[#allocation2 + $0x7e0] sm:$0xff]
    %v375 = vld [vmem:[#allocation2 + $0x7e8] sm:$0xff]
    %v376 = vld [vmem:[#allocation2 + $0x7f0] sm:$0xff]
    %v377 = vld [vmem:[#allocation2 + $0x7f8] sm:$0xff]
    %v378 = vld [vmem:[#allocation4] sm:$0xf]
    %v380 = vperm.slane %v378, 0
    %v381 = vperm.slane %v378, 1
    %v382 = vperm.slane %v378, 2
    %v383 = vperm.slane %v378, 3
    %v392 = vunpack.c.l.b16 %v118
    %v393 = vunpack.c.h.b16 %v118
    %v394 = vunpack.c.l.b16 %v119
    %v395 = vunpack.c.h.b16 %v119
    %v396 = vunpack.c.l.b16 %v120
    %v397 = vunpack.c.h.b16 %v120
    %v398 = vunpack.c.l.b16 %v121
    %v399 = vunpack.c.h.b16 %v121
    %v400 = vpack.c.b16 %v392, %v392
    %v401 = vpack.c.b16 %v393, %v393
    %v402 = vpack.c.b16 %v394, %v394
    %v403 = vpack.c.b16 %v395, %v395
    %v404 = vpack.c.b16 %v396, %v396
    %v405 = vpack.c.b16 %v397, %v397
    %v406 = vpack.c.b16 %v398, %v398
    %v407 = vpack.c.b16 %v399, %v399
    %v672 = vunpack.c.l.b16 %v122
    %v673 = vunpack.c.h.b16 %v122
    %v674 = vunpack.c.l.b16 %v123
    %v675 = vunpack.c.h.b16 %v123
    %v676 = vunpack.c.l.b16 %v124
    %v677 = vunpack.c.h.b16 %v124
    %v678 = vunpack.c.l.b16 %v125
    %v679 = vunpack.c.h.b16 %v125
    %v680 = vunpack.c.l.b16 %v126
    %v681 = vunpack.c.h.b16 %v126
    %v682 = vunpack.c.l.b16 %v127
    %v683 = vunpack.c.h.b16 %v127
    %v684 = vunpack.c.l.b16 %v128
    %v685 = vunpack.c.h.b16 %v128
    %v686 = vunpack.c.l.b16 %v129
    %v687 = vunpack.c.h.b16 %v129
    %v688 = vunpack.c.l.b16 %v130
    %v689 = vunpack.c.h.b16 %v130
    %v690 = vunpack.c.l.b16 %v131
    %v691 = vunpack.c.h.b16 %v131
    %v692 = vunpack.c.l.b16 %v132
    %v693 = vunpack.c.h.b16 %v132
    %v694 = vunpack.c.l.b16 %v133
    %v695 = vunpack.c.h.b16 %v133
    %v696 = vunpack.c.l.b16 %v134
    %v697 = vunpack.c.h.b16 %v134
    %v698 = vunpack.c.l.b16 %v135
    %v699 = vunpack.c.h.b16 %v135
    %v700 = vunpack.c.l.b16 %v136
    %v701 = vunpack.c.h.b16 %v136
    %v702 = vunpack.c.l.b16 %v137
    %v703 = vunpack.c.h.b16 %v137
    %v704 = vunpack.c.l.b16 %v138
    %v705 = vunpack.c.h.b16 %v138
    %v706 = vunpack.c.l.b16 %v139
    %v707 = vunpack.c.h.b16 %v139
    %v708 = vunpack.c.l.b16 %v140
    %v709 = vunpack.c.h.b16 %v140
    %v710 = vunpack.c.l.b16 %v141
    %v711 = vunpack.c.h.b16 %v141
    %v712 = vunpack.c.l.b16 %v142
    %v713 = vunpack.c.h.b16 %v142
    %v714 = vunpack.c.l.b16 %v143
    %v715 = vunpack.c.h.b16 %v143
    %v716 = vunpack.c.l.b16 %v144
    %v717 = vunpack.c.h.b16 %v144
    %v718 = vunpack.c.l.b16 %v145
    %v719 = vunpack.c.h.b16 %v145
    %v720 = vunpack.c.l.b16 %v146
    %v721 = vunpack.c.h.b16 %v146
    %v722 = vunpack.c.l.b16 %v147
    %v723 = vunpack.c.h.b16 %v147
    %v724 = vunpack.c.l.b16 %v148
    %v725 = vunpack.c.h.b16 %v148
    %v726 = vunpack.c.l.b16 %v149
    %v727 = vunpack.c.h.b16 %v149
    %v728 = vunpack.c.l.b16 %v150
    %v729 = vunpack.c.h.b16 %v150
    %v730 = vunpack.c.l.b16 %v151
    %v731 = vunpack.c.h.b16 %v151
    %v732 = vunpack.c.l.b16 %v152
    %v733 = vunpack.c.h.b16 %v152
    %v734 = vunpack.c.l.b16 %v153
    %v735 = vunpack.c.h.b16 %v153
    %v736 = vunpack.c.l.b16 %v154
    %v737 = vunpack.c.h.b16 %v154
    %v738 = vunpack.c.l.b16 %v155
    %v739 = vunpack.c.h.b16 %v155
    %v740 = vunpack.c.l.b16 %v156
    %v741 = vunpack.c.h.b16 %v156
    %v742 = vunpack.c.l.b16 %v157
    %v743 = vunpack.c.h.b16 %v157
    %v744 = vunpack.c.l.b16 %v158
    %v745 = vunpack.c.h.b16 %v158
    %v746 = vunpack.c.l.b16 %v159
    %v747 = vunpack.c.h.b16 %v159
    %v748 = vunpack.c.l.b16 %v160
    %v749 = vunpack.c.h.b16 %v160
    %v750 = vunpack.c.l.b16 %v161
    %v751 = vunpack.c.h.b16 %v161
    %v752 = vunpack.c.l.b16 %v162
    %v753 = vunpack.c.h.b16 %v162
    %v754 = vunpack.c.l.b16 %v163
    %v755 = vunpack.c.h.b16 %v163
    %v756 = vunpack.c.l.b16 %v164
    %v757 = vunpack.c.h.b16 %v164
    %v758 = vunpack.c.l.b16 %v165
    %v759 = vunpack.c.h.b16 %v165
    %v760 = vunpack.c.l.b16 %v166
    %v761 = vunpack.c.h.b16 %v166
    %v762 = vunpack.c.l.b16 %v167
    %v763 = vunpack.c.h.b16 %v167
    %v764 = vunpack.c.l.b16 %v168
    %v765 = vunpack.c.h.b16 %v168
    %v766 = vunpack.c.l.b16 %v169
    %v767 = vunpack.c.h.b16 %v169
    %v768 = vunpack.c.l.b16 %v170
    %v769 = vunpack.c.h.b16 %v170
    %v770 = vunpack.c.l.b16 %v171
    %v771 = vunpack.c.h.b16 %v171
    %v772 = vunpack.c.l.b16 %v172
    %v773 = vunpack.c.h.b16 %v172
    %v774 = vunpack.c.l.b16 %v173
    %v775 = vunpack.c.h.b16 %v173
    %v776 = vunpack.c.l.b16 %v174
    %v777 = vunpack.c.h.b16 %v174
    %v778 = vunpack.c.l.b16 %v175
    %v779 = vunpack.c.h.b16 %v175
    %v780 = vunpack.c.l.b16 %v176
    %v781 = vunpack.c.h.b16 %v176
    %v782 = vunpack.c.l.b16 %v177
    %v783 = vunpack.c.h.b16 %v177
    %v784 = vunpack.c.l.b16 %v178
    %v785 = vunpack.c.h.b16 %v178
    %v786 = vunpack.c.l.b16 %v179
    %v787 = vunpack.c.h.b16 %v179
    %v788 = vunpack.c.l.b16 %v180
    %v789 = vunpack.c.h.b16 %v180
    %v790 = vunpack.c.l.b16 %v181
    %v791 = vunpack.c.h.b16 %v181
    %v792 = vunpack.c.l.b16 %v182
    %v793 = vunpack.c.h.b16 %v182
    %v794 = vunpack.c.l.b16 %v183
    %v795 = vunpack.c.h.b16 %v183
    %v796 = vunpack.c.l.b16 %v184
    %v797 = vunpack.c.h.b16 %v184
    %v798 = vunpack.c.l.b16 %v185
    %v799 = vunpack.c.h.b16 %v185
    %v800 = vunpack.c.l.b16 %v186
    %v801 = vunpack.c.h.b16 %v186
    %v802 = vunpack.c.l.b16 %v187
    %v803 = vunpack.c.h.b16 %v187
    %v804 = vunpack.c.l.b16 %v188
    %v805 = vunpack.c.h.b16 %v188
    %v806 = vunpack.c.l.b16 %v189
    %v807 = vunpack.c.h.b16 %v189
    %v808 = vunpack.c.l.b16 %v190
    %v809 = vunpack.c.h.b16 %v190
    %v810 = vunpack.c.l.b16 %v191
    %v811 = vunpack.c.h.b16 %v191
    %v812 = vunpack.c.l.b16 %v192
    %v813 = vunpack.c.h.b16 %v192
    %v814 = vunpack.c.l.b16 %v193
    %v815 = vunpack.c.h.b16 %v193
    %v816 = vunpack.c.l.b16 %v194
    %v817 = vunpack.c.h.b16 %v194
    %v818 = vunpack.c.l.b16 %v195
    %v819 = vunpack.c.h.b16 %v195
    %v820 = vunpack.c.l.b16 %v196
    %v821 = vunpack.c.h.b16 %v196
    %v822 = vunpack.c.l.b16 %v197
    %v823 = vunpack.c.h.b16 %v197
    %v824 = vunpack.c.l.b16 %v198
    %v825 = vunpack.c.h.b16 %v198
    %v826 = vunpack.c.l.b16 %v199
    %v827 = vunpack.c.h.b16 %v199
    %v828 = vunpack.c.l.b16 %v200
    %v829 = vunpack.c.h.b16 %v200
    %v830 = vunpack.c.l.b16 %v201
    %v831 = vunpack.c.h.b16 %v201
    %v832 = vunpack.c.l.b16 %v202
    %v833 = vunpack.c.h.b16 %v202
    %v834 = vunpack.c.l.b16 %v203
    %v835 = vunpack.c.h.b16 %v203
    %v836 = vunpack.c.l.b16 %v204
    %v837 = vunpack.c.h.b16 %v204
    %v838 = vunpack.c.l.b16 %v205
    %v839 = vunpack.c.h.b16 %v205
    %v840 = vunpack.c.l.b16 %v206
    %v841 = vunpack.c.h.b16 %v206
    %v842 = vunpack.c.l.b16 %v207
    %v843 = vunpack.c.h.b16 %v207
    %v844 = vunpack.c.l.b16 %v208
    %v845 = vunpack.c.h.b16 %v208
    %v846 = vunpack.c.l.b16 %v209
    %v847 = vunpack.c.h.b16 %v209
    %v848 = vunpack.c.l.b16 %v210
    %v849 = vunpack.c.h.b16 %v210
    %v850 = vunpack.c.l.b16 %v211
    %v851 = vunpack.c.h.b16 %v211
    %v852 = vunpack.c.l.b16 %v212
    %v853 = vunpack.c.h.b16 %v212
    %v854 = vunpack.c.l.b16 %v213
    %v855 = vunpack.c.h.b16 %v213
    %v856 = vunpack.c.l.b16 %v214
    %v857 = vunpack.c.h.b16 %v214
    %v858 = vunpack.c.l.b16 %v215
    %v859 = vunpack.c.h.b16 %v215
    %v860 = vunpack.c.l.b16 %v216
    %v861 = vunpack.c.h.b16 %v216
    %v862 = vunpack.c.l.b16 %v217
    %v863 = vunpack.c.h.b16 %v217
    %v864 = vunpack.c.l.b16 %v218
    %v865 = vunpack.c.h.b16 %v218
    %v866 = vunpack.c.l.b16 %v219
    %v867 = vunpack.c.h.b16 %v219
    %v868 = vunpack.c.l.b16 %v220
    %v869 = vunpack.c.h.b16 %v220
    %v870 = vunpack.c.l.b16 %v221
    %v871 = vunpack.c.h.b16 %v221
    %v872 = vunpack.c.l.b16 %v222
    %v873 = vunpack.c.h.b16 %v222
    %v874 = vunpack.c.l.b16 %v223
    %v875 = vunpack.c.h.b16 %v223
    %v876 = vunpack.c.l.b16 %v224
    %v877 = vunpack.c.h.b16 %v224
    %v878 = vunpack.c.l.b16 %v225
    %v879 = vunpack.c.h.b16 %v225
    %v880 = vunpack.c.l.b16 %v226
    %v881 = vunpack.c.h.b16 %v226
    %v882 = vunpack.c.l.b16 %v227
    %v883 = vunpack.c.h.b16 %v227
    %v884 = vunpack.c.l.b16 %v228
    %v885 = vunpack.c.h.b16 %v228
    %v886 = vunpack.c.l.b16 %v229
    %v887 = vunpack.c.h.b16 %v229
    %v888 = vunpack.c.l.b16 %v230
    %v889 = vunpack.c.h.b16 %v230
    %v890 = vunpack.c.l.b16 %v231
    %v891 = vunpack.c.h.b16 %v231
    %v892 = vunpack.c.l.b16 %v232
    %v893 = vunpack.c.h.b16 %v232
    %v894 = vunpack.c.l.b16 %v233
    %v895 = vunpack.c.h.b16 %v233
    %v896 = vunpack.c.l.b16 %v234
    %v897 = vunpack.c.h.b16 %v234
    %v898 = vunpack.c.l.b16 %v235
    %v899 = vunpack.c.h.b16 %v235
    %v900 = vunpack.c.l.b16 %v236
    %v901 = vunpack.c.h.b16 %v236
    %v902 = vunpack.c.l.b16 %v237
    %v903 = vunpack.c.h.b16 %v237
    %v904 = vunpack.c.l.b16 %v238
    %v905 = vunpack.c.h.b16 %v238
    %v906 = vunpack.c.l.b16 %v239
    %v907 = vunpack.c.h.b16 %v239
    %v908 = vunpack.c.l.b16 %v240
    %v909 = vunpack.c.h.b16 %v240
    %v910 = vunpack.c.l.b16 %v241
    %v911 = vunpack.c.h.b16 %v241
    %v912 = vunpack.c.l.b16 %v242
    %v913 = vunpack.c.h.b16 %v242
    %v914 = vunpack.c.l.b16 %v243
    %v915 = vunpack.c.h.b16 %v243
    %v916 = vunpack.c.l.b16 %v244
    %v917 = vunpack.c.h.b16 %v244
    %v918 = vunpack.c.l.b16 %v245
    %v919 = vunpack.c.h.b16 %v245
    %v920 = vunpack.c.l.b16 %v246
    %v921 = vunpack.c.h.b16 %v246
    %v922 = vunpack.c.l.b16 %v247
    %v923 = vunpack.c.h.b16 %v247
    %v924 = vunpack.c.l.b16 %v248
    %v925 = vunpack.c.h.b16 %v248
    %v926 = vunpack.c.l.b16 %v249
    %v927 = vunpack.c.h.b16 %v249
    %v928 = vunpack.c.l.b16 %v250
    %v929 = vunpack.c.h.b16 %v250
    %v930 = vunpack.c.l.b16 %v251
    %v931 = vunpack.c.h.b16 %v251
    %v932 = vunpack.c.l.b16 %v252
    %v933 = vunpack.c.h.b16 %v252
    %v934 = vunpack.c.l.b16 %v253
    %v935 = vunpack.c.h.b16 %v253
    %v936 = vunpack.c.l.b16 %v254
    %v937 = vunpack.c.h.b16 %v254
    %v938 = vunpack.c.l.b16 %v255
    %v939 = vunpack.c.h.b16 %v255
    %v940 = vunpack.c.l.b16 %v256
    %v941 = vunpack.c.h.b16 %v256
    %v942 = vunpack.c.l.b16 %v257
    %v943 = vunpack.c.h.b16 %v257
    %v944 = vunpack.c.l.b16 %v258
    %v945 = vunpack.c.h.b16 %v258
    %v946 = vunpack.c.l.b16 %v259
    %v947 = vunpack.c.h.b16 %v259
    %v948 = vunpack.c.l.b16 %v260
    %v949 = vunpack.c.h.b16 %v260
    %v950 = vunpack.c.l.b16 %v261
    %v951 = vunpack.c.h.b16 %v261
    %v952 = vunpack.c.l.b16 %v262
    %v953 = vunpack.c.h.b16 %v262
    %v954 = vunpack.c.l.b16 %v263
    %v955 = vunpack.c.h.b16 %v263
    %v956 = vunpack.c.l.b16 %v264
    %v957 = vunpack.c.h.b16 %v264
    %v958 = vunpack.c.l.b16 %v265
    %v959 = vunpack.c.h.b16 %v265
    %v960 = vunpack.c.l.b16 %v266
    %v961 = vunpack.c.h.b16 %v266
    %v962 = vunpack.c.l.b16 %v267
    %v963 = vunpack.c.h.b16 %v267
    %v964 = vunpack.c.l.b16 %v268
    %v965 = vunpack.c.h.b16 %v268
    %v966 = vunpack.c.l.b16 %v269
    %v967 = vunpack.c.h.b16 %v269
    %v968 = vunpack.c.l.b16 %v270
    %v969 = vunpack.c.h.b16 %v270
    %v970 = vunpack.c.l.b16 %v271
    %v971 = vunpack.c.h.b16 %v271
    %v972 = vunpack.c.l.b16 %v272
    %v973 = vunpack.c.h.b16 %v272
    %v974 = vunpack.c.l.b16 %v273
    %v975 = vunpack.c.h.b16 %v273
    %v976 = vunpack.c.l.b16 %v274
    %v977 = vunpack.c.h.b16 %v274
    %v978 = vunpack.c.l.b16 %v275
    %v979 = vunpack.c.h.b16 %v275
    %v980 = vunpack.c.l.b16 %v276
    %v981 = vunpack.c.h.b16 %v276
    %v982 = vunpack.c.l.b16 %v277
    %v983 = vunpack.c.h.b16 %v277
    %v984 = vunpack.c.l.b16 %v278
    %v985 = vunpack.c.h.b16 %v278
    %v986 = vunpack.c.l.b16 %v279
    %v987 = vunpack.c.h.b16 %v279
    %v988 = vunpack.c.l.b16 %v280
    %v989 = vunpack.c.h.b16 %v280
    %v990 = vunpack.c.l.b16 %v281
    %v991 = vunpack.c.h.b16 %v281
    %v992 = vunpack.c.l.b16 %v282
    %v993 = vunpack.c.h.b16 %v282
    %v994 = vunpack.c.l.b16 %v283
    %v995 = vunpack.c.h.b16 %v283
    %v996 = vunpack.c.l.b16 %v284
    %v997 = vunpack.c.h.b16 %v284
    %v998 = vunpack.c.l.b16 %v285
    %v999 = vunpack.c.h.b16 %v285
    %v1000 = vunpack.c.l.b16 %v286
    %v1001 = vunpack.c.h.b16 %v286
    %v1002 = vunpack.c.l.b16 %v287
    %v1003 = vunpack.c.h.b16 %v287
    %v1004 = vunpack.c.l.b16 %v288
    %v1005 = vunpack.c.h.b16 %v288
    %v1006 = vunpack.c.l.b16 %v289
    %v1007 = vunpack.c.h.b16 %v289
    %v1008 = vunpack.c.l.b16 %v290
    %v1009 = vunpack.c.h.b16 %v290
    %v1010 = vunpack.c.l.b16 %v291
    %v1011 = vunpack.c.h.b16 %v291
    %v1012 = vunpack.c.l.b16 %v292
    %v1013 = vunpack.c.h.b16 %v292
    %v1014 = vunpack.c.l.b16 %v293
    %v1015 = vunpack.c.h.b16 %v293
    %v1016 = vunpack.c.l.b16 %v294
    %v1017 = vunpack.c.h.b16 %v294
    %v1018 = vunpack.c.l.b16 %v295
    %v1019 = vunpack.c.h.b16 %v295
    %v1020 = vunpack.c.l.b16 %v296
    %v1021 = vunpack.c.h.b16 %v296
    %v1022 = vunpack.c.l.b16 %v297
    %v1023 = vunpack.c.h.b16 %v297
    %v1024 = vunpack.c.l.b16 %v298
    %v1025 = vunpack.c.h.b16 %v298
    %v1026 = vunpack.c.l.b16 %v299
    %v1027 = vunpack.c.h.b16 %v299
    %v1028 = vunpack.c.l.b16 %v300
    %v1029 = vunpack.c.h.b16 %v300
    %v1030 = vunpack.c.l.b16 %v301
    %v1031 = vunpack.c.h.b16 %v301
    %v1032 = vunpack.c.l.b16 %v302
    %v1033 = vunpack.c.h.b16 %v302
    %v1034 = vunpack.c.l.b16 %v303
    %v1035 = vunpack.c.h.b16 %v303
    %v1036 = vunpack.c.l.b16 %v304
    %v1037 = vunpack.c.h.b16 %v304
    %v1038 = vunpack.c.l.b16 %v305
    %v1039 = vunpack.c.h.b16 %v305
    %v1040 = vunpack.c.l.b16 %v306
    %v1041 = vunpack.c.h.b16 %v306
    %v1042 = vunpack.c.l.b16 %v307
    %v1043 = vunpack.c.h.b16 %v307
    %v1044 = vunpack.c.l.b16 %v308
    %v1045 = vunpack.c.h.b16 %v308
    %v1046 = vunpack.c.l.b16 %v309
    %v1047 = vunpack.c.h.b16 %v309
    %v1048 = vunpack.c.l.b16 %v310
    %v1049 = vunpack.c.h.b16 %v310
    %v1050 = vunpack.c.l.b16 %v311
    %v1051 = vunpack.c.h.b16 %v311
    %v1052 = vunpack.c.l.b16 %v312
    %v1053 = vunpack.c.h.b16 %v312
    %v1054 = vunpack.c.l.b16 %v313
    %v1055 = vunpack.c.h.b16 %v313
    %v1056 = vunpack.c.l.b16 %v314
    %v1057 = vunpack.c.h.b16 %v314
    %v1058 = vunpack.c.l.b16 %v315
    %v1059 = vunpack.c.h.b16 %v315
    %v1060 = vunpack.c.l.b16 %v316
    %v1061 = vunpack.c.h.b16 %v316
    %v1062 = vunpack.c.l.b16 %v317
    %v1063 = vunpack.c.h.b16 %v317
    %v1064 = vunpack.c.l.b16 %v318
    %v1065 = vunpack.c.h.b16 %v318
    %v1066 = vunpack.c.l.b16 %v319
    %v1067 = vunpack.c.h.b16 %v319
    %v1068 = vunpack.c.l.b16 %v320
    %v1069 = vunpack.c.h.b16 %v320
    %v1070 = vunpack.c.l.b16 %v321
    %v1071 = vunpack.c.h.b16 %v321
    %v1072 = vunpack.c.l.b16 %v322
    %v1073 = vunpack.c.h.b16 %v322
    %v1074 = vunpack.c.l.b16 %v323
    %v1075 = vunpack.c.h.b16 %v323
    %v1076 = vunpack.c.l.b16 %v324
    %v1077 = vunpack.c.h.b16 %v324
    %v1078 = vunpack.c.l.b16 %v325
    %v1079 = vunpack.c.h.b16 %v325
    %v1080 = vunpack.c.l.b16 %v326
    %v1081 = vunpack.c.h.b16 %v326
    %v1082 = vunpack.c.l.b16 %v327
    %v1083 = vunpack.c.h.b16 %v327
    %v1084 = vunpack.c.l.b16 %v328
    %v1085 = vunpack.c.h.b16 %v328
    %v1086 = vunpack.c.l.b16 %v329
    %v1087 = vunpack.c.h.b16 %v329
    %v1088 = vunpack.c.l.b16 %v330
    %v1089 = vunpack.c.h.b16 %v330
    %v1090 = vunpack.c.l.b16 %v331
    %v1091 = vunpack.c.h.b16 %v331
    %v1092 = vunpack.c.l.b16 %v332
    %v1093 = vunpack.c.h.b16 %v332
    %v1094 = vunpack.c.l.b16 %v333
    %v1095 = vunpack.c.h.b16 %v333
    %v1096 = vunpack.c.l.b16 %v334
    %v1097 = vunpack.c.h.b16 %v334
    %v1098 = vunpack.c.l.b16 %v335
    %v1099 = vunpack.c.h.b16 %v335
    %v1100 = vunpack.c.l.b16 %v336
    %v1101 = vunpack.c.h.b16 %v336
    %v1102 = vunpack.c.l.b16 %v337
    %v1103 = vunpack.c.h.b16 %v337
    %v1104 = vunpack.c.l.b16 %v338
    %v1105 = vunpack.c.h.b16 %v338
    %v1106 = vunpack.c.l.b16 %v339
    %v1107 = vunpack.c.h.b16 %v339
    %v1108 = vunpack.c.l.b16 %v340
    %v1109 = vunpack.c.h.b16 %v340
    %v1110 = vunpack.c.l.b16 %v341
    %v1111 = vunpack.c.h.b16 %v341
    %v1112 = vunpack.c.l.b16 %v342
    %v1113 = vunpack.c.h.b16 %v342
    %v1114 = vunpack.c.l.b16 %v343
    %v1115 = vunpack.c.h.b16 %v343
    %v1116 = vunpack.c.l.b16 %v344
    %v1117 = vunpack.c.h.b16 %v344
    %v1118 = vunpack.c.l.b16 %v345
    %v1119 = vunpack.c.h.b16 %v345
    %v1120 = vunpack.c.l.b16 %v346
    %v1121 = vunpack.c.h.b16 %v346
    %v1122 = vunpack.c.l.b16 %v347
    %v1123 = vunpack.c.h.b16 %v347
    %v1124 = vunpack.c.l.b16 %v348
    %v1125 = vunpack.c.h.b16 %v348
    %v1126 = vunpack.c.l.b16 %v349
    %v1127 = vunpack.c.h.b16 %v349
    %v1128 = vunpack.c.l.b16 %v350
    %v1129 = vunpack.c.h.b16 %v350
    %v1130 = vunpack.c.l.b16 %v351
    %v1131 = vunpack.c.h.b16 %v351
    %v1132 = vunpack.c.l.b16 %v352
    %v1133 = vunpack.c.h.b16 %v352
    %v1134 = vunpack.c.l.b16 %v353
    %v1135 = vunpack.c.h.b16 %v353
    %v1136 = vunpack.c.l.b16 %v354
    %v1137 = vunpack.c.h.b16 %v354
    %v1138 = vunpack.c.l.b16 %v355
    %v1139 = vunpack.c.h.b16 %v355
    %v1140 = vunpack.c.l.b16 %v356
    %v1141 = vunpack.c.h.b16 %v356
    %v1142 = vunpack.c.l.b16 %v357
    %v1143 = vunpack.c.h.b16 %v357
    %v1144 = vunpack.c.l.b16 %v358
    %v1145 = vunpack.c.h.b16 %v358
    %v1146 = vunpack.c.l.b16 %v359
    %v1147 = vunpack.c.h.b16 %v359
    %v1148 = vunpack.c.l.b16 %v360
    %v1149 = vunpack.c.h.b16 %v360
    %v1150 = vunpack.c.l.b16 %v361
    %v1151 = vunpack.c.h.b16 %v361
    %v1152 = vunpack.c.l.b16 %v362
    %v1153 = vunpack.c.h.b16 %v362
    %v1154 = vunpack.c.l.b16 %v363
    %v1155 = vunpack.c.h.b16 %v363
    %v1156 = vunpack.c.l.b16 %v364
    %v1157 = vunpack.c.h.b16 %v364
    %v1158 = vunpack.c.l.b16 %v365
    %v1159 = vunpack.c.h.b16 %v365
    %v1160 = vunpack.c.l.b16 %v366
    %v1161 = vunpack.c.h.b16 %v366
    %v1162 = vunpack.c.l.b16 %v367
    %v1163 = vunpack.c.h.b16 %v367
    %v1164 = vunpack.c.l.b16 %v368
    %v1165 = vunpack.c.h.b16 %v368
    %v1166 = vunpack.c.l.b16 %v369
    %v1167 = vunpack.c.h.b16 %v369
    %v1168 = vunpack.c.l.b16 %v370
    %v1169 = vunpack.c.h.b16 %v370
    %v1170 = vunpack.c.l.b16 %v371
    %v1171 = vunpack.c.h.b16 %v371
    %v1172 = vunpack.c.l.b16 %v372
    %v1173 = vunpack.c.h.b16 %v372
    %v1174 = vunpack.c.l.b16 %v373
    %v1175 = vunpack.c.h.b16 %v373
    %v1176 = vunpack.c.l.b16 %v374
    %v1177 = vunpack.c.h.b16 %v374
    %v1178 = vunpack.c.l.b16 %v375
    %v1179 = vunpack.c.h.b16 %v375
    %v1180 = vunpack.c.l.b16 %v376
    %v1181 = vunpack.c.h.b16 %v376
    %v1182 = vunpack.c.l.b16 %v377
    %v1183 = vunpack.c.h.b16 %v377
    %v1184 = vpack.c.b16 %v676, %v672
    %v1185 = vpack.c.b16 %v677, %v673
    %v1186 = vpack.c.b16 %v678, %v674
    %v1187 = vpack.c.b16 %v679, %v675
    %v1188 = vpack.c.b16 %v684, %v680
    %v1189 = vpack.c.b16 %v685, %v681
    %v1190 = vpack.c.b16 %v686, %v682
    %v1191 = vpack.c.b16 %v687, %v683
    %v1192 = vpack.c.b16 %v692, %v688
    %v1193 = vpack.c.b16 %v693, %v689
    %v1194 = vpack.c.b16 %v694, %v690
    %v1195 = vpack.c.b16 %v695, %v691
    %v1196 = vpack.c.b16 %v700, %v696
    %v1197 = vpack.c.b16 %v701, %v697
    %v1198 = vpack.c.b16 %v702, %v698
    %v1199 = vpack.c.b16 %v703, %v699
    %v1200 = vpack.c.b16 %v708, %v704
    %v1201 = vpack.c.b16 %v709, %v705
    %v1202 = vpack.c.b16 %v710, %v706
    %v1203 = vpack.c.b16 %v711, %v707
    %v1204 = vpack.c.b16 %v716, %v712
    %v1205 = vpack.c.b16 %v717, %v713
    %v1206 = vpack.c.b16 %v718, %v714
    %v1207 = vpack.c.b16 %v719, %v715
    %v1208 = vpack.c.b16 %v724, %v720
    %v1209 = vpack.c.b16 %v725, %v721
    %v1210 = vpack.c.b16 %v726, %v722
    %v1211 = vpack.c.b16 %v727, %v723
    %v1212 = vpack.c.b16 %v732, %v728
    %v1213 = vpack.c.b16 %v733, %v729
    %v1214 = vpack.c.b16 %v734, %v730
    %v1215 = vpack.c.b16 %v735, %v731
    %v1216 = vpack.c.b16 %v740, %v736
    %v1217 = vpack.c.b16 %v741, %v737
    %v1218 = vpack.c.b16 %v742, %v738
    %v1219 = vpack.c.b16 %v743, %v739
    %v1220 = vpack.c.b16 %v748, %v744
    %v1221 = vpack.c.b16 %v749, %v745
    %v1222 = vpack.c.b16 %v750, %v746
    %v1223 = vpack.c.b16 %v751, %v747
    %v1224 = vpack.c.b16 %v756, %v752
    %v1225 = vpack.c.b16 %v757, %v753
    %v1226 = vpack.c.b16 %v758, %v754
    %v1227 = vpack.c.b16 %v759, %v755
    %v1228 = vpack.c.b16 %v764, %v760
    %v1229 = vpack.c.b16 %v765, %v761
    %v1230 = vpack.c.b16 %v766, %v762
    %v1231 = vpack.c.b16 %v767, %v763
    %v1232 = vpack.c.b16 %v772, %v768
    %v1233 = vpack.c.b16 %v773, %v769
    %v1234 = vpack.c.b16 %v774, %v770
    %v1235 = vpack.c.b16 %v775, %v771
    %v1236 = vpack.c.b16 %v780, %v776
    %v1237 = vpack.c.b16 %v781, %v777
    %v1238 = vpack.c.b16 %v782, %v778
    %v1239 = vpack.c.b16 %v783, %v779
    %v1240 = vpack.c.b16 %v788, %v784
    %v1241 = vpack.c.b16 %v789, %v785
    %v1242 = vpack.c.b16 %v790, %v786
    %v1243 = vpack.c.b16 %v791, %v787
    %v1244 = vpack.c.b16 %v796, %v792
    %v1245 = vpack.c.b16 %v797, %v793
    %v1246 = vpack.c.b16 %v798, %v794
    %v1247 = vpack.c.b16 %v799, %v795
    %v1248 = vpack.c.b16 %v804, %v800
    %v1249 = vpack.c.b16 %v805, %v801
    %v1250 = vpack.c.b16 %v806, %v802
    %v1251 = vpack.c.b16 %v807, %v803
    %v1252 = vpack.c.b16 %v812, %v808
    %v1253 = vpack.c.b16 %v813, %v809
    %v1254 = vpack.c.b16 %v814, %v810
    %v1255 = vpack.c.b16 %v815, %v811
    %v1256 = vpack.c.b16 %v820, %v816
    %v1257 = vpack.c.b16 %v821, %v817
    %v1258 = vpack.c.b16 %v822, %v818
    %v1259 = vpack.c.b16 %v823, %v819
    %v1260 = vpack.c.b16 %v828, %v824
    %v1261 = vpack.c.b16 %v829, %v825
    %v1262 = vpack.c.b16 %v830, %v826
    %v1263 = vpack.c.b16 %v831, %v827
    %v1264 = vpack.c.b16 %v836, %v832
    %v1265 = vpack.c.b16 %v837, %v833
    %v1266 = vpack.c.b16 %v838, %v834
    %v1267 = vpack.c.b16 %v839, %v835
    %v1268 = vpack.c.b16 %v844, %v840
    %v1269 = vpack.c.b16 %v845, %v841
    %v1270 = vpack.c.b16 %v846, %v842
    %v1271 = vpack.c.b16 %v847, %v843
    %v1272 = vpack.c.b16 %v852, %v848
    %v1273 = vpack.c.b16 %v853, %v849
    %v1274 = vpack.c.b16 %v854, %v850
    %v1275 = vpack.c.b16 %v855, %v851
    %v1276 = vpack.c.b16 %v860, %v856
    %v1277 = vpack.c.b16 %v861, %v857
    %v1278 = vpack.c.b16 %v862, %v858
    %v1279 = vpack.c.b16 %v863, %v859
    %v1280 = vpack.c.b16 %v868, %v864
    %v1281 = vpack.c.b16 %v869, %v865
    %v1282 = vpack.c.b16 %v870, %v866
    %v1283 = vpack.c.b16 %v871, %v867
    %v1284 = vpack.c.b16 %v876, %v872
    %v1285 = vpack.c.b16 %v877, %v873
    %v1286 = vpack.c.b16 %v878, %v874
    %v1287 = vpack.c.b16 %v879, %v875
    %v1288 = vpack.c.b16 %v884, %v880
    %v1289 = vpack.c.b16 %v885, %v881
    %v1290 = vpack.c.b16 %v886, %v882
    %v1291 = vpack.c.b16 %v887, %v883
    %v1292 = vpack.c.b16 %v892, %v888
    %v1293 = vpack.c.b16 %v893, %v889
    %v1294 = vpack.c.b16 %v894, %v890
    %v1295 = vpack.c.b16 %v895, %v891
    %v1296 = vpack.c.b16 %v900, %v896
    %v1297 = vpack.c.b16 %v901, %v897
    %v1298 = vpack.c.b16 %v902, %v898
    %v1299 = vpack.c.b16 %v903, %v899
    %v1300 = vpack.c.b16 %v908, %v904
    %v1301 = vpack.c.b16 %v909, %v905
    %v1302 = vpack.c.b16 %v910, %v906
    %v1303 = vpack.c.b16 %v911, %v907
    %v1304 = vpack.c.b16 %v916, %v912
    %v1305 = vpack.c.b16 %v917, %v913
    %v1306 = vpack.c.b16 %v918, %v914
    %v1307 = vpack.c.b16 %v919, %v915
    %v1308 = vpack.c.b16 %v924, %v920
    %v1309 = vpack.c.b16 %v925, %v921
    %v1310 = vpack.c.b16 %v926, %v922
    %v1311 = vpack.c.b16 %v927, %v923
    %v1312 = vpack.c.b16 %v932, %v928
    %v1313 = vpack.c.b16 %v933, %v929
    %v1314 = vpack.c.b16 %v934, %v930
    %v1315 = vpack.c.b16 %v935, %v931
    %v1316 = vpack.c.b16 %v940, %v936
    %v1317 = vpack.c.b16 %v941, %v937
    %v1318 = vpack.c.b16 %v942, %v938
    %v1319 = vpack.c.b16 %v943, %v939
    %v1320 = vpack.c.b16 %v948, %v944
    %v1321 = vpack.c.b16 %v949, %v945
    %v1322 = vpack.c.b16 %v950, %v946
    %v1323 = vpack.c.b16 %v951, %v947
    %v1324 = vpack.c.b16 %v956, %v952
    %v1325 = vpack.c.b16 %v957, %v953
    %v1326 = vpack.c.b16 %v958, %v954
    %v1327 = vpack.c.b16 %v959, %v955
    %v1328 = vpack.c.b16 %v964, %v960
    %v1329 = vpack.c.b16 %v965, %v961
    %v1330 = vpack.c.b16 %v966, %v962
    %v1331 = vpack.c.b16 %v967, %v963
    %v1332 = vpack.c.b16 %v972, %v968
    %v1333 = vpack.c.b16 %v973, %v969
    %v1334 = vpack.c.b16 %v974, %v970
    %v1335 = vpack.c.b16 %v975, %v971
    %v1336 = vpack.c.b16 %v980, %v976
    %v1337 = vpack.c.b16 %v981, %v977
    %v1338 = vpack.c.b16 %v982, %v978
    %v1339 = vpack.c.b16 %v983, %v979
    %v1340 = vpack.c.b16 %v988, %v984
    %v1341 = vpack.c.b16 %v989, %v985
    %v1342 = vpack.c.b16 %v990, %v986
    %v1343 = vpack.c.b16 %v991, %v987
    %v1344 = vpack.c.b16 %v996, %v992
    %v1345 = vpack.c.b16 %v997, %v993
    %v1346 = vpack.c.b16 %v998, %v994
    %v1347 = vpack.c.b16 %v999, %v995
    %v1348 = vpack.c.b16 %v1004, %v1000
    %v1349 = vpack.c.b16 %v1005, %v1001
    %v1350 = vpack.c.b16 %v1006, %v1002
    %v1351 = vpack.c.b16 %v1007, %v1003
    %v1352 = vpack.c.b16 %v1012, %v1008
    %v1353 = vpack.c.b16 %v1013, %v1009
    %v1354 = vpack.c.b16 %v1014, %v1010
    %v1355 = vpack.c.b16 %v1015, %v1011
    %v1356 = vpack.c.b16 %v1020, %v1016
    %v1357 = vpack.c.b16 %v1021, %v1017
    %v1358 = vpack.c.b16 %v1022, %v1018
    %v1359 = vpack.c.b16 %v1023, %v1019
    %v1360 = vpack.c.b16 %v1028, %v1024
    %v1361 = vpack.c.b16 %v1029, %v1025
    %v1362 = vpack.c.b16 %v1030, %v1026
    %v1363 = vpack.c.b16 %v1031, %v1027
    %v1364 = vpack.c.b16 %v1036, %v1032
    %v1365 = vpack.c.b16 %v1037, %v1033
    %v1366 = vpack.c.b16 %v1038, %v1034
    %v1367 = vpack.c.b16 %v1039, %v1035
    %v1368 = vpack.c.b16 %v1044, %v1040
    %v1369 = vpack.c.b16 %v1045, %v1041
    %v1370 = vpack.c.b16 %v1046, %v1042
    %v1371 = vpack.c.b16 %v1047, %v1043
    %v1372 = vpack.c.b16 %v1052, %v1048
    %v1373 = vpack.c.b16 %v1053, %v1049
    %v1374 = vpack.c.b16 %v1054, %v1050
    %v1375 = vpack.c.b16 %v1055, %v1051
    %v1376 = vpack.c.b16 %v1060, %v1056
    %v1377 = vpack.c.b16 %v1061, %v1057
    %v1378 = vpack.c.b16 %v1062, %v1058
    %v1379 = vpack.c.b16 %v1063, %v1059
    %v1380 = vpack.c.b16 %v1068, %v1064
    %v1381 = vpack.c.b16 %v1069, %v1065
    %v1382 = vpack.c.b16 %v1070, %v1066
    %v1383 = vpack.c.b16 %v1071, %v1067
    %v1384 = vpack.c.b16 %v1076, %v1072
    %v1385 = vpack.c.b16 %v1077, %v1073
    %v1386 = vpack.c.b16 %v1078, %v1074
    %v1387 = vpack.c.b16 %v1079, %v1075
    %v1388 = vpack.c.b16 %v1084, %v1080
    %v1389 = vpack.c.b16 %v1085, %v1081
    %v1390 = vpack.c.b16 %v1086, %v1082
    %v1391 = vpack.c.b16 %v1087, %v1083
    %v1392 = vpack.c.b16 %v1092, %v1088
    %v1393 = vpack.c.b16 %v1093, %v1089
    %v1394 = vpack.c.b16 %v1094, %v1090
    %v1395 = vpack.c.b16 %v1095, %v1091
    %v1396 = vpack.c.b16 %v1100, %v1096
    %v1397 = vpack.c.b16 %v1101, %v1097
    %v1398 = vpack.c.b16 %v1102, %v1098
    %v1399 = vpack.c.b16 %v1103, %v1099
    %v1400 = vpack.c.b16 %v1108, %v1104
    %v1401 = vpack.c.b16 %v1109, %v1105
    %v1402 = vpack.c.b16 %v1110, %v1106
    %v1403 = vpack.c.b16 %v1111, %v1107
    %v1404 = vpack.c.b16 %v1116, %v1112
    %v1405 = vpack.c.b16 %v1117, %v1113
    %v1406 = vpack.c.b16 %v1118, %v1114
    %v1407 = vpack.c.b16 %v1119, %v1115
    %v1408 = vpack.c.b16 %v1124, %v1120
    %v1409 = vpack.c.b16 %v1125, %v1121
    %v1410 = vpack.c.b16 %v1126, %v1122
    %v1411 = vpack.c.b16 %v1127, %v1123
    %v1412 = vpack.c.b16 %v1132, %v1128
    %v1413 = vpack.c.b16 %v1133, %v1129
    %v1414 = vpack.c.b16 %v1134, %v1130
    %v1415 = vpack.c.b16 %v1135, %v1131
    %v1416 = vpack.c.b16 %v1140, %v1136
    %v1417 = vpack.c.b16 %v1141, %v1137
    %v1418 = vpack.c.b16 %v1142, %v1138
    %v1419 = vpack.c.b16 %v1143, %v1139
    %v1420 = vpack.c.b16 %v1148, %v1144
    %v1421 = vpack.c.b16 %v1149, %v1145
    %v1422 = vpack.c.b16 %v1150, %v1146
    %v1423 = vpack.c.b16 %v1151, %v1147
    %v1424 = vpack.c.b16 %v1156, %v1152
    %v1425 = vpack.c.b16 %v1157, %v1153
    %v1426 = vpack.c.b16 %v1158, %v1154
    %v1427 = vpack.c.b16 %v1159, %v1155
    %v1428 = vpack.c.b16 %v1164, %v1160
    %v1429 = vpack.c.b16 %v1165, %v1161
    %v1430 = vpack.c.b16 %v1166, %v1162
    %v1431 = vpack.c.b16 %v1167, %v1163
    %v1432 = vpack.c.b16 %v1172, %v1168
    %v1433 = vpack.c.b16 %v1173, %v1169
    %v1434 = vpack.c.b16 %v1174, %v1170
    %v1435 = vpack.c.b16 %v1175, %v1171
    %v1436 = vpack.c.b16 %v1180, %v1176
    %v1437 = vpack.c.b16 %v1181, %v1177
    %v1438 = vpack.c.b16 %v1182, %v1178
    %v1439 = vpack.c.b16 %v1183, %v1179
    %1696 = vmatpush.bf16.msra.mxu0 %v1212
    %1697 = vmatpush.bf16.msra.mxu0 %v1208
    %1698 = vmatpush.bf16.msra.mxu0 %v1204
    %1699 = vmatpush.bf16.msra.mxu0 %v1200
    %1700 = vmatpush.bf16.msra.mxu0 %v1196
    %1701 = vmatpush.bf16.msra.mxu0 %v1192
    %1702 = vmatpush.bf16.msra.mxu0 %v1188
    %1703 = vmatpush.bf16.msra.mxu0 %v1184
    %1704 = vmatmul.bf16.gmra.mxu0 %v400
    %v1705 = vpop.f32.mrf.mxu0
    %v1706 = vadd.f32 %v380, %v1705
    %v1707 = vpop.f32.mrf.mxu0
    %1708 = vdwg.mxu0
    %1709 = vmatpush.bf16.msra.mxu0 %v1244
    %1710 = vmatpush.bf16.msra.mxu0 %v1240
    %1711 = vmatpush.bf16.msra.mxu0 %v1236
    %1712 = vmatpush.bf16.msra.mxu0 %v1232
    %1713 = vmatpush.bf16.msra.mxu0 %v1228
    %1714 = vmatpush.bf16.msra.mxu0 %v1224
    %1715 = vmatpush.bf16.msra.mxu0 %v1220
    %1716 = vmatpush.bf16.msra.mxu0 %v1216
    %1717 = vmatmul.bf16.gmra.mxu0 %v401
    %v1718 = vpop.f32.mrf.mxu0
    %v1719 = vadd.f32 %v1706, %v1718
    %v1720 = vpop.f32.mrf.mxu0
    %1721 = vdwg.mxu0
    %1722 = vmatpush.bf16.msra.mxu0 %v1276
    %1723 = vmatpush.bf16.msra.mxu0 %v1272
    %1724 = vmatpush.bf16.msra.mxu0 %v1268
    %1725 = vmatpush.bf16.msra.mxu0 %v1264
    %1726 = vmatpush.bf16.msra.mxu0 %v1260
    %1727 = vmatpush.bf16.msra.mxu0 %v1256
    %1728 = vmatpush.bf16.msra.mxu0 %v1252
    %1729 = vmatpush.bf16.msra.mxu0 %v1248
    %1730 = vmatmul.bf16.gmra.mxu0 %v402
    %v1731 = vpop.f32.mrf.mxu0
    %v1732 = vadd.f32 %v1719, %v1731
    %v1733 = vpop.f32.mrf.mxu0
    %1734 = vdwg.mxu0
    %1735 = vmatpush.bf16.msra.mxu0 %v1308
    %1736 = vmatpush.bf16.msra.mxu0 %v1304
    %1737 = vmatpush.bf16.msra.mxu0 %v1300
    %1738 = vmatpush.bf16.msra.mxu0 %v1296
    %1739 = vmatpush.bf16.msra.mxu0 %v1292
    %1740 = vmatpush.bf16.msra.mxu0 %v1288
    %1741 = vmatpush.bf16.msra.mxu0 %v1284
    %1742 = vmatpush.bf16.msra.mxu0 %v1280
    %1743 = vmatmul.bf16.gmra.mxu0 %v403
    %v1744 = vpop.f32.mrf.mxu0
    %v1745 = vadd.f32 %v1732, %v1744
    %v1746 = vpop.f32.mrf.mxu0
    %1747 = vdwg.mxu0
    %1748 = vmatpush.bf16.msra.mxu0 %v1340
    %1749 = vmatpush.bf16.msra.mxu0 %v1336
    %1750 = vmatpush.bf16.msra.mxu0 %v1332
    %1751 = vmatpush.bf16.msra.mxu0 %v1328
    %1752 = vmatpush.bf16.msra.mxu0 %v1324
    %1753 = vmatpush.bf16.msra.mxu0 %v1320
    %1754 = vmatpush.bf16.msra.mxu0 %v1316
    %1755 = vmatpush.bf16.msra.mxu0 %v1312
    %1756 = vmatmul.bf16.gmra.mxu0 %v404
    %v1757 = vpop.f32.mrf.mxu0
    %v1758 = vadd.f32 %v1745, %v1757
    %v1759 = vpop.f32.mrf.mxu0
    %1760 = vdwg.mxu0
    %1761 = vmatpush.bf16.msra.mxu0 %v1372
    %1762 = vmatpush.bf16.msra.mxu0 %v1368
    %1763 = vmatpush.bf16.msra.mxu0 %v1364
    %1764 = vmatpush.bf16.msra.mxu0 %v1360
    %1765 = vmatpush.bf16.msra.mxu0 %v1356
    %1766 = vmatpush.bf16.msra.mxu0 %v1352
    %1767 = vmatpush.bf16.msra.mxu0 %v1348
    %1768 = vmatpush.bf16.msra.mxu0 %v1344
    %1769 = vmatmul.bf16.gmra.mxu0 %v405
    %v1770 = vpop.f32.mrf.mxu0
    %v1771 = vadd.f32 %v1758, %v1770
    %v1772 = vpop.f32.mrf.mxu0
    %1773 = vdwg.mxu0
    %1774 = vmatpush.bf16.msra.mxu0 %v1404
    %1775 = vmatpush.bf16.msra.mxu0 %v1400
    %1776 = vmatpush.bf16.msra.mxu0 %v1396
    %1777 = vmatpush.bf16.msra.mxu0 %v1392
    %1778 = vmatpush.bf16.msra.mxu0 %v1388
    %1779 = vmatpush.bf16.msra.mxu0 %v1384
    %1780 = vmatpush.bf16.msra.mxu0 %v1380
    %1781 = vmatpush.bf16.msra.mxu0 %v1376
    %1782 = vmatmul.bf16.gmra.mxu0 %v406
    %v1783 = vpop.f32.mrf.mxu0
    %v1784 = vadd.f32 %v1771, %v1783
    %v1785 = vpop.f32.mrf.mxu0
    %1786 = vdwg.mxu0
    %1787 = vmatpush.bf16.msra.mxu0 %v1436
    %1788 = vmatpush.bf16.msra.mxu0 %v1432
    %1789 = vmatpush.bf16.msra.mxu0 %v1428
    %1790 = vmatpush.bf16.msra.mxu0 %v1424
    %1791 = vmatpush.bf16.msra.mxu0 %v1420
    %1792 = vmatpush.bf16.msra.mxu0 %v1416
    %1793 = vmatpush.bf16.msra.mxu0 %v1412
    %1794 = vmatpush.bf16.msra.mxu0 %v1408
    %1795 = vmatmul.bf16.gmra.mxu0 %v407
    %v1796 = vpop.f32.mrf.mxu0
    %v1797 = vadd.f32 %v1784, %v1796
    %v1798 = vpop.f32.mrf.mxu0
    %1799 = vdwg.mxu0
    %1800 = vmatpush.bf16.msra.mxu0 %v1213
    %1801 = vmatpush.bf16.msra.mxu0 %v1209
    %1802 = vmatpush.bf16.msra.mxu0 %v1205
    %1803 = vmatpush.bf16.msra.mxu0 %v1201
    %1804 = vmatpush.bf16.msra.mxu0 %v1197
    %1805 = vmatpush.bf16.msra.mxu0 %v1193
    %1806 = vmatpush.bf16.msra.mxu0 %v1189
    %1807 = vmatpush.bf16.msra.mxu0 %v1185
    %1808 = vmatmul.bf16.gmra.mxu0 %v400
    %v1809 = vpop.f32.mrf.mxu0
    %v1810 = vadd.f32 %v381, %v1809
    %v1811 = vpop.f32.mrf.mxu0
    %1812 = vdwg.mxu0
    %1813 = vmatpush.bf16.msra.mxu0 %v1245
    %1814 = vmatpush.bf16.msra.mxu0 %v1241
    %1815 = vmatpush.bf16.msra.mxu0 %v1237
    %1816 = vmatpush.bf16.msra.mxu0 %v1233
    %1817 = vmatpush.bf16.msra.mxu0 %v1229
    %1818 = vmatpush.bf16.msra.mxu0 %v1225
    %1819 = vmatpush.bf16.msra.mxu0 %v1221
    %1820 = vmatpush.bf16.msra.mxu0 %v1217
    %1821 = vmatmul.bf16.gmra.mxu0 %v401
    %v1822 = vpop.f32.mrf.mxu0
    %v1823 = vadd.f32 %v1810, %v1822
    %v1824 = vpop.f32.mrf.mxu0
    %1825 = vdwg.mxu0
    %1826 = vmatpush.bf16.msra.mxu0 %v1277
    %1827 = vmatpush.bf16.msra.mxu0 %v1273
    %1828 = vmatpush.bf16.msra.mxu0 %v1269
    %1829 = vmatpush.bf16.msra.mxu0 %v1265
    %1830 = vmatpush.bf16.msra.mxu0 %v1261
    %1831 = vmatpush.bf16.msra.mxu0 %v1257
    %1832 = vmatpush.bf16.msra.mxu0 %v1253
    %1833 = vmatpush.bf16.msra.mxu0 %v1249
    %1834 = vmatmul.bf16.gmra.mxu0 %v402
    %v1835 = vpop.f32.mrf.mxu0
    %v1836 = vadd.f32 %v1823, %v1835
    %v1837 = vpop.f32.mrf.mxu0
    %1838 = vdwg.mxu0
    %1839 = vmatpush.bf16.msra.mxu0 %v1309
    %1840 = vmatpush.bf16.msra.mxu0 %v1305
    %1841 = vmatpush.bf16.msra.mxu0 %v1301
    %1842 = vmatpush.bf16.msra.mxu0 %v1297
    %1843 = vmatpush.bf16.msra.mxu0 %v1293
    %1844 = vmatpush.bf16.msra.mxu0 %v1289
    %1845 = vmatpush.bf16.msra.mxu0 %v1285
    %1846 = vmatpush.bf16.msra.mxu0 %v1281
    %1847 = vmatmul.bf16.gmra.mxu0 %v403
    %v1848 = vpop.f32.mrf.mxu0
    %v1849 = vadd.f32 %v1836, %v1848
    %v1850 = vpop.f32.mrf.mxu0
    %1851 = vdwg.mxu0
    %1852 = vmatpush.bf16.msra.mxu0 %v1341
    %1853 = vmatpush.bf16.msra.mxu0 %v1337
    %1854 = vmatpush.bf16.msra.mxu0 %v1333
    %1855 = vmatpush.bf16.msra.mxu0 %v1329
    %1856 = vmatpush.bf16.msra.mxu0 %v1325
    %1857 = vmatpush.bf16.msra.mxu0 %v1321
    %1858 = vmatpush.bf16.msra.mxu0 %v1317
    %1859 = vmatpush.bf16.msra.mxu0 %v1313
    %1860 = vmatmul.bf16.gmra.mxu0 %v404
    %v1861 = vpop.f32.mrf.mxu0
    %v1862 = vadd.f32 %v1849, %v1861
    %v1863 = vpop.f32.mrf.mxu0
    %1864 = vdwg.mxu0
    %1865 = vmatpush.bf16.msra.mxu0 %v1373
    %1866 = vmatpush.bf16.msra.mxu0 %v1369
    %1867 = vmatpush.bf16.msra.mxu0 %v1365
    %1868 = vmatpush.bf16.msra.mxu0 %v1361
    %1869 = vmatpush.bf16.msra.mxu0 %v1357
    %1870 = vmatpush.bf16.msra.mxu0 %v1353
    %1871 = vmatpush.bf16.msra.mxu0 %v1349
    %1872 = vmatpush.bf16.msra.mxu0 %v1345
    %1873 = vmatmul.bf16.gmra.mxu0 %v405
    %v1874 = vpop.f32.mrf.mxu0
    %v1875 = vadd.f32 %v1862, %v1874
    %v1876 = vpop.f32.mrf.mxu0
    %1877 = vdwg.mxu0
    %1878 = vmatpush.bf16.msra.mxu0 %v1405
    %1879 = vmatpush.bf16.msra.mxu0 %v1401
    %1880 = vmatpush.bf16.msra.mxu0 %v1397
    %1881 = vmatpush.bf16.msra.mxu0 %v1393
    %1882 = vmatpush.bf16.msra.mxu0 %v1389
    %1883 = vmatpush.bf16.msra.mxu0 %v1385
    %1884 = vmatpush.bf16.msra.mxu0 %v1381
    %1885 = vmatpush.bf16.msra.mxu0 %v1377
    %1886 = vmatmul.bf16.gmra.mxu0 %v406
    %v1887 = vpop.f32.mrf.mxu0
    %v1888 = vadd.f32 %v1875, %v1887
    %v1889 = vpop.f32.mrf.mxu0
    %1890 = vdwg.mxu0
    %1891 = vmatpush.bf16.msra.mxu0 %v1437
    %1892 = vmatpush.bf16.msra.mxu0 %v1433
    %1893 = vmatpush.bf16.msra.mxu0 %v1429
    %1894 = vmatpush.bf16.msra.mxu0 %v1425
    %1895 = vmatpush.bf16.msra.mxu0 %v1421
    %1896 = vmatpush.bf16.msra.mxu0 %v1417
    %1897 = vmatpush.bf16.msra.mxu0 %v1413
    %1898 = vmatpush.bf16.msra.mxu0 %v1409
    %1899 = vmatmul.bf16.gmra.mxu0 %v407
    %v1900 = vpop.f32.mrf.mxu0
    %v1901 = vadd.f32 %v1888, %v1900
    %v1902 = vpop.f32.mrf.mxu0
    %1903 = vdwg.mxu0
    %1904 = vmatpush.bf16.msra.mxu0 %v1214
    %1905 = vmatpush.bf16.msra.mxu0 %v1210
    %1906 = vmatpush.bf16.msra.mxu0 %v1206
    %1907 = vmatpush.bf16.msra.mxu0 %v1202
    %1908 = vmatpush.bf16.msra.mxu0 %v1198
    %1909 = vmatpush.bf16.msra.mxu0 %v1194
    %1910 = vmatpush.bf16.msra.mxu0 %v1190
    %1911 = vmatpush.bf16.msra.mxu0 %v1186
    %1912 = vmatmul.bf16.gmra.mxu0 %v400
    %v1913 = vpop.f32.mrf.mxu0
    %v1914 = vadd.f32 %v382, %v1913
    %v1915 = vpop.f32.mrf.mxu0
    %1916 = vdwg.mxu0
    %1917 = vmatpush.bf16.msra.mxu0 %v1246
    %1918 = vmatpush.bf16.msra.mxu0 %v1242
    %1919 = vmatpush.bf16.msra.mxu0 %v1238
    %1920 = vmatpush.bf16.msra.mxu0 %v1234
    %1921 = vmatpush.bf16.msra.mxu0 %v1230
    %1922 = vmatpush.bf16.msra.mxu0 %v1226
    %1923 = vmatpush.bf16.msra.mxu0 %v1222
    %1924 = vmatpush.bf16.msra.mxu0 %v1218
    %1925 = vmatmul.bf16.gmra.mxu0 %v401
    %v1926 = vpop.f32.mrf.mxu0
    %v1927 = vadd.f32 %v1914, %v1926
    %v1928 = vpop.f32.mrf.mxu0
    %1929 = vdwg.mxu0
    %1930 = vmatpush.bf16.msra.mxu0 %v1278
    %1931 = vmatpush.bf16.msra.mxu0 %v1274
    %1932 = vmatpush.bf16.msra.mxu0 %v1270
    %1933 = vmatpush.bf16.msra.mxu0 %v1266
    %1934 = vmatpush.bf16.msra.mxu0 %v1262
    %1935 = vmatpush.bf16.msra.mxu0 %v1258
    %1936 = vmatpush.bf16.msra.mxu0 %v1254
    %1937 = vmatpush.bf16.msra.mxu0 %v1250
    %1938 = vmatmul.bf16.gmra.mxu0 %v402
    %v1939 = vpop.f32.mrf.mxu0
    %v1940 = vadd.f32 %v1927, %v1939
    %v1941 = vpop.f32.mrf.mxu0
    %1942 = vdwg.mxu0
    %1943 = vmatpush.bf16.msra.mxu0 %v1310
    %1944 = vmatpush.bf16.msra.mxu0 %v1306
    %1945 = vmatpush.bf16.msra.mxu0 %v1302
    %1946 = vmatpush.bf16.msra.mxu0 %v1298
    %1947 = vmatpush.bf16.msra.mxu0 %v1294
    %1948 = vmatpush.bf16.msra.mxu0 %v1290
    %1949 = vmatpush.bf16.msra.mxu0 %v1286
    %1950 = vmatpush.bf16.msra.mxu0 %v1282
    %1951 = vmatmul.bf16.gmra.mxu0 %v403
    %v1952 = vpop.f32.mrf.mxu0
    %v1953 = vadd.f32 %v1940, %v1952
    %v1954 = vpop.f32.mrf.mxu0
    %1955 = vdwg.mxu0
    %1956 = vmatpush.bf16.msra.mxu0 %v1342
    %1957 = vmatpush.bf16.msra.mxu0 %v1338
    %1958 = vmatpush.bf16.msra.mxu0 %v1334
    %1959 = vmatpush.bf16.msra.mxu0 %v1330
    %1960 = vmatpush.bf16.msra.mxu0 %v1326
    %1961 = vmatpush.bf16.msra.mxu0 %v1322
    %1962 = vmatpush.bf16.msra.mxu0 %v1318
    %1963 = vmatpush.bf16.msra.mxu0 %v1314
    %1964 = vmatmul.bf16.gmra.mxu0 %v404
    %v1965 = vpop.f32.mrf.mxu0
    %v1966 = vadd.f32 %v1953, %v1965
    %v1967 = vpop.f32.mrf.mxu0
    %1968 = vdwg.mxu0
    %1969 = vmatpush.bf16.msra.mxu0 %v1374
    %1970 = vmatpush.bf16.msra.mxu0 %v1370
    %1971 = vmatpush.bf16.msra.mxu0 %v1366
    %1972 = vmatpush.bf16.msra.mxu0 %v1362
    %1973 = vmatpush.bf16.msra.mxu0 %v1358
    %1974 = vmatpush.bf16.msra.mxu0 %v1354
    %1975 = vmatpush.bf16.msra.mxu0 %v1350
    %1976 = vmatpush.bf16.msra.mxu0 %v1346
    %1977 = vmatmul.bf16.gmra.mxu0 %v405
    %v1978 = vpop.f32.mrf.mxu0
    %v1979 = vadd.f32 %v1966, %v1978
    %v1980 = vpop.f32.mrf.mxu0
    %1981 = vdwg.mxu0
    %1982 = vmatpush.bf16.msra.mxu0 %v1406
    %1983 = vmatpush.bf16.msra.mxu0 %v1402
    %1984 = vmatpush.bf16.msra.mxu0 %v1398
    %1985 = vmatpush.bf16.msra.mxu0 %v1394
    %1986 = vmatpush.bf16.msra.mxu0 %v1390
    %1987 = vmatpush.bf16.msra.mxu0 %v1386
    %1988 = vmatpush.bf16.msra.mxu0 %v1382
    %1989 = vmatpush.bf16.msra.mxu0 %v1378
    %1990 = vmatmul.bf16.gmra.mxu0 %v406
    %v1991 = vpop.f32.mrf.mxu0
    %v1992 = vadd.f32 %v1979, %v1991
    %v1993 = vpop.f32.mrf.mxu0
    %1994 = vdwg.mxu0
    %1995 = vmatpush.bf16.msra.mxu0 %v1438
    %1996 = vmatpush.bf16.msra.mxu0 %v1434
    %1997 = vmatpush.bf16.msra.mxu0 %v1430
    %1998 = vmatpush.bf16.msra.mxu0 %v1426
    %1999 = vmatpush.bf16.msra.mxu0 %v1422
    %2000 = vmatpush.bf16.msra.mxu0 %v1418
    %2001 = vmatpush.bf16.msra.mxu0 %v1414
    %2002 = vmatpush.bf16.msra.mxu0 %v1410
    %2003 = vmatmul.bf16.gmra.mxu0 %v407
    %v2004 = vpop.f32.mrf.mxu0
    %v2005 = vadd.f32 %v1992, %v2004
    %v2006 = vpop.f32.mrf.mxu0
    %2007 = vdwg.mxu0
    %2008 = vmatpush.bf16.msra.mxu0 %v1215
    %2009 = vmatpush.bf16.msra.mxu0 %v1211
    %2010 = vmatpush.bf16.msra.mxu0 %v1207
    %2011 = vmatpush.bf16.msra.mxu0 %v1203
    %2012 = vmatpush.bf16.msra.mxu0 %v1199
    %2013 = vmatpush.bf16.msra.mxu0 %v1195
    %2014 = vmatpush.bf16.msra.mxu0 %v1191
    %2015 = vmatpush.bf16.msra.mxu0 %v1187
    %2016 = vmatmul.bf16.gmra.mxu0 %v400
    %v2017 = vpop.f32.mrf.mxu0
    %v2018 = vadd.f32 %v383, %v2017
    %v2019 = vpop.f32.mrf.mxu0
    %2020 = vdwg.mxu0
    %2021 = vmatpush.bf16.msra.mxu0 %v1247
    %2022 = vmatpush.bf16.msra.mxu0 %v1243
    %2023 = vmatpush.bf16.msra.mxu0 %v1239
    %2024 = vmatpush.bf16.msra.mxu0 %v1235
    %2025 = vmatpush.bf16.msra.mxu0 %v1231
    %2026 = vmatpush.bf16.msra.mxu0 %v1227
    %2027 = vmatpush.bf16.msra.mxu0 %v1223
    %2028 = vmatpush.bf16.msra.mxu0 %v1219
    %2029 = vmatmul.bf16.gmra.mxu0 %v401
    %v2030 = vpop.f32.mrf.mxu0
    %v2031 = vadd.f32 %v2018, %v2030
    %v2032 = vpop.f32.mrf.mxu0
    %2033 = vdwg.mxu0
    %2034 = vmatpush.bf16.msra.mxu0 %v1279
    %2035 = vmatpush.bf16.msra.mxu0 %v1275
    %2036 = vmatpush.bf16.msra.mxu0 %v1271
    %2037 = vmatpush.bf16.msra.mxu0 %v1267
    %2038 = vmatpush.bf16.msra.mxu0 %v1263
    %2039 = vmatpush.bf16.msra.mxu0 %v1259
    %2040 = vmatpush.bf16.msra.mxu0 %v1255
    %2041 = vmatpush.bf16.msra.mxu0 %v1251
    %2042 = vmatmul.bf16.gmra.mxu0 %v402
    %v2043 = vpop.f32.mrf.mxu0
    %v2044 = vadd.f32 %v2031, %v2043
    %v2045 = vpop.f32.mrf.mxu0
    %2046 = vdwg.mxu0
    %2047 = vmatpush.bf16.msra.mxu0 %v1311
    %2048 = vmatpush.bf16.msra.mxu0 %v1307
    %2049 = vmatpush.bf16.msra.mxu0 %v1303
    %2050 = vmatpush.bf16.msra.mxu0 %v1299
    %2051 = vmatpush.bf16.msra.mxu0 %v1295
    %2052 = vmatpush.bf16.msra.mxu0 %v1291
    %2053 = vmatpush.bf16.msra.mxu0 %v1287
    %2054 = vmatpush.bf16.msra.mxu0 %v1283
    %2055 = vmatmul.bf16.gmra.mxu0 %v403
    %v2056 = vpop.f32.mrf.mxu0
    %v2057 = vadd.f32 %v2044, %v2056
    %v2058 = vpop.f32.mrf.mxu0
    %2059 = vdwg.mxu0
    %2060 = vmatpush.bf16.msra.mxu0 %v1343
    %2061 = vmatpush.bf16.msra.mxu0 %v1339
    %2062 = vmatpush.bf16.msra.mxu0 %v1335
    %2063 = vmatpush.bf16.msra.mxu0 %v1331
    %2064 = vmatpush.bf16.msra.mxu0 %v1327
    %2065 = vmatpush.bf16.msra.mxu0 %v1323
    %2066 = vmatpush.bf16.msra.mxu0 %v1319
    %2067 = vmatpush.bf16.msra.mxu0 %v1315
    %2068 = vmatmul.bf16.gmra.mxu0 %v404
    %v2069 = vpop.f32.mrf.mxu0
    %v2070 = vadd.f32 %v2057, %v2069
    %v2071 = vpop.f32.mrf.mxu0
    %2072 = vdwg.mxu0
    %2073 = vmatpush.bf16.msra.mxu0 %v1375
    %2074 = vmatpush.bf16.msra.mxu0 %v1371
    %2075 = vmatpush.bf16.msra.mxu0 %v1367
    %2076 = vmatpush.bf16.msra.mxu0 %v1363
    %2077 = vmatpush.bf16.msra.mxu0 %v1359
    %2078 = vmatpush.bf16.msra.mxu0 %v1355
    %2079 = vmatpush.bf16.msra.mxu0 %v1351
    %2080 = vmatpush.bf16.msra.mxu0 %v1347
    %2081 = vmatmul.bf16.gmra.mxu0 %v405
    %v2082 = vpop.f32.mrf.mxu0
    %v2083 = vadd.f32 %v2070, %v2082
    %v2084 = vpop.f32.mrf.mxu0
    %2085 = vdwg.mxu0
    %2086 = vmatpush.bf16.msra.mxu0 %v1407
    %2087 = vmatpush.bf16.msra.mxu0 %v1403
    %2088 = vmatpush.bf16.msra.mxu0 %v1399
    %2089 = vmatpush.bf16.msra.mxu0 %v1395
    %2090 = vmatpush.bf16.msra.mxu0 %v1391
    %2091 = vmatpush.bf16.msra.mxu0 %v1387
    %2092 = vmatpush.bf16.msra.mxu0 %v1383
    %2093 = vmatpush.bf16.msra.mxu0 %v1379
    %2094 = vmatmul.bf16.gmra.mxu0 %v406
    %v2095 = vpop.f32.mrf.mxu0
    %v2096 = vadd.f32 %v2083, %v2095
    %v2097 = vpop.f32.mrf.mxu0
    %2098 = vdwg.mxu0
    %2099 = vmatpush.bf16.msra.mxu0 %v1439
    %2100 = vmatpush.bf16.msra.mxu0 %v1435
    %2101 = vmatpush.bf16.msra.mxu0 %v1431
    %2102 = vmatpush.bf16.msra.mxu0 %v1427
    %2103 = vmatpush.bf16.msra.mxu0 %v1423
    %2104 = vmatpush.bf16.msra.mxu0 %v1419
    %2105 = vmatpush.bf16.msra.mxu0 %v1415
    %2106 = vmatpush.bf16.msra.mxu0 %v1411
    %2107 = vmatmul.bf16.gmra.mxu0 %v407
    %v2108 = vpop.f32.mrf.mxu0
    %v2109 = vadd.f32 %v2096, %v2108
    %v2110 = vpop.f32.mrf.mxu0
    %2111 = vdwg.mxu0
    %v2112 = vmax.f32 %v1797, 0.0
    %v2113 = vmax.f32 %v1901, 0.0
    %v2114 = vmax.f32 %v2005, 0.0
    %v2115 = vmax.f32 %v2109, 0.0
    %v2116 = vpack.c.bf16 %v2112, %v2112
    %v2117 = vpack.c.bf16 %v2113, %v2113
    %v2118 = vpack.c.bf16 %v2114, %v2114
    %v2119 = vpack.c.bf16 %v2115, %v2115
    %v2120 = vld [vmem:[#allocation6] sm:$0xf]
    %v2121 = vld [vmem:[#allocation6 + $0x4] sm:$0xf]
    %v2122 = vld [vmem:[#allocation6 + $0x8] sm:$0xf]
    %v2123 = vld [vmem:[#allocation6 + $0xc] sm:$0xf]
    %v2124 = vld [vmem:[#allocation6 + $0x10] sm:$0xf]
    %v2125 = vld [vmem:[#allocation6 + $0x14] sm:$0xf]
    %v2126 = vld [vmem:[#allocation6 + $0x18] sm:$0xf]
    %v2127 = vld [vmem:[#allocation6 + $0x1c] sm:$0xf]
    %v2128 = vld [vmem:[#allocation6 + $0x20] sm:$0xf]
    %v2129 = vld [vmem:[#allocation6 + $0x24] sm:$0xf]
    %v2130 = vld [vmem:[#allocation6 + $0x28] sm:$0xf]
    %v2131 = vld [vmem:[#allocation6 + $0x2c] sm:$0xf]
    %v2132 = vld [vmem:[#allocation6 + $0x30] sm:$0xf]
    %v2133 = vld [vmem:[#allocation6 + $0x34] sm:$0xf]
    %v2134 = vld [vmem:[#allocation6 + $0x38] sm:$0xf]
    %v2135 = vld [vmem:[#allocation6 + $0x3c] sm:$0xf]
    %v2136 = vld [vmem:[#allocation6 + $0x40] sm:$0xf]
    %v2137 = vld [vmem:[#allocation6 + $0x44] sm:$0xf]
    %v2138 = vld [vmem:[#allocation6 + $0x48] sm:$0xf]
    %v2139 = vld [vmem:[#allocation6 + $0x4c] sm:$0xf]
    %v2140 = vld [vmem:[#allocation6 + $0x50] sm:$0xf]
    %v2141 = vld [vmem:[#allocation6 + $0x54] sm:$0xf]
    %v2142 = vld [vmem:[#allocation6 + $0x58] sm:$0xf]
    %v2143 = vld [vmem:[#allocation6 + $0x5c] sm:$0xf]
    %v2144 = vld [vmem:[#allocation6 + $0x60] sm:$0xf]
    %v2145 = vld [vmem:[#allocation6 + $0x64] sm:$0xf]
    %v2146 = vld [vmem:[#allocation6 + $0x68] sm:$0xf]
    %v2147 = vld [vmem:[#allocation6 + $0x6c] sm:$0xf]
    %v2148 = vld [vmem:[#allocation6 + $0x70] sm:$0xf]
    %v2149 = vld [vmem:[#allocation6 + $0x74] sm:$0xf]
    %v2150 = vld [vmem:[#allocation6 + $0x78] sm:$0xf]
    %v2151 = vld [vmem:[#allocation6 + $0x7c] sm:$0xf]
    %v2152 = vld [vmem:[#allocation6 + $0x80] sm:$0xf]
    %v2153 = vld [vmem:[#allocation6 + $0x84] sm:$0xf]
    %v2154 = vld [vmem:[#allocation6 + $0x88] sm:$0xf]
    %v2155 = vld [vmem:[#allocation6 + $0x8c] sm:$0xf]
    %v2156 = vld [vmem:[#allocation6 + $0x90] sm:$0xf]
    %v2157 = vld [vmem:[#allocation6 + $0x94] sm:$0xf]
    %v2158 = vld [vmem:[#allocation6 + $0x98] sm:$0xf]
    %v2159 = vld [vmem:[#allocation6 + $0x9c] sm:$0xf]
    %v2160 = vld [vmem:[#allocation6 + $0xa0] sm:$0xf]
    %v2161 = vld [vmem:[#allocation6 + $0xa4] sm:$0xf]
    %v2162 = vld [vmem:[#allocation6 + $0xa8] sm:$0xf]
    %v2163 = vld [vmem:[#allocation6 + $0xac] sm:$0xf]
    %v2164 = vld [vmem:[#allocation6 + $0xb0] sm:$0xf]
    %v2165 = vld [vmem:[#allocation6 + $0xb4] sm:$0xf]
    %v2166 = vld [vmem:[#allocation6 + $0xb8] sm:$0xf]
    %v2167 = vld [vmem:[#allocation6 + $0xbc] sm:$0xf]
    %v2168 = vld [vmem:[#allocation6 + $0xc0] sm:$0xf]
    %v2169 = vld [vmem:[#allocation6 + $0xc4] sm:$0xf]
    %v2170 = vld [vmem:[#allocation6 + $0xc8] sm:$0xf]
    %v2171 = vld [vmem:[#allocation6 + $0xcc] sm:$0xf]
    %v2172 = vld [vmem:[#allocation6 + $0xd0] sm:$0xf]
    %v2173 = vld [vmem:[#allocation6 + $0xd4] sm:$0xf]
    %v2174 = vld [vmem:[#allocation6 + $0xd8] sm:$0xf]
    %v2175 = vld [vmem:[#allocation6 + $0xdc] sm:$0xf]
    %v2176 = vld [vmem:[#allocation6 + $0xe0] sm:$0xf]
    %v2177 = vld [vmem:[#allocation6 + $0xe4] sm:$0xf]
    %v2178 = vld [vmem:[#allocation6 + $0xe8] sm:$0xf]
    %v2179 = vld [vmem:[#allocation6 + $0xec] sm:$0xf]
    %v2180 = vld [vmem:[#allocation6 + $0xf0] sm:$0xf]
    %v2181 = vld [vmem:[#allocation6 + $0xf4] sm:$0xf]
    %v2182 = vld [vmem:[#allocation6 + $0xf8] sm:$0xf]
    %v2183 = vld [vmem:[#allocation6 + $0xfc] sm:$0xf]
    %v2184 = vld [vmem:[#allocation7] sm:$0x1]
    %v2186 = vperm.slane %v2184, 0
    %v2252 = vunpack.c.l.b16 %v2120
    %v2253 = vunpack.c.l.b16 %v2121
    %v2254 = vunpack.c.l.b16 %v2122
    %v2255 = vunpack.c.l.b16 %v2123
    %v2256 = vunpack.c.l.b16 %v2124
    %v2257 = vunpack.c.l.b16 %v2125
    %v2258 = vunpack.c.l.b16 %v2126
    %v2259 = vunpack.c.l.b16 %v2127
    %v2260 = vunpack.c.l.b16 %v2128
    %v2261 = vunpack.c.l.b16 %v2129
    %v2262 = vunpack.c.l.b16 %v2130
    %v2263 = vunpack.c.l.b16 %v2131
    %v2264 = vunpack.c.l.b16 %v2132
    %v2265 = vunpack.c.l.b16 %v2133
    %v2266 = vunpack.c.l.b16 %v2134
    %v2267 = vunpack.c.l.b16 %v2135
    %v2268 = vunpack.c.l.b16 %v2136
    %v2269 = vunpack.c.l.b16 %v2137
    %v2270 = vunpack.c.l.b16 %v2138
    %v2271 = vunpack.c.l.b16 %v2139
    %v2272 = vunpack.c.l.b16 %v2140
    %v2273 = vunpack.c.l.b16 %v2141
    %v2274 = vunpack.c.l.b16 %v2142
    %v2275 = vunpack.c.l.b16 %v2143
    %v2276 = vunpack.c.l.b16 %v2144
    %v2277 = vunpack.c.l.b16 %v2145
    %v2278 = vunpack.c.l.b16 %v2146
    %v2279 = vunpack.c.l.b16 %v2147
    %v2280 = vunpack.c.l.b16 %v2148
    %v2281 = vunpack.c.l.b16 %v2149
    %v2282 = vunpack.c.l.b16 %v2150
    %v2283 = vunpack.c.l.b16 %v2151
    %v2284 = vunpack.c.l.b16 %v2152
    %v2285 = vunpack.c.l.b16 %v2153
    %v2286 = vunpack.c.l.b16 %v2154
    %v2287 = vunpack.c.l.b16 %v2155
    %v2288 = vunpack.c.l.b16 %v2156
    %v2289 = vunpack.c.l.b16 %v2157
    %v2290 = vunpack.c.l.b16 %v2158
    %v2291 = vunpack.c.l.b16 %v2159
    %v2292 = vunpack.c.l.b16 %v2160
    %v2293 = vunpack.c.l.b16 %v2161
    %v2294 = vunpack.c.l.b16 %v2162
    %v2295 = vunpack.c.l.b16 %v2163
    %v2296 = vunpack.c.l.b16 %v2164
    %v2297 = vunpack.c.l.b16 %v2165
    %v2298 = vunpack.c.l.b16 %v2166
    %v2299 = vunpack.c.l.b16 %v2167
    %v2300 = vunpack.c.l.b16 %v2168
    %v2301 = vunpack.c.l.b16 %v2169
    %v2302 = vunpack.c.l.b16 %v2170
    %v2303 = vunpack.c.l.b16 %v2171
    %v2304 = vunpack.c.l.b16 %v2172
    %v2305 = vunpack.c.l.b16 %v2173
    %v2306 = vunpack.c.l.b16 %v2174
    %v2307 = vunpack.c.l.b16 %v2175
    %v2308 = vunpack.c.l.b16 %v2176
    %v2309 = vunpack.c.l.b16 %v2177
    %v2310 = vunpack.c.l.b16 %v2178
    %v2311 = vunpack.c.l.b16 %v2179
    %v2312 = vunpack.c.l.b16 %v2180
    %v2313 = vunpack.c.l.b16 %v2181
    %v2314 = vunpack.c.l.b16 %v2182
    %v2315 = vunpack.c.l.b16 %v2183
    %v2316 = vpack.c.b16 %v2253, %v2252
    %v2317 = vpack.c.b16 %v2255, %v2254
    %v2318 = vpack.c.b16 %v2257, %v2256
    %v2319 = vpack.c.b16 %v2259, %v2258
    %v2320 = vpack.c.b16 %v2261, %v2260
    %v2321 = vpack.c.b16 %v2263, %v2262
    %v2322 = vpack.c.b16 %v2265, %v2264
    %v2323 = vpack.c.b16 %v2267, %v2266
    %v2324 = vpack.c.b16 %v2269, %v2268
    %v2325 = vpack.c.b16 %v2271, %v2270
    %v2326 = vpack.c.b16 %v2273, %v2272
    %v2327 = vpack.c.b16 %v2275, %v2274
    %v2328 = vpack.c.b16 %v2277, %v2276
    %v2329 = vpack.c.b16 %v2279, %v2278
    %v2330 = vpack.c.b16 %v2281, %v2280
    %v2331 = vpack.c.b16 %v2283, %v2282
    %v2332 = vpack.c.b16 %v2285, %v2284
    %v2333 = vpack.c.b16 %v2287, %v2286
    %v2334 = vpack.c.b16 %v2289, %v2288
    %v2335 = vpack.c.b16 %v2291, %v2290
    %v2336 = vpack.c.b16 %v2293, %v2292
    %v2337 = vpack.c.b16 %v2295, %v2294
    %v2338 = vpack.c.b16 %v2297, %v2296
    %v2339 = vpack.c.b16 %v2299, %v2298
    %v2340 = vpack.c.b16 %v2301, %v2300
    %v2341 = vpack.c.b16 %v2303, %v2302
    %v2342 = vpack.c.b16 %v2305, %v2304
    %v2343 = vpack.c.b16 %v2307, %v2306
    %v2344 = vpack.c.b16 %v2309, %v2308
    %v2345 = vpack.c.b16 %v2311, %v2310
    %v2346 = vpack.c.b16 %v2313, %v2312
    %v2347 = vpack.c.b16 %v2315, %v2314
    %2380 = vmatpush.bf16.msra.mxu0 %v2323
    %2381 = vmatpush.bf16.msra.mxu0 %v2322
    %2382 = vmatpush.bf16.msra.mxu0 %v2321
    %2383 = vmatpush.bf16.msra.mxu0 %v2320
    %2384 = vmatpush.bf16.msra.mxu0 %v2319
    %2385 = vmatpush.bf16.msra.mxu0 %v2318
    %2386 = vmatpush.bf16.msra.mxu0 %v2317
    %2387 = vmatpush.bf16.msra.mxu0 %v2316
    %2388 = vmatmul.bf16.gmra.mxu0 %v2116
    %v2389 = vpop.f32.mrf.mxu0
    %v2390 = vadd.f32 %v2186, %v2389
    %v2391 = vpop.f32.mrf.mxu0
    %2392 = vdwg.mxu0
    %2393 = vmatpush.bf16.msra.mxu0 %v2331
    %2394 = vmatpush.bf16.msra.mxu0 %v2330
    %2395 = vmatpush.bf16.msra.mxu0 %v2329
    %2396 = vmatpush.bf16.msra.mxu0 %v2328
    %2397 = vmatpush.bf16.msra.mxu0 %v2327
    %2398 = vmatpush.bf16.msra.mxu0 %v2326
    %2399 = vmatpush.bf16.msra.mxu0 %v2325
    %2400 = vmatpush.bf16.msra.mxu0 %v2324
    %2401 = vmatmul.bf16.gmra.mxu0 %v2117
    %v2402 = vpop.f32.mrf.mxu0
    %v2403 = vadd.f32 %v2390, %v2402
    %v2404 = vpop.f32.mrf.mxu0
    %2405 = vdwg.mxu0
    %2406 = vmatpush.bf16.msra.mxu0 %v2339
    %2407 = vmatpush.bf16.msra.mxu0 %v2338
    %2408 = vmatpush.bf16.msra.mxu0 %v2337
    %2409 = vmatpush.bf16.msra.mxu0 %v2336
    %2410 = vmatpush.bf16.msra.mxu0 %v2335
    %2411 = vmatpush.bf16.msra.mxu0 %v2334
    %2412 = vmatpush.bf16.msra.mxu0 %v2333
    %2413 = vmatpush.bf16.msra.mxu0 %v2332
    %2414 = vmatmul.bf16.gmra.mxu0 %v2118
    %v2415 = vpop.f32.mrf.mxu0
    %v2416 = vadd.f32 %v2403, %v2415
    %v2417 = vpop.f32.mrf.mxu0
    %2418 = vdwg.mxu0
    %2419 = vmatpush.bf16.msra.mxu0 %v2347
    %2420 = vmatpush.bf16.msra.mxu0 %v2346
    %2421 = vmatpush.bf16.msra.mxu0 %v2345
    %2422 = vmatpush.bf16.msra.mxu0 %v2344
    %2423 = vmatpush.bf16.msra.mxu0 %v2343
    %2424 = vmatpush.bf16.msra.mxu0 %v2342
    %2425 = vmatpush.bf16.msra.mxu0 %v2341
    %2426 = vmatpush.bf16.msra.mxu0 %v2340
    %2427 = vmatmul.bf16.gmra.mxu0 %v2119
    %v2428 = vpop.f32.mrf.mxu0
    %v2429 = vadd.f32 %v2416, %v2428
    %v2430 = vpop.f32.mrf.mxu0
    %2431 = vdwg.mxu0
    %v2432 = vmax.f32 %v2429, 0.0
    %v2433 = vpack.c.bf16 %v2432, %v2432
    %v2434 = vld [vmem:[#allocation9] sm:$0xf]
    %v2435 = vld [vmem:[#allocation9 + $0x4] sm:$0xf]
    %v2436 = vld [vmem:[#allocation9 + $0x8] sm:$0xf]
    %v2437 = vld [vmem:[#allocation9 + $0xc] sm:$0xf]
    %v2438 = vld [vmem:[#allocation9 + $0x10] sm:$0xf]
    %v2439 = vld [vmem:[#allocation9 + $0x14] sm:$0xf]
    %v2440 = vld [vmem:[#allocation9 + $0x18] sm:$0xf]
    %v2441 = vld [vmem:[#allocation9 + $0x1c] sm:$0xf]
    %v2442 = vld [vmem:[#allocation9 + $0x20] sm:$0xf]
    %v2443 = vld [vmem:[#allocation9 + $0x24] sm:$0xf]
    %v2444 = vld [vmem:[#allocation9 + $0x28] sm:$0xf]
    %v2445 = vld [vmem:[#allocation9 + $0x2c] sm:$0xf]
    %v2446 = vld [vmem:[#allocation9 + $0x30] sm:$0xf]
    %v2447 = vld [vmem:[#allocation9 + $0x34] sm:$0xf]
    %v2448 = vld [vmem:[#allocation9 + $0x38] sm:$0xf]
    %v2449 = vld [vmem:[#allocation9 + $0x3c] sm:$0xf]
    %s2450 = scalar_lea.vmem [#allocation2], 2048
    %v2451 = vld [vmem:[%s2450] sm:$0xff]
    %v2452 = vld [vmem:[%s2450 + $0x8] sm:$0xff]
    %v2453 = vld [vmem:[%s2450 + $0x10] sm:$0xff]
    %v2454 = vld [vmem:[%s2450 + $0x18] sm:$0xff]
    %v2455 = vld [vmem:[%s2450 + $0x20] sm:$0xff]
    %v2456 = vld [vmem:[%s2450 + $0x28] sm:$0xff]
    %v2457 = vld [vmem:[%s2450 + $0x30] sm:$0xff]
    %v2458 = vld [vmem:[%s2450 + $0x38] sm:$0xff]
    %v2459 = vld [vmem:[%s2450 + $0x40] sm:$0xff]
    %v2460 = vld [vmem:[%s2450 + $0x48] sm:$0xff]
    %v2461 = vld [vmem:[%s2450 + $0x50] sm:$0xff]
    %v2462 = vld [vmem:[%s2450 + $0x58] sm:$0xff]
    %v2463 = vld [vmem:[%s2450 + $0x60] sm:$0xff]
    %v2464 = vld [vmem:[%s2450 + $0x68] sm:$0xff]
    %v2465 = vld [vmem:[%s2450 + $0x70] sm:$0xff]
    %v2466 = vld [vmem:[%s2450 + $0x78] sm:$0xff]
    %v2467 = vld [vmem:[%s2450 + $0x80] sm:$0xff]
    %v2468 = vld [vmem:[%s2450 + $0x88] sm:$0xff]
    %v2469 = vld [vmem:[%s2450 + $0x90] sm:$0xff]
    %v2470 = vld [vmem:[%s2450 + $0x98] sm:$0xff]
    %v2471 = vld [vmem:[%s2450 + $0xa0] sm:$0xff]
    %v2472 = vld [vmem:[%s2450 + $0xa8] sm:$0xff]
    %v2473 = vld [vmem:[%s2450 + $0xb0] sm:$0xff]
    %v2474 = vld [vmem:[%s2450 + $0xb8] sm:$0xff]
    %v2475 = vld [vmem:[%s2450 + $0xc0] sm:$0xff]
    %v2476 = vld [vmem:[%s2450 + $0xc8] sm:$0xff]
    %v2477 = vld [vmem:[%s2450 + $0xd0] sm:$0xff]
    %v2478 = vld [vmem:[%s2450 + $0xd8] sm:$0xff]
    %v2479 = vld [vmem:[%s2450 + $0xe0] sm:$0xff]
    %v2480 = vld [vmem:[%s2450 + $0xe8] sm:$0xff]
    %v2481 = vld [vmem:[%s2450 + $0xf0] sm:$0xff]
    %v2482 = vld [vmem:[%s2450 + $0xf8] sm:$0xff]
    %v2483 = vld [vmem:[%s2450 + $0x100] sm:$0xff]
    %v2484 = vld [vmem:[%s2450 + $0x108] sm:$0xff]
    %v2485 = vld [vmem:[%s2450 + $0x110] sm:$0xff]
    %v2486 = vld [vmem:[%s2450 + $0x118] sm:$0xff]
    %v2487 = vld [vmem:[%s2450 + $0x120] sm:$0xff]
    %v2488 = vld [vmem:[%s2450 + $0x128] sm:$0xff]
    %v2489 = vld [vmem:[%s2450 + $0x130] sm:$0xff]
    %v2490 = vld [vmem:[%s2450 + $0x138] sm:$0xff]
    %v2491 = vld [vmem:[%s2450 + $0x140] sm:$0xff]
    %v2492 = vld [vmem:[%s2450 + $0x148] sm:$0xff]
    %v2493 = vld [vmem:[%s2450 + $0x150] sm:$0xff]
    %v2494 = vld [vmem:[%s2450 + $0x158] sm:$0xff]
    %v2495 = vld [vmem:[%s2450 + $0x160] sm:$0xff]
    %v2496 = vld [vmem:[%s2450 + $0x168] sm:$0xff]
    %v2497 = vld [vmem:[%s2450 + $0x170] sm:$0xff]
    %v2498 = vld [vmem:[%s2450 + $0x178] sm:$0xff]
    %v2499 = vld [vmem:[%s2450 + $0x180] sm:$0xff]
    %v2500 = vld [vmem:[%s2450 + $0x188] sm:$0xff]
    %v2501 = vld [vmem:[%s2450 + $0x190] sm:$0xff]
    %v2502 = vld [vmem:[%s2450 + $0x198] sm:$0xff]
    %v2503 = vld [vmem:[%s2450 + $0x1a0] sm:$0xff]
    %v2504 = vld [vmem:[%s2450 + $0x1a8] sm:$0xff]
    %v2505 = vld [vmem:[%s2450 + $0x1b0] sm:$0xff]
    %v2506 = vld [vmem:[%s2450 + $0x1b8] sm:$0xff]
    %v2507 = vld [vmem:[%s2450 + $0x1c0] sm:$0xff]
    %v2508 = vld [vmem:[%s2450 + $0x1c8] sm:$0xff]
    %v2509 = vld [vmem:[%s2450 + $0x1d0] sm:$0xff]
    %v2510 = vld [vmem:[%s2450 + $0x1d8] sm:$0xff]
    %v2511 = vld [vmem:[%s2450 + $0x1e0] sm:$0xff]
    %v2512 = vld [vmem:[%s2450 + $0x1e8] sm:$0xff]
    %v2513 = vld [vmem:[%s2450 + $0x1f0] sm:$0xff]
    %v2514 = vld [vmem:[%s2450 + $0x1f8] sm:$0xff]
    %v2515 = vld [vmem:[%s2450 + $0x200] sm:$0xff]
    %v2516 = vld [vmem:[%s2450 + $0x208] sm:$0xff]
    %v2517 = vld [vmem:[%s2450 + $0x210] sm:$0xff]
    %v2518 = vld [vmem:[%s2450 + $0x218] sm:$0xff]
    %v2519 = vld [vmem:[%s2450 + $0x220] sm:$0xff]
    %v2520 = vld [vmem:[%s2450 + $0x228] sm:$0xff]
    %v2521 = vld [vmem:[%s2450 + $0x230] sm:$0xff]
    %v2522 = vld [vmem:[%s2450 + $0x238] sm:$0xff]
    %v2523 = vld [vmem:[%s2450 + $0x240] sm:$0xff]
    %v2524 = vld [vmem:[%s2450 + $0x248] sm:$0xff]
    %v2525 = vld [vmem:[%s2450 + $0x250] sm:$0xff]
    %v2526 = vld [vmem:[%s2450 + $0x258] sm:$0xff]
    %v2527 = vld [vmem:[%s2450 + $0x260] sm:$0xff]
    %v2528 = vld [vmem:[%s2450 + $0x268] sm:$0xff]
    %v2529 = vld [vmem:[%s2450 + $0x270] sm:$0xff]
    %v2530 = vld [vmem:[%s2450 + $0x278] sm:$0xff]
    %v2531 = vld [vmem:[%s2450 + $0x280] sm:$0xff]
    %v2532 = vld [vmem:[%s2450 + $0x288] sm:$0xff]
    %v2533 = vld [vmem:[%s2450 + $0x290] sm:$0xff]
    %v2534 = vld [vmem:[%s2450 + $0x298] sm:$0xff]
    %v2535 = vld [vmem:[%s2450 + $0x2a0] sm:$0xff]
    %v2536 = vld [vmem:[%s2450 + $0x2a8] sm:$0xff]
    %v2537 = vld [vmem:[%s2450 + $0x2b0] sm:$0xff]
    %v2538 = vld [vmem:[%s2450 + $0x2b8] sm:$0xff]
    %v2539 = vld [vmem:[%s2450 + $0x2c0] sm:$0xff]
    %v2540 = vld [vmem:[%s2450 + $0x2c8] sm:$0xff]
    %v2541 = vld [vmem:[%s2450 + $0x2d0] sm:$0xff]
    %v2542 = vld [vmem:[%s2450 + $0x2d8] sm:$0xff]
    %v2543 = vld [vmem:[%s2450 + $0x2e0] sm:$0xff]
    %v2544 = vld [vmem:[%s2450 + $0x2e8] sm:$0xff]
    %v2545 = vld [vmem:[%s2450 + $0x2f0] sm:$0xff]
    %v2546 = vld [vmem:[%s2450 + $0x2f8] sm:$0xff]
    %v2547 = vld [vmem:[%s2450 + $0x300] sm:$0xff]
    %v2548 = vld [vmem:[%s2450 + $0x308] sm:$0xff]
    %v2549 = vld [vmem:[%s2450 + $0x310] sm:$0xff]
    %v2550 = vld [vmem:[%s2450 + $0x318] sm:$0xff]
    %v2551 = vld [vmem:[%s2450 + $0x320] sm:$0xff]
    %v2552 = vld [vmem:[%s2450 + $0x328] sm:$0xff]
    %v2553 = vld [vmem:[%s2450 + $0x330] sm:$0xff]
    %v2554 = vld [vmem:[%s2450 + $0x338] sm:$0xff]
    %v2555 = vld [vmem:[%s2450 + $0x340] sm:$0xff]
    %v2556 = vld [vmem:[%s2450 + $0x348] sm:$0xff]
    %v2557 = vld [vmem:[%s2450 + $0x350] sm:$0xff]
    %v2558 = vld [vmem:[%s2450 + $0x358] sm:$0xff]
    %v2559 = vld [vmem:[%s2450 + $0x360] sm:$0xff]
    %v2560 = vld [vmem:[%s2450 + $0x368] sm:$0xff]
    %v2561 = vld [vmem:[%s2450 + $0x370] sm:$0xff]
    %v2562 = vld [vmem:[%s2450 + $0x378] sm:$0xff]
    %v2563 = vld [vmem:[%s2450 + $0x380] sm:$0xff]
    %v2564 = vld [vmem:[%s2450 + $0x388] sm:$0xff]
    %v2565 = vld [vmem:[%s2450 + $0x390] sm:$0xff]
    %v2566 = vld [vmem:[%s2450 + $0x398] sm:$0xff]
    %v2567 = vld [vmem:[%s2450 + $0x3a0] sm:$0xff]
    %v2568 = vld [vmem:[%s2450 + $0x3a8] sm:$0xff]
    %v2569 = vld [vmem:[%s2450 + $0x3b0] sm:$0xff]
    %v2570 = vld [vmem:[%s2450 + $0x3b8] sm:$0xff]
    %v2571 = vld [vmem:[%s2450 + $0x3c0] sm:$0xff]
    %v2572 = vld [vmem:[%s2450 + $0x3c8] sm:$0xff]
    %v2573 = vld [vmem:[%s2450 + $0x3d0] sm:$0xff]
    %v2574 = vld [vmem:[%s2450 + $0x3d8] sm:$0xff]
    %v2575 = vld [vmem:[%s2450 + $0x3e0] sm:$0xff]
    %v2576 = vld [vmem:[%s2450 + $0x3e8] sm:$0xff]
    %v2577 = vld [vmem:[%s2450 + $0x3f0] sm:$0xff]
    %v2578 = vld [vmem:[%s2450 + $0x3f8] sm:$0xff]
    %v2579 = vld [vmem:[%s2450 + $0x400] sm:$0xff]
    %v2580 = vld [vmem:[%s2450 + $0x408] sm:$0xff]
    %v2581 = vld [vmem:[%s2450 + $0x410] sm:$0xff]
    %v2582 = vld [vmem:[%s2450 + $0x418] sm:$0xff]
    %v2583 = vld [vmem:[%s2450 + $0x420] sm:$0xff]
    %v2584 = vld [vmem:[%s2450 + $0x428] sm:$0xff]
    %v2585 = vld [vmem:[%s2450 + $0x430] sm:$0xff]
    %v2586 = vld [vmem:[%s2450 + $0x438] sm:$0xff]
    %v2587 = vld [vmem:[%s2450 + $0x440] sm:$0xff]
    %v2588 = vld [vmem:[%s2450 + $0x448] sm:$0xff]
    %v2589 = vld [vmem:[%s2450 + $0x450] sm:$0xff]
    %v2590 = vld [vmem:[%s2450 + $0x458] sm:$0xff]
    %v2591 = vld [vmem:[%s2450 + $0x460] sm:$0xff]
    %v2592 = vld [vmem:[%s2450 + $0x468] sm:$0xff]
    %v2593 = vld [vmem:[%s2450 + $0x470] sm:$0xff]
    %v2594 = vld [vmem:[%s2450 + $0x478] sm:$0xff]
    %v2595 = vld [vmem:[%s2450 + $0x480] sm:$0xff]
    %v2596 = vld [vmem:[%s2450 + $0x488] sm:$0xff]
    %v2597 = vld [vmem:[%s2450 + $0x490] sm:$0xff]
    %v2598 = vld [vmem:[%s2450 + $0x498] sm:$0xff]
    %v2599 = vld [vmem:[%s2450 + $0x4a0] sm:$0xff]
    %v2600 = vld [vmem:[%s2450 + $0x4a8] sm:$0xff]
    %v2601 = vld [vmem:[%s2450 + $0x4b0] sm:$0xff]
    %v2602 = vld [vmem:[%s2450 + $0x4b8] sm:$0xff]
    %v2603 = vld [vmem:[%s2450 + $0x4c0] sm:$0xff]
    %v2604 = vld [vmem:[%s2450 + $0x4c8] sm:$0xff]
    %v2605 = vld [vmem:[%s2450 + $0x4d0] sm:$0xff]
    %v2606 = vld [vmem:[%s2450 + $0x4d8] sm:$0xff]
    %v2607 = vld [vmem:[%s2450 + $0x4e0] sm:$0xff]
    %v2608 = vld [vmem:[%s2450 + $0x4e8] sm:$0xff]
    %v2609 = vld [vmem:[%s2450 + $0x4f0] sm:$0xff]
    %v2610 = vld [vmem:[%s2450 + $0x4f8] sm:$0xff]
    %v2611 = vld [vmem:[%s2450 + $0x500] sm:$0xff]
    %v2612 = vld [vmem:[%s2450 + $0x508] sm:$0xff]
    %v2613 = vld [vmem:[%s2450 + $0x510] sm:$0xff]
    %v2614 = vld [vmem:[%s2450 + $0x518] sm:$0xff]
    %v2615 = vld [vmem:[%s2450 + $0x520] sm:$0xff]
    %v2616 = vld [vmem:[%s2450 + $0x528] sm:$0xff]
    %v2617 = vld [vmem:[%s2450 + $0x530] sm:$0xff]
    %v2618 = vld [vmem:[%s2450 + $0x538] sm:$0xff]
    %v2619 = vld [vmem:[%s2450 + $0x540] sm:$0xff]
    %v2620 = vld [vmem:[%s2450 + $0x548] sm:$0xff]
    %v2621 = vld [vmem:[%s2450 + $0x550] sm:$0xff]
    %v2622 = vld [vmem:[%s2450 + $0x558] sm:$0xff]
    %v2623 = vld [vmem:[%s2450 + $0x560] sm:$0xff]
    %v2624 = vld [vmem:[%s2450 + $0x568] sm:$0xff]
    %v2625 = vld [vmem:[%s2450 + $0x570] sm:$0xff]
    %v2626 = vld [vmem:[%s2450 + $0x578] sm:$0xff]
    %v2627 = vld [vmem:[%s2450 + $0x580] sm:$0xff]
    %v2628 = vld [vmem:[%s2450 + $0x588] sm:$0xff]
    %v2629 = vld [vmem:[%s2450 + $0x590] sm:$0xff]
    %v2630 = vld [vmem:[%s2450 + $0x598] sm:$0xff]
    %v2631 = vld [vmem:[%s2450 + $0x5a0] sm:$0xff]
    %v2632 = vld [vmem:[%s2450 + $0x5a8] sm:$0xff]
    %v2633 = vld [vmem:[%s2450 + $0x5b0] sm:$0xff]
    %v2634 = vld [vmem:[%s2450 + $0x5b8] sm:$0xff]
    %v2635 = vld [vmem:[%s2450 + $0x5c0] sm:$0xff]
    %v2636 = vld [vmem:[%s2450 + $0x5c8] sm:$0xff]
    %v2637 = vld [vmem:[%s2450 + $0x5d0] sm:$0xff]
    %v2638 = vld [vmem:[%s2450 + $0x5d8] sm:$0xff]
    %v2639 = vld [vmem:[%s2450 + $0x5e0] sm:$0xff]
    %v2640 = vld [vmem:[%s2450 + $0x5e8] sm:$0xff]
    %v2641 = vld [vmem:[%s2450 + $0x5f0] sm:$0xff]
    %v2642 = vld [vmem:[%s2450 + $0x5f8] sm:$0xff]
    %v2643 = vld [vmem:[%s2450 + $0x600] sm:$0xff]
    %v2644 = vld [vmem:[%s2450 + $0x608] sm:$0xff]
    %v2645 = vld [vmem:[%s2450 + $0x610] sm:$0xff]
    %v2646 = vld [vmem:[%s2450 + $0x618] sm:$0xff]
    %v2647 = vld [vmem:[%s2450 + $0x620] sm:$0xff]
    %v2648 = vld [vmem:[%s2450 + $0x628] sm:$0xff]
    %v2649 = vld [vmem:[%s2450 + $0x630] sm:$0xff]
    %v2650 = vld [vmem:[%s2450 + $0x638] sm:$0xff]
    %v2651 = vld [vmem:[%s2450 + $0x640] sm:$0xff]
    %v2652 = vld [vmem:[%s2450 + $0x648] sm:$0xff]
    %v2653 = vld [vmem:[%s2450 + $0x650] sm:$0xff]
    %v2654 = vld [vmem:[%s2450 + $0x658] sm:$0xff]
    %v2655 = vld [vmem:[%s2450 + $0x660] sm:$0xff]
    %v2656 = vld [vmem:[%s2450 + $0x668] sm:$0xff]
    %v2657 = vld [vmem:[%s2450 + $0x670] sm:$0xff]
    %v2658 = vld [vmem:[%s2450 + $0x678] sm:$0xff]
    %v2659 = vld [vmem:[%s2450 + $0x680] sm:$0xff]
    %v2660 = vld [vmem:[%s2450 + $0x688] sm:$0xff]
    %v2661 = vld [vmem:[%s2450 + $0x690] sm:$0xff]
    %v2662 = vld [vmem:[%s2450 + $0x698] sm:$0xff]
    %v2663 = vld [vmem:[%s2450 + $0x6a0] sm:$0xff]
    %v2664 = vld [vmem:[%s2450 + $0x6a8] sm:$0xff]
    %v2665 = vld [vmem:[%s2450 + $0x6b0] sm:$0xff]
    %v2666 = vld [vmem:[%s2450 + $0x6b8] sm:$0xff]
    %v2667 = vld [vmem:[%s2450 + $0x6c0] sm:$0xff]
    %v2668 = vld [vmem:[%s2450 + $0x6c8] sm:$0xff]
    %v2669 = vld [vmem:[%s2450 + $0x6d0] sm:$0xff]
    %v2670 = vld [vmem:[%s2450 + $0x6d8] sm:$0xff]
    %v2671 = vld [vmem:[%s2450 + $0x6e0] sm:$0xff]
    %v2672 = vld [vmem:[%s2450 + $0x6e8] sm:$0xff]
    %v2673 = vld [vmem:[%s2450 + $0x6f0] sm:$0xff]
    %v2674 = vld [vmem:[%s2450 + $0x6f8] sm:$0xff]
    %v2675 = vld [vmem:[%s2450 + $0x700] sm:$0xff]
    %v2676 = vld [vmem:[%s2450 + $0x708] sm:$0xff]
    %v2677 = vld [vmem:[%s2450 + $0x710] sm:$0xff]
    %v2678 = vld [vmem:[%s2450 + $0x718] sm:$0xff]
    %v2679 = vld [vmem:[%s2450 + $0x720] sm:$0xff]
    %v2680 = vld [vmem:[%s2450 + $0x728] sm:$0xff]
    %v2681 = vld [vmem:[%s2450 + $0x730] sm:$0xff]
    %v2682 = vld [vmem:[%s2450 + $0x738] sm:$0xff]
    %v2683 = vld [vmem:[%s2450 + $0x740] sm:$0xff]
    %v2684 = vld [vmem:[%s2450 + $0x748] sm:$0xff]
    %v2685 = vld [vmem:[%s2450 + $0x750] sm:$0xff]
    %v2686 = vld [vmem:[%s2450 + $0x758] sm:$0xff]
    %v2687 = vld [vmem:[%s2450 + $0x760] sm:$0xff]
    %v2688 = vld [vmem:[%s2450 + $0x768] sm:$0xff]
    %v2689 = vld [vmem:[%s2450 + $0x770] sm:$0xff]
    %v2690 = vld [vmem:[%s2450 + $0x778] sm:$0xff]
    %v2691 = vld [vmem:[%s2450 + $0x780] sm:$0xff]
    %v2692 = vld [vmem:[%s2450 + $0x788] sm:$0xff]
    %v2693 = vld [vmem:[%s2450 + $0x790] sm:$0xff]
    %v2694 = vld [vmem:[%s2450 + $0x798] sm:$0xff]
    %v2695 = vld [vmem:[%s2450 + $0x7a0] sm:$0xff]
    %v2696 = vld [vmem:[%s2450 + $0x7a8] sm:$0xff]
    %v2697 = vld [vmem:[%s2450 + $0x7b0] sm:$0xff]
    %v2698 = vld [vmem:[%s2450 + $0x7b8] sm:$0xff]
    %v2699 = vld [vmem:[%s2450 + $0x7c0] sm:$0xff]
    %v2700 = vld [vmem:[%s2450 + $0x7c8] sm:$0xff]
    %v2701 = vld [vmem:[%s2450 + $0x7d0] sm:$0xff]
    %v2702 = vld [vmem:[%s2450 + $0x7d8] sm:$0xff]
    %v2703 = vld [vmem:[%s2450 + $0x7e0] sm:$0xff]
    %v2704 = vld [vmem:[%s2450 + $0x7e8] sm:$0xff]
    %v2705 = vld [vmem:[%s2450 + $0x7f0] sm:$0xff]
    %v2706 = vld [vmem:[%s2450 + $0x7f8] sm:$0xff]
    %s2707 = scalar_lea.vmem [#allocation4], 4
    %v2708 = vld [vmem:[%s2707] sm:$0xf]
    %v2710 = vperm.slane %v2708, 0
    %v2711 = vperm.slane %v2708, 1
    %v2712 = vperm.slane %v2708, 2
    %v2713 = vperm.slane %v2708, 3
    %v2974 = vunpack.c.l.b16 %v2451
    %v2975 = vunpack.c.h.b16 %v2451
    %v2976 = vunpack.c.l.b16 %v2452
    %v2977 = vunpack.c.h.b16 %v2452
    %v2978 = vunpack.c.l.b16 %v2453
    %v2979 = vunpack.c.h.b16 %v2453
    %v2980 = vunpack.c.l.b16 %v2454
    %v2981 = vunpack.c.h.b16 %v2454
    %v2982 = vunpack.c.l.b16 %v2455
    %v2983 = vunpack.c.h.b16 %v2455
    %v2984 = vunpack.c.l.b16 %v2456
    %v2985 = vunpack.c.h.b16 %v2456
    %v2986 = vunpack.c.l.b16 %v2457
    %v2987 = vunpack.c.h.b16 %v2457
    %v2988 = vunpack.c.l.b16 %v2458
    %v2989 = vunpack.c.h.b16 %v2458
    %v2990 = vunpack.c.l.b16 %v2459
    %v2991 = vunpack.c.h.b16 %v2459
    %v2992 = vunpack.c.l.b16 %v2460
    %v2993 = vunpack.c.h.b16 %v2460
    %v2994 = vunpack.c.l.b16 %v2461
    %v2995 = vunpack.c.h.b16 %v2461
    %v2996 = vunpack.c.l.b16 %v2462
    %v2997 = vunpack.c.h.b16 %v2462
    %v2998 = vunpack.c.l.b16 %v2463
    %v2999 = vunpack.c.h.b16 %v2463
    %v3000 = vunpack.c.l.b16 %v2464
    %v3001 = vunpack.c.h.b16 %v2464
    %v3002 = vunpack.c.l.b16 %v2465
    %v3003 = vunpack.c.h.b16 %v2465
    %v3004 = vunpack.c.l.b16 %v2466
    %v3005 = vunpack.c.h.b16 %v2466
    %v3006 = vunpack.c.l.b16 %v2467
    %v3007 = vunpack.c.h.b16 %v2467
    %v3008 = vunpack.c.l.b16 %v2468
    %v3009 = vunpack.c.h.b16 %v2468
    %v3010 = vunpack.c.l.b16 %v2469
    %v3011 = vunpack.c.h.b16 %v2469
    %v3012 = vunpack.c.l.b16 %v2470
    %v3013 = vunpack.c.h.b16 %v2470
    %v3014 = vunpack.c.l.b16 %v2471
    %v3015 = vunpack.c.h.b16 %v2471
    %v3016 = vunpack.c.l.b16 %v2472
    %v3017 = vunpack.c.h.b16 %v2472
    %v3018 = vunpack.c.l.b16 %v2473
    %v3019 = vunpack.c.h.b16 %v2473
    %v3020 = vunpack.c.l.b16 %v2474
    %v3021 = vunpack.c.h.b16 %v2474
    %v3022 = vunpack.c.l.b16 %v2475
    %v3023 = vunpack.c.h.b16 %v2475
    %v3024 = vunpack.c.l.b16 %v2476
    %v3025 = vunpack.c.h.b16 %v2476
    %v3026 = vunpack.c.l.b16 %v2477
    %v3027 = vunpack.c.h.b16 %v2477
    %v3028 = vunpack.c.l.b16 %v2478
    %v3029 = vunpack.c.h.b16 %v2478
    %v3030 = vunpack.c.l.b16 %v2479
    %v3031 = vunpack.c.h.b16 %v2479
    %v3032 = vunpack.c.l.b16 %v2480
    %v3033 = vunpack.c.h.b16 %v2480
    %v3034 = vunpack.c.l.b16 %v2481
    %v3035 = vunpack.c.h.b16 %v2481
    %v3036 = vunpack.c.l.b16 %v2482
    %v3037 = vunpack.c.h.b16 %v2482
    %v3038 = vunpack.c.l.b16 %v2483
    %v3039 = vunpack.c.h.b16 %v2483
    %v3040 = vunpack.c.l.b16 %v2484
    %v3041 = vunpack.c.h.b16 %v2484
    %v3042 = vunpack.c.l.b16 %v2485
    %v3043 = vunpack.c.h.b16 %v2485
    %v3044 = vunpack.c.l.b16 %v2486
    %v3045 = vunpack.c.h.b16 %v2486
    %v3046 = vunpack.c.l.b16 %v2487
    %v3047 = vunpack.c.h.b16 %v2487
    %v3048 = vunpack.c.l.b16 %v2488
    %v3049 = vunpack.c.h.b16 %v2488
    %v3050 = vunpack.c.l.b16 %v2489
    %v3051 = vunpack.c.h.b16 %v2489
    %v3052 = vunpack.c.l.b16 %v2490
    %v3053 = vunpack.c.h.b16 %v2490
    %v3054 = vunpack.c.l.b16 %v2491
    %v3055 = vunpack.c.h.b16 %v2491
    %v3056 = vunpack.c.l.b16 %v2492
    %v3057 = vunpack.c.h.b16 %v2492
    %v3058 = vunpack.c.l.b16 %v2493
    %v3059 = vunpack.c.h.b16 %v2493
    %v3060 = vunpack.c.l.b16 %v2494
    %v3061 = vunpack.c.h.b16 %v2494
    %v3062 = vunpack.c.l.b16 %v2495
    %v3063 = vunpack.c.h.b16 %v2495
    %v3064 = vunpack.c.l.b16 %v2496
    %v3065 = vunpack.c.h.b16 %v2496
    %v3066 = vunpack.c.l.b16 %v2497
    %v3067 = vunpack.c.h.b16 %v2497
    %v3068 = vunpack.c.l.b16 %v2498
    %v3069 = vunpack.c.h.b16 %v2498
    %v3070 = vunpack.c.l.b16 %v2499
    %v3071 = vunpack.c.h.b16 %v2499
    %v3072 = vunpack.c.l.b16 %v2500
    %v3073 = vunpack.c.h.b16 %v2500
    %v3074 = vunpack.c.l.b16 %v2501
    %v3075 = vunpack.c.h.b16 %v2501
    %v3076 = vunpack.c.l.b16 %v2502
    %v3077 = vunpack.c.h.b16 %v2502
    %v3078 = vunpack.c.l.b16 %v2503
    %v3079 = vunpack.c.h.b16 %v2503
    %v3080 = vunpack.c.l.b16 %v2504
    %v3081 = vunpack.c.h.b16 %v2504
    %v3082 = vunpack.c.l.b16 %v2505
    %v3083 = vunpack.c.h.b16 %v2505
    %v3084 = vunpack.c.l.b16 %v2506
    %v3085 = vunpack.c.h.b16 %v2506
    %v3086 = vunpack.c.l.b16 %v2507
    %v3087 = vunpack.c.h.b16 %v2507
    %v3088 = vunpack.c.l.b16 %v2508
    %v3089 = vunpack.c.h.b16 %v2508
    %v3090 = vunpack.c.l.b16 %v2509
    %v3091 = vunpack.c.h.b16 %v2509
    %v3092 = vunpack.c.l.b16 %v2510
    %v3093 = vunpack.c.h.b16 %v2510
    %v3094 = vunpack.c.l.b16 %v2511
    %v3095 = vunpack.c.h.b16 %v2511
    %v3096 = vunpack.c.l.b16 %v2512
    %v3097 = vunpack.c.h.b16 %v2512
    %v3098 = vunpack.c.l.b16 %v2513
    %v3099 = vunpack.c.h.b16 %v2513
    %v3100 = vunpack.c.l.b16 %v2514
    %v3101 = vunpack.c.h.b16 %v2514
    %v3102 = vunpack.c.l.b16 %v2515
    %v3103 = vunpack.c.h.b16 %v2515
    %v3104 = vunpack.c.l.b16 %v2516
    %v3105 = vunpack.c.h.b16 %v2516
    %v3106 = vunpack.c.l.b16 %v2517
    %v3107 = vunpack.c.h.b16 %v2517
    %v3108 = vunpack.c.l.b16 %v2518
    %v3109 = vunpack.c.h.b16 %v2518
    %v3110 = vunpack.c.l.b16 %v2519
    %v3111 = vunpack.c.h.b16 %v2519
    %v3112 = vunpack.c.l.b16 %v2520
    %v3113 = vunpack.c.h.b16 %v2520
    %v3114 = vunpack.c.l.b16 %v2521
    %v3115 = vunpack.c.h.b16 %v2521
    %v3116 = vunpack.c.l.b16 %v2522
    %v3117 = vunpack.c.h.b16 %v2522
    %v3118 = vunpack.c.l.b16 %v2523
    %v3119 = vunpack.c.h.b16 %v2523
    %v3120 = vunpack.c.l.b16 %v2524
    %v3121 = vunpack.c.h.b16 %v2524
    %v3122 = vunpack.c.l.b16 %v2525
    %v3123 = vunpack.c.h.b16 %v2525
    %v3124 = vunpack.c.l.b16 %v2526
    %v3125 = vunpack.c.h.b16 %v2526
    %v3126 = vunpack.c.l.b16 %v2527
    %v3127 = vunpack.c.h.b16 %v2527
    %v3128 = vunpack.c.l.b16 %v2528
    %v3129 = vunpack.c.h.b16 %v2528
    %v3130 = vunpack.c.l.b16 %v2529
    %v3131 = vunpack.c.h.b16 %v2529
    %v3132 = vunpack.c.l.b16 %v2530
    %v3133 = vunpack.c.h.b16 %v2530
    %v3134 = vunpack.c.l.b16 %v2531
    %v3135 = vunpack.c.h.b16 %v2531
    %v3136 = vunpack.c.l.b16 %v2532
    %v3137 = vunpack.c.h.b16 %v2532
    %v3138 = vunpack.c.l.b16 %v2533
    %v3139 = vunpack.c.h.b16 %v2533
    %v3140 = vunpack.c.l.b16 %v2534
    %v3141 = vunpack.c.h.b16 %v2534
    %v3142 = vunpack.c.l.b16 %v2535
    %v3143 = vunpack.c.h.b16 %v2535
    %v3144 = vunpack.c.l.b16 %v2536
    %v3145 = vunpack.c.h.b16 %v2536
    %v3146 = vunpack.c.l.b16 %v2537
    %v3147 = vunpack.c.h.b16 %v2537
    %v3148 = vunpack.c.l.b16 %v2538
    %v3149 = vunpack.c.h.b16 %v2538
    %v3150 = vunpack.c.l.b16 %v2539
    %v3151 = vunpack.c.h.b16 %v2539
    %v3152 = vunpack.c.l.b16 %v2540
    %v3153 = vunpack.c.h.b16 %v2540
    %v3154 = vunpack.c.l.b16 %v2541
    %v3155 = vunpack.c.h.b16 %v2541
    %v3156 = vunpack.c.l.b16 %v2542
    %v3157 = vunpack.c.h.b16 %v2542
    %v3158 = vunpack.c.l.b16 %v2543
    %v3159 = vunpack.c.h.b16 %v2543
    %v3160 = vunpack.c.l.b16 %v2544
    %v3161 = vunpack.c.h.b16 %v2544
    %v3162 = vunpack.c.l.b16 %v2545
    %v3163 = vunpack.c.h.b16 %v2545
    %v3164 = vunpack.c.l.b16 %v2546
    %v3165 = vunpack.c.h.b16 %v2546
    %v3166 = vunpack.c.l.b16 %v2547
    %v3167 = vunpack.c.h.b16 %v2547
    %v3168 = vunpack.c.l.b16 %v2548
    %v3169 = vunpack.c.h.b16 %v2548
    %v3170 = vunpack.c.l.b16 %v2549
    %v3171 = vunpack.c.h.b16 %v2549
    %v3172 = vunpack.c.l.b16 %v2550
    %v3173 = vunpack.c.h.b16 %v2550
    %v3174 = vunpack.c.l.b16 %v2551
    %v3175 = vunpack.c.h.b16 %v2551
    %v3176 = vunpack.c.l.b16 %v2552
    %v3177 = vunpack.c.h.b16 %v2552
    %v3178 = vunpack.c.l.b16 %v2553
    %v3179 = vunpack.c.h.b16 %v2553
    %v3180 = vunpack.c.l.b16 %v2554
    %v3181 = vunpack.c.h.b16 %v2554
    %v3182 = vunpack.c.l.b16 %v2555
    %v3183 = vunpack.c.h.b16 %v2555
    %v3184 = vunpack.c.l.b16 %v2556
    %v3185 = vunpack.c.h.b16 %v2556
    %v3186 = vunpack.c.l.b16 %v2557
    %v3187 = vunpack.c.h.b16 %v2557
    %v3188 = vunpack.c.l.b16 %v2558
    %v3189 = vunpack.c.h.b16 %v2558
    %v3190 = vunpack.c.l.b16 %v2559
    %v3191 = vunpack.c.h.b16 %v2559
    %v3192 = vunpack.c.l.b16 %v2560
    %v3193 = vunpack.c.h.b16 %v2560
    %v3194 = vunpack.c.l.b16 %v2561
    %v3195 = vunpack.c.h.b16 %v2561
    %v3196 = vunpack.c.l.b16 %v2562
    %v3197 = vunpack.c.h.b16 %v2562
    %v3198 = vunpack.c.l.b16 %v2563
    %v3199 = vunpack.c.h.b16 %v2563
    %v3200 = vunpack.c.l.b16 %v2564
    %v3201 = vunpack.c.h.b16 %v2564
    %v3202 = vunpack.c.l.b16 %v2565
    %v3203 = vunpack.c.h.b16 %v2565
    %v3204 = vunpack.c.l.b16 %v2566
    %v3205 = vunpack.c.h.b16 %v2566
    %v3206 = vunpack.c.l.b16 %v2567
    %v3207 = vunpack.c.h.b16 %v2567
    %v3208 = vunpack.c.l.b16 %v2568
    %v3209 = vunpack.c.h.b16 %v2568
    %v3210 = vunpack.c.l.b16 %v2569
    %v3211 = vunpack.c.h.b16 %v2569
    %v3212 = vunpack.c.l.b16 %v2570
    %v3213 = vunpack.c.h.b16 %v2570
    %v3214 = vunpack.c.l.b16 %v2571
    %v3215 = vunpack.c.h.b16 %v2571
    %v3216 = vunpack.c.l.b16 %v2572
    %v3217 = vunpack.c.h.b16 %v2572
    %v3218 = vunpack.c.l.b16 %v2573
    %v3219 = vunpack.c.h.b16 %v2573
    %v3220 = vunpack.c.l.b16 %v2574
    %v3221 = vunpack.c.h.b16 %v2574
    %v3222 = vunpack.c.l.b16 %v2575
    %v3223 = vunpack.c.h.b16 %v2575
    %v3224 = vunpack.c.l.b16 %v2576
    %v3225 = vunpack.c.h.b16 %v2576
    %v3226 = vunpack.c.l.b16 %v2577
    %v3227 = vunpack.c.h.b16 %v2577
    %v3228 = vunpack.c.l.b16 %v2578
    %v3229 = vunpack.c.h.b16 %v2578
    %v3230 = vunpack.c.l.b16 %v2579
    %v3231 = vunpack.c.h.b16 %v2579
    %v3232 = vunpack.c.l.b16 %v2580
    %v3233 = vunpack.c.h.b16 %v2580
    %v3234 = vunpack.c.l.b16 %v2581
    %v3235 = vunpack.c.h.b16 %v2581
    %v3236 = vunpack.c.l.b16 %v2582
    %v3237 = vunpack.c.h.b16 %v2582
    %v3238 = vunpack.c.l.b16 %v2583
    %v3239 = vunpack.c.h.b16 %v2583
    %v3240 = vunpack.c.l.b16 %v2584
    %v3241 = vunpack.c.h.b16 %v2584
    %v3242 = vunpack.c.l.b16 %v2585
    %v3243 = vunpack.c.h.b16 %v2585
    %v3244 = vunpack.c.l.b16 %v2586
    %v3245 = vunpack.c.h.b16 %v2586
    %v3246 = vunpack.c.l.b16 %v2587
    %v3247 = vunpack.c.h.b16 %v2587
    %v3248 = vunpack.c.l.b16 %v2588
    %v3249 = vunpack.c.h.b16 %v2588
    %v3250 = vunpack.c.l.b16 %v2589
    %v3251 = vunpack.c.h.b16 %v2589
    %v3252 = vunpack.c.l.b16 %v2590
    %v3253 = vunpack.c.h.b16 %v2590
    %v3254 = vunpack.c.l.b16 %v2591
    %v3255 = vunpack.c.h.b16 %v2591
    %v3256 = vunpack.c.l.b16 %v2592
    %v3257 = vunpack.c.h.b16 %v2592
    %v3258 = vunpack.c.l.b16 %v2593
    %v3259 = vunpack.c.h.b16 %v2593
    %v3260 = vunpack.c.l.b16 %v2594
    %v3261 = vunpack.c.h.b16 %v2594
    %v3262 = vunpack.c.l.b16 %v2595
    %v3263 = vunpack.c.h.b16 %v2595
    %v3264 = vunpack.c.l.b16 %v2596
    %v3265 = vunpack.c.h.b16 %v2596
    %v3266 = vunpack.c.l.b16 %v2597
    %v3267 = vunpack.c.h.b16 %v2597
    %v3268 = vunpack.c.l.b16 %v2598
    %v3269 = vunpack.c.h.b16 %v2598
    %v3270 = vunpack.c.l.b16 %v2599
    %v3271 = vunpack.c.h.b16 %v2599
    %v3272 = vunpack.c.l.b16 %v2600
    %v3273 = vunpack.c.h.b16 %v2600
    %v3274 = vunpack.c.l.b16 %v2601
    %v3275 = vunpack.c.h.b16 %v2601
    %v3276 = vunpack.c.l.b16 %v2602
    %v3277 = vunpack.c.h.b16 %v2602
    %v3278 = vunpack.c.l.b16 %v2603
    %v3279 = vunpack.c.h.b16 %v2603
    %v3280 = vunpack.c.l.b16 %v2604
    %v3281 = vunpack.c.h.b16 %v2604
    %v3282 = vunpack.c.l.b16 %v2605
    %v3283 = vunpack.c.h.b16 %v2605
    %v3284 = vunpack.c.l.b16 %v2606
    %v3285 = vunpack.c.h.b16 %v2606
    %v3286 = vunpack.c.l.b16 %v2607
    %v3287 = vunpack.c.h.b16 %v2607
    %v3288 = vunpack.c.l.b16 %v2608
    %v3289 = vunpack.c.h.b16 %v2608
    %v3290 = vunpack.c.l.b16 %v2609
    %v3291 = vunpack.c.h.b16 %v2609
    %v3292 = vunpack.c.l.b16 %v2610
    %v3293 = vunpack.c.h.b16 %v2610
    %v3294 = vunpack.c.l.b16 %v2611
    %v3295 = vunpack.c.h.b16 %v2611
    %v3296 = vunpack.c.l.b16 %v2612
    %v3297 = vunpack.c.h.b16 %v2612
    %v3298 = vunpack.c.l.b16 %v2613
    %v3299 = vunpack.c.h.b16 %v2613
    %v3300 = vunpack.c.l.b16 %v2614
    %v3301 = vunpack.c.h.b16 %v2614
    %v3302 = vunpack.c.l.b16 %v2615
    %v3303 = vunpack.c.h.b16 %v2615
    %v3304 = vunpack.c.l.b16 %v2616
    %v3305 = vunpack.c.h.b16 %v2616
    %v3306 = vunpack.c.l.b16 %v2617
    %v3307 = vunpack.c.h.b16 %v2617
    %v3308 = vunpack.c.l.b16 %v2618
    %v3309 = vunpack.c.h.b16 %v2618
    %v3310 = vunpack.c.l.b16 %v2619
    %v3311 = vunpack.c.h.b16 %v2619
    %v3312 = vunpack.c.l.b16 %v2620
    %v3313 = vunpack.c.h.b16 %v2620
    %v3314 = vunpack.c.l.b16 %v2621
    %v3315 = vunpack.c.h.b16 %v2621
    %v3316 = vunpack.c.l.b16 %v2622
    %v3317 = vunpack.c.h.b16 %v2622
    %v3318 = vunpack.c.l.b16 %v2623
    %v3319 = vunpack.c.h.b16 %v2623
    %v3320 = vunpack.c.l.b16 %v2624
    %v3321 = vunpack.c.h.b16 %v2624
    %v3322 = vunpack.c.l.b16 %v2625
    %v3323 = vunpack.c.h.b16 %v2625
    %v3324 = vunpack.c.l.b16 %v2626
    %v3325 = vunpack.c.h.b16 %v2626
    %v3326 = vunpack.c.l.b16 %v2627
    %v3327 = vunpack.c.h.b16 %v2627
    %v3328 = vunpack.c.l.b16 %v2628
    %v3329 = vunpack.c.h.b16 %v2628
    %v3330 = vunpack.c.l.b16 %v2629
    %v3331 = vunpack.c.h.b16 %v2629
    %v3332 = vunpack.c.l.b16 %v2630
    %v3333 = vunpack.c.h.b16 %v2630
    %v3334 = vunpack.c.l.b16 %v2631
    %v3335 = vunpack.c.h.b16 %v2631
    %v3336 = vunpack.c.l.b16 %v2632
    %v3337 = vunpack.c.h.b16 %v2632
    %v3338 = vunpack.c.l.b16 %v2633
    %v3339 = vunpack.c.h.b16 %v2633
    %v3340 = vunpack.c.l.b16 %v2634
    %v3341 = vunpack.c.h.b16 %v2634
    %v3342 = vunpack.c.l.b16 %v2635
    %v3343 = vunpack.c.h.b16 %v2635
    %v3344 = vunpack.c.l.b16 %v2636
    %v3345 = vunpack.c.h.b16 %v2636
    %v3346 = vunpack.c.l.b16 %v2637
    %v3347 = vunpack.c.h.b16 %v2637
    %v3348 = vunpack.c.l.b16 %v2638
    %v3349 = vunpack.c.h.b16 %v2638
    %v3350 = vunpack.c.l.b16 %v2639
    %v3351 = vunpack.c.h.b16 %v2639
    %v3352 = vunpack.c.l.b16 %v2640
    %v3353 = vunpack.c.h.b16 %v2640
    %v3354 = vunpack.c.l.b16 %v2641
    %v3355 = vunpack.c.h.b16 %v2641
    %v3356 = vunpack.c.l.b16 %v2642
    %v3357 = vunpack.c.h.b16 %v2642
    %v3358 = vunpack.c.l.b16 %v2643
    %v3359 = vunpack.c.h.b16 %v2643
    %v3360 = vunpack.c.l.b16 %v2644
    %v3361 = vunpack.c.h.b16 %v2644
    %v3362 = vunpack.c.l.b16 %v2645
    %v3363 = vunpack.c.h.b16 %v2645
    %v3364 = vunpack.c.l.b16 %v2646
    %v3365 = vunpack.c.h.b16 %v2646
    %v3366 = vunpack.c.l.b16 %v2647
    %v3367 = vunpack.c.h.b16 %v2647
    %v3368 = vunpack.c.l.b16 %v2648
    %v3369 = vunpack.c.h.b16 %v2648
    %v3370 = vunpack.c.l.b16 %v2649
    %v3371 = vunpack.c.h.b16 %v2649
    %v3372 = vunpack.c.l.b16 %v2650
    %v3373 = vunpack.c.h.b16 %v2650
    %v3374 = vunpack.c.l.b16 %v2651
    %v3375 = vunpack.c.h.b16 %v2651
    %v3376 = vunpack.c.l.b16 %v2652
    %v3377 = vunpack.c.h.b16 %v2652
    %v3378 = vunpack.c.l.b16 %v2653
    %v3379 = vunpack.c.h.b16 %v2653
    %v3380 = vunpack.c.l.b16 %v2654
    %v3381 = vunpack.c.h.b16 %v2654
    %v3382 = vunpack.c.l.b16 %v2655
    %v3383 = vunpack.c.h.b16 %v2655
    %v3384 = vunpack.c.l.b16 %v2656
    %v3385 = vunpack.c.h.b16 %v2656
    %v3386 = vunpack.c.l.b16 %v2657
    %v3387 = vunpack.c.h.b16 %v2657
    %v3388 = vunpack.c.l.b16 %v2658
    %v3389 = vunpack.c.h.b16 %v2658
    %v3390 = vunpack.c.l.b16 %v2659
    %v3391 = vunpack.c.h.b16 %v2659
    %v3392 = vunpack.c.l.b16 %v2660
    %v3393 = vunpack.c.h.b16 %v2660
    %v3394 = vunpack.c.l.b16 %v2661
    %v3395 = vunpack.c.h.b16 %v2661
    %v3396 = vunpack.c.l.b16 %v2662
    %v3397 = vunpack.c.h.b16 %v2662
    %v3398 = vunpack.c.l.b16 %v2663
    %v3399 = vunpack.c.h.b16 %v2663
    %v3400 = vunpack.c.l.b16 %v2664
    %v3401 = vunpack.c.h.b16 %v2664
    %v3402 = vunpack.c.l.b16 %v2665
    %v3403 = vunpack.c.h.b16 %v2665
    %v3404 = vunpack.c.l.b16 %v2666
    %v3405 = vunpack.c.h.b16 %v2666
    %v3406 = vunpack.c.l.b16 %v2667
    %v3407 = vunpack.c.h.b16 %v2667
    %v3408 = vunpack.c.l.b16 %v2668
    %v3409 = vunpack.c.h.b16 %v2668
    %v3410 = vunpack.c.l.b16 %v2669
    %v3411 = vunpack.c.h.b16 %v2669
    %v3412 = vunpack.c.l.b16 %v2670
    %v3413 = vunpack.c.h.b16 %v2670
    %v3414 = vunpack.c.l.b16 %v2671
    %v3415 = vunpack.c.h.b16 %v2671
    %v3416 = vunpack.c.l.b16 %v2672
    %v3417 = vunpack.c.h.b16 %v2672
    %v3418 = vunpack.c.l.b16 %v2673
    %v3419 = vunpack.c.h.b16 %v2673
    %v3420 = vunpack.c.l.b16 %v2674
    %v3421 = vunpack.c.h.b16 %v2674
    %v3422 = vunpack.c.l.b16 %v2675
    %v3423 = vunpack.c.h.b16 %v2675
    %v3424 = vunpack.c.l.b16 %v2676
    %v3425 = vunpack.c.h.b16 %v2676
    %v3426 = vunpack.c.l.b16 %v2677
    %v3427 = vunpack.c.h.b16 %v2677
    %v3428 = vunpack.c.l.b16 %v2678
    %v3429 = vunpack.c.h.b16 %v2678
    %v3430 = vunpack.c.l.b16 %v2679
    %v3431 = vunpack.c.h.b16 %v2679
    %v3432 = vunpack.c.l.b16 %v2680
    %v3433 = vunpack.c.h.b16 %v2680
    %v3434 = vunpack.c.l.b16 %v2681
    %v3435 = vunpack.c.h.b16 %v2681
    %v3436 = vunpack.c.l.b16 %v2682
    %v3437 = vunpack.c.h.b16 %v2682
    %v3438 = vunpack.c.l.b16 %v2683
    %v3439 = vunpack.c.h.b16 %v2683
    %v3440 = vunpack.c.l.b16 %v2684
    %v3441 = vunpack.c.h.b16 %v2684
    %v3442 = vunpack.c.l.b16 %v2685
    %v3443 = vunpack.c.h.b16 %v2685
    %v3444 = vunpack.c.l.b16 %v2686
    %v3445 = vunpack.c.h.b16 %v2686
    %v3446 = vunpack.c.l.b16 %v2687
    %v3447 = vunpack.c.h.b16 %v2687
    %v3448 = vunpack.c.l.b16 %v2688
    %v3449 = vunpack.c.h.b16 %v2688
    %v3450 = vunpack.c.l.b16 %v2689
    %v3451 = vunpack.c.h.b16 %v2689
    %v3452 = vunpack.c.l.b16 %v2690
    %v3453 = vunpack.c.h.b16 %v2690
    %v3454 = vunpack.c.l.b16 %v2691
    %v3455 = vunpack.c.h.b16 %v2691
    %v3456 = vunpack.c.l.b16 %v2692
    %v3457 = vunpack.c.h.b16 %v2692
    %v3458 = vunpack.c.l.b16 %v2693
    %v3459 = vunpack.c.h.b16 %v2693
    %v3460 = vunpack.c.l.b16 %v2694
    %v3461 = vunpack.c.h.b16 %v2694
    %v3462 = vunpack.c.l.b16 %v2695
    %v3463 = vunpack.c.h.b16 %v2695
    %v3464 = vunpack.c.l.b16 %v2696
    %v3465 = vunpack.c.h.b16 %v2696
    %v3466 = vunpack.c.l.b16 %v2697
    %v3467 = vunpack.c.h.b16 %v2697
    %v3468 = vunpack.c.l.b16 %v2698
    %v3469 = vunpack.c.h.b16 %v2698
    %v3470 = vunpack.c.l.b16 %v2699
    %v3471 = vunpack.c.h.b16 %v2699
    %v3472 = vunpack.c.l.b16 %v2700
    %v3473 = vunpack.c.h.b16 %v2700
    %v3474 = vunpack.c.l.b16 %v2701
    %v3475 = vunpack.c.h.b16 %v2701
    %v3476 = vunpack.c.l.b16 %v2702
    %v3477 = vunpack.c.h.b16 %v2702
    %v3478 = vunpack.c.l.b16 %v2703
    %v3479 = vunpack.c.h.b16 %v2703
    %v3480 = vunpack.c.l.b16 %v2704
    %v3481 = vunpack.c.h.b16 %v2704
    %v3482 = vunpack.c.l.b16 %v2705
    %v3483 = vunpack.c.h.b16 %v2705
    %v3484 = vunpack.c.l.b16 %v2706
    %v3485 = vunpack.c.h.b16 %v2706
    %v3486 = vpack.c.b16 %v2978, %v2974
    %v3487 = vpack.c.b16 %v2979, %v2975
    %v3488 = vpack.c.b16 %v2980, %v2976
    %v3489 = vpack.c.b16 %v2981, %v2977
    %v3490 = vpack.c.b16 %v2986, %v2982
    %v3491 = vpack.c.b16 %v2987, %v2983
    %v3492 = vpack.c.b16 %v2988, %v2984
    %v3493 = vpack.c.b16 %v2989, %v2985
    %v3494 = vpack.c.b16 %v2994, %v2990
    %v3495 = vpack.c.b16 %v2995, %v2991
    %v3496 = vpack.c.b16 %v2996, %v2992
    %v3497 = vpack.c.b16 %v2997, %v2993
    %v3498 = vpack.c.b16 %v3002, %v2998
    %v3499 = vpack.c.b16 %v3003, %v2999
    %v3500 = vpack.c.b16 %v3004, %v3000
    %v3501 = vpack.c.b16 %v3005, %v3001
    %v3502 = vpack.c.b16 %v3010, %v3006
    %v3503 = vpack.c.b16 %v3011, %v3007
    %v3504 = vpack.c.b16 %v3012, %v3008
    %v3505 = vpack.c.b16 %v3013, %v3009
    %v3506 = vpack.c.b16 %v3018, %v3014
    %v3507 = vpack.c.b16 %v3019, %v3015
    %v3508 = vpack.c.b16 %v3020, %v3016
    %v3509 = vpack.c.b16 %v3021, %v3017
    %v3510 = vpack.c.b16 %v3026, %v3022
    %v3511 = vpack.c.b16 %v3027, %v3023
    %v3512 = vpack.c.b16 %v3028, %v3024
    %v3513 = vpack.c.b16 %v3029, %v3025
    %v3514 = vpack.c.b16 %v3034, %v3030
    %v3515 = vpack.c.b16 %v3035, %v3031
    %v3516 = vpack.c.b16 %v3036, %v3032
    %v3517 = vpack.c.b16 %v3037, %v3033
    %v3518 = vpack.c.b16 %v3042, %v3038
    %v3519 = vpack.c.b16 %v3043, %v3039
    %v3520 = vpack.c.b16 %v3044, %v3040
    %v3521 = vpack.c.b16 %v3045, %v3041
    %v3522 = vpack.c.b16 %v3050, %v3046
    %v3523 = vpack.c.b16 %v3051, %v3047
    %v3524 = vpack.c.b16 %v3052, %v3048
    %v3525 = vpack.c.b16 %v3053, %v3049
    %v3526 = vpack.c.b16 %v3058, %v3054
    %v3527 = vpack.c.b16 %v3059, %v3055
    %v3528 = vpack.c.b16 %v3060, %v3056
    %v3529 = vpack.c.b16 %v3061, %v3057
    %v3530 = vpack.c.b16 %v3066, %v3062
    %v3531 = vpack.c.b16 %v3067, %v3063
    %v3532 = vpack.c.b16 %v3068, %v3064
    %v3533 = vpack.c.b16 %v3069, %v3065
    %v3534 = vpack.c.b16 %v3074, %v3070
    %v3535 = vpack.c.b16 %v3075, %v3071
    %v3536 = vpack.c.b16 %v3076, %v3072
    %v3537 = vpack.c.b16 %v3077, %v3073
    %v3538 = vpack.c.b16 %v3082, %v3078
    %v3539 = vpack.c.b16 %v3083, %v3079
    %v3540 = vpack.c.b16 %v3084, %v3080
    %v3541 = vpack.c.b16 %v3085, %v3081
    %v3542 = vpack.c.b16 %v3090, %v3086
    %v3543 = vpack.c.b16 %v3091, %v3087
    %v3544 = vpack.c.b16 %v3092, %v3088
    %v3545 = vpack.c.b16 %v3093, %v3089
    %v3546 = vpack.c.b16 %v3098, %v3094
    %v3547 = vpack.c.b16 %v3099, %v3095
    %v3548 = vpack.c.b16 %v3100, %v3096
    %v3549 = vpack.c.b16 %v3101, %v3097
    %v3550 = vpack.c.b16 %v3106, %v3102
    %v3551 = vpack.c.b16 %v3107, %v3103
    %v3552 = vpack.c.b16 %v3108, %v3104
    %v3553 = vpack.c.b16 %v3109, %v3105
    %v3554 = vpack.c.b16 %v3114, %v3110
    %v3555 = vpack.c.b16 %v3115, %v3111
    %v3556 = vpack.c.b16 %v3116, %v3112
    %v3557 = vpack.c.b16 %v3117, %v3113
    %v3558 = vpack.c.b16 %v3122, %v3118
    %v3559 = vpack.c.b16 %v3123, %v3119
    %v3560 = vpack.c.b16 %v3124, %v3120
    %v3561 = vpack.c.b16 %v3125, %v3121
    %v3562 = vpack.c.b16 %v3130, %v3126
    %v3563 = vpack.c.b16 %v3131, %v3127
    %v3564 = vpack.c.b16 %v3132, %v3128
    %v3565 = vpack.c.b16 %v3133, %v3129
    %v3566 = vpack.c.b16 %v3138, %v3134
    %v3567 = vpack.c.b16 %v3139, %v3135
    %v3568 = vpack.c.b16 %v3140, %v3136
    %v3569 = vpack.c.b16 %v3141, %v3137
    %v3570 = vpack.c.b16 %v3146, %v3142
    %v3571 = vpack.c.b16 %v3147, %v3143
    %v3572 = vpack.c.b16 %v3148, %v3144
    %v3573 = vpack.c.b16 %v3149, %v3145
    %v3574 = vpack.c.b16 %v3154, %v3150
    %v3575 = vpack.c.b16 %v3155, %v3151
    %v3576 = vpack.c.b16 %v3156, %v3152
    %v3577 = vpack.c.b16 %v3157, %v3153
    %v3578 = vpack.c.b16 %v3162, %v3158
    %v3579 = vpack.c.b16 %v3163, %v3159
    %v3580 = vpack.c.b16 %v3164, %v3160
    %v3581 = vpack.c.b16 %v3165, %v3161
    %v3582 = vpack.c.b16 %v3170, %v3166
    %v3583 = vpack.c.b16 %v3171, %v3167
    %v3584 = vpack.c.b16 %v3172, %v3168
    %v3585 = vpack.c.b16 %v3173, %v3169
    %v3586 = vpack.c.b16 %v3178, %v3174
    %v3587 = vpack.c.b16 %v3179, %v3175
    %v3588 = vpack.c.b16 %v3180, %v3176
    %v3589 = vpack.c.b16 %v3181, %v3177
    %v3590 = vpack.c.b16 %v3186, %v3182
    %v3591 = vpack.c.b16 %v3187, %v3183
    %v3592 = vpack.c.b16 %v3188, %v3184
    %v3593 = vpack.c.b16 %v3189, %v3185
    %v3594 = vpack.c.b16 %v3194, %v3190
    %v3595 = vpack.c.b16 %v3195, %v3191
    %v3596 = vpack.c.b16 %v3196, %v3192
    %v3597 = vpack.c.b16 %v3197, %v3193
    %v3598 = vpack.c.b16 %v3202, %v3198
    %v3599 = vpack.c.b16 %v3203, %v3199
    %v3600 = vpack.c.b16 %v3204, %v3200
    %v3601 = vpack.c.b16 %v3205, %v3201
    %v3602 = vpack.c.b16 %v3210, %v3206
    %v3603 = vpack.c.b16 %v3211, %v3207
    %v3604 = vpack.c.b16 %v3212, %v3208
    %v3605 = vpack.c.b16 %v3213, %v3209
    %v3606 = vpack.c.b16 %v3218, %v3214
    %v3607 = vpack.c.b16 %v3219, %v3215
    %v3608 = vpack.c.b16 %v3220, %v3216
    %v3609 = vpack.c.b16 %v3221, %v3217
    %v3610 = vpack.c.b16 %v3226, %v3222
    %v3611 = vpack.c.b16 %v3227, %v3223
    %v3612 = vpack.c.b16 %v3228, %v3224
    %v3613 = vpack.c.b16 %v3229, %v3225
    %v3614 = vpack.c.b16 %v3234, %v3230
    %v3615 = vpack.c.b16 %v3235, %v3231
    %v3616 = vpack.c.b16 %v3236, %v3232
    %v3617 = vpack.c.b16 %v3237, %v3233
    %v3618 = vpack.c.b16 %v3242, %v3238
    %v3619 = vpack.c.b16 %v3243, %v3239
    %v3620 = vpack.c.b16 %v3244, %v3240
    %v3621 = vpack.c.b16 %v3245, %v3241
    %v3622 = vpack.c.b16 %v3250, %v3246
    %v3623 = vpack.c.b16 %v3251, %v3247
    %v3624 = vpack.c.b16 %v3252, %v3248
    %v3625 = vpack.c.b16 %v3253, %v3249
    %v3626 = vpack.c.b16 %v3258, %v3254
    %v3627 = vpack.c.b16 %v3259, %v3255
    %v3628 = vpack.c.b16 %v3260, %v3256
    %v3629 = vpack.c.b16 %v3261, %v3257
    %v3630 = vpack.c.b16 %v3266, %v3262
    %v3631 = vpack.c.b16 %v3267, %v3263
    %v3632 = vpack.c.b16 %v3268, %v3264
    %v3633 = vpack.c.b16 %v3269, %v3265
    %v3634 = vpack.c.b16 %v3274, %v3270
    %v3635 = vpack.c.b16 %v3275, %v3271
    %v3636 = vpack.c.b16 %v3276, %v3272
    %v3637 = vpack.c.b16 %v3277, %v3273
    %v3638 = vpack.c.b16 %v3282, %v3278
    %v3639 = vpack.c.b16 %v3283, %v3279
    %v3640 = vpack.c.b16 %v3284, %v3280
    %v3641 = vpack.c.b16 %v3285, %v3281
    %v3642 = vpack.c.b16 %v3290, %v3286
    %v3643 = vpack.c.b16 %v3291, %v3287
    %v3644 = vpack.c.b16 %v3292, %v3288
    %v3645 = vpack.c.b16 %v3293, %v3289
    %v3646 = vpack.c.b16 %v3298, %v3294
    %v3647 = vpack.c.b16 %v3299, %v3295
    %v3648 = vpack.c.b16 %v3300, %v3296
    %v3649 = vpack.c.b16 %v3301, %v3297
    %v3650 = vpack.c.b16 %v3306, %v3302
    %v3651 = vpack.c.b16 %v3307, %v3303
    %v3652 = vpack.c.b16 %v3308, %v3304
    %v3653 = vpack.c.b16 %v3309, %v3305
    %v3654 = vpack.c.b16 %v3314, %v3310
    %v3655 = vpack.c.b16 %v3315, %v3311
    %v3656 = vpack.c.b16 %v3316, %v3312
    %v3657 = vpack.c.b16 %v3317, %v3313
    %v3658 = vpack.c.b16 %v3322, %v3318
    %v3659 = vpack.c.b16 %v3323, %v3319
    %v3660 = vpack.c.b16 %v3324, %v3320
    %v3661 = vpack.c.b16 %v3325, %v3321
    %v3662 = vpack.c.b16 %v3330, %v3326
    %v3663 = vpack.c.b16 %v3331, %v3327
    %v3664 = vpack.c.b16 %v3332, %v3328
    %v3665 = vpack.c.b16 %v3333, %v3329
    %v3666 = vpack.c.b16 %v3338, %v3334
    %v3667 = vpack.c.b16 %v3339, %v3335
    %v3668 = vpack.c.b16 %v3340, %v3336
    %v3669 = vpack.c.b16 %v3341, %v3337
    %v3670 = vpack.c.b16 %v3346, %v3342
    %v3671 = vpack.c.b16 %v3347, %v3343
    %v3672 = vpack.c.b16 %v3348, %v3344
    %v3673 = vpack.c.b16 %v3349, %v3345
    %v3674 = vpack.c.b16 %v3354, %v3350
    %v3675 = vpack.c.b16 %v3355, %v3351
    %v3676 = vpack.c.b16 %v3356, %v3352
    %v3677 = vpack.c.b16 %v3357, %v3353
    %v3678 = vpack.c.b16 %v3362, %v3358
    %v3679 = vpack.c.b16 %v3363, %v3359
    %v3680 = vpack.c.b16 %v3364, %v3360
    %v3681 = vpack.c.b16 %v3365, %v3361
    %v3682 = vpack.c.b16 %v3370, %v3366
    %v3683 = vpack.c.b16 %v3371, %v3367
    %v3684 = vpack.c.b16 %v3372, %v3368
    %v3685 = vpack.c.b16 %v3373, %v3369
    %v3686 = vpack.c.b16 %v3378, %v3374
    %v3687 = vpack.c.b16 %v3379, %v3375
    %v3688 = vpack.c.b16 %v3380, %v3376
    %v3689 = vpack.c.b16 %v3381, %v3377
    %v3690 = vpack.c.b16 %v3386, %v3382
    %v3691 = vpack.c.b16 %v3387, %v3383
    %v3692 = vpack.c.b16 %v3388, %v3384
    %v3693 = vpack.c.b16 %v3389, %v3385
    %v3694 = vpack.c.b16 %v3394, %v3390
    %v3695 = vpack.c.b16 %v3395, %v3391
    %v3696 = vpack.c.b16 %v3396, %v3392
    %v3697 = vpack.c.b16 %v3397, %v3393
    %v3698 = vpack.c.b16 %v3402, %v3398
    %v3699 = vpack.c.b16 %v3403, %v3399
    %v3700 = vpack.c.b16 %v3404, %v3400
    %v3701 = vpack.c.b16 %v3405, %v3401
    %v3702 = vpack.c.b16 %v3410, %v3406
    %v3703 = vpack.c.b16 %v3411, %v3407
    %v3704 = vpack.c.b16 %v3412, %v3408
    %v3705 = vpack.c.b16 %v3413, %v3409
    %v3706 = vpack.c.b16 %v3418, %v3414
    %v3707 = vpack.c.b16 %v3419, %v3415
    %v3708 = vpack.c.b16 %v3420, %v3416
    %v3709 = vpack.c.b16 %v3421, %v3417
    %v3710 = vpack.c.b16 %v3426, %v3422
    %v3711 = vpack.c.b16 %v3427, %v3423
    %v3712 = vpack.c.b16 %v3428, %v3424
    %v3713 = vpack.c.b16 %v3429, %v3425
    %v3714 = vpack.c.b16 %v3434, %v3430
    %v3715 = vpack.c.b16 %v3435, %v3431
    %v3716 = vpack.c.b16 %v3436, %v3432
    %v3717 = vpack.c.b16 %v3437, %v3433
    %v3718 = vpack.c.b16 %v3442, %v3438
    %v3719 = vpack.c.b16 %v3443, %v3439
    %v3720 = vpack.c.b16 %v3444, %v3440
    %v3721 = vpack.c.b16 %v3445, %v3441
    %v3722 = vpack.c.b16 %v3450, %v3446
    %v3723 = vpack.c.b16 %v3451, %v3447
    %v3724 = vpack.c.b16 %v3452, %v3448
    %v3725 = vpack.c.b16 %v3453, %v3449
    %v3726 = vpack.c.b16 %v3458, %v3454
    %v3727 = vpack.c.b16 %v3459, %v3455
    %v3728 = vpack.c.b16 %v3460, %v3456
    %v3729 = vpack.c.b16 %v3461, %v3457
    %v3730 = vpack.c.b16 %v3466, %v3462
    %v3731 = vpack.c.b16 %v3467, %v3463
    %v3732 = vpack.c.b16 %v3468, %v3464
    %v3733 = vpack.c.b16 %v3469, %v3465
    %v3734 = vpack.c.b16 %v3474, %v3470
    %v3735 = vpack.c.b16 %v3475, %v3471
    %v3736 = vpack.c.b16 %v3476, %v3472
    %v3737 = vpack.c.b16 %v3477, %v3473
    %v3738 = vpack.c.b16 %v3482, %v3478
    %v3739 = vpack.c.b16 %v3483, %v3479
    %v3740 = vpack.c.b16 %v3484, %v3480
    %v3741 = vpack.c.b16 %v3485, %v3481
    %3998 = vmatpush.bf16.msra.mxu0 %v3514
    %3999 = vmatpush.bf16.msra.mxu0 %v3510
    %4000 = vmatpush.bf16.msra.mxu0 %v3506
    %4001 = vmatpush.bf16.msra.mxu0 %v3502
    %4002 = vmatpush.bf16.msra.mxu0 %v3498
    %4003 = vmatpush.bf16.msra.mxu0 %v3494
    %4004 = vmatpush.bf16.msra.mxu0 %v3490
    %4005 = vmatpush.bf16.msra.mxu0 %v3486
    %4006 = vmatmul.bf16.gmra.mxu0 %v400
    %v4007 = vpop.f32.mrf.mxu0
    %v4008 = vadd.f32 %v2710, %v4007
    %v4009 = vpop.f32.mrf.mxu0
    %4010 = vdwg.mxu0
    %4011 = vmatpush.bf16.msra.mxu0 %v3546
    %4012 = vmatpush.bf16.msra.mxu0 %v3542
    %4013 = vmatpush.bf16.msra.mxu0 %v3538
    %4014 = vmatpush.bf16.msra.mxu0 %v3534
    %4015 = vmatpush.bf16.msra.mxu0 %v3530
    %4016 = vmatpush.bf16.msra.mxu0 %v3526
    %4017 = vmatpush.bf16.msra.mxu0 %v3522
    %4018 = vmatpush.bf16.msra.mxu0 %v3518
    %4019 = vmatmul.bf16.gmra.mxu0 %v401
    %v4020 = vpop.f32.mrf.mxu0
    %v4021 = vadd.f32 %v4008, %v4020
    %v4022 = vpop.f32.mrf.mxu0
    %4023 = vdwg.mxu0
    %4024 = vmatpush.bf16.msra.mxu0 %v3578
    %4025 = vmatpush.bf16.msra.mxu0 %v3574
    %4026 = vmatpush.bf16.msra.mxu0 %v3570
    %4027 = vmatpush.bf16.msra.mxu0 %v3566
    %4028 = vmatpush.bf16.msra.mxu0 %v3562
    %4029 = vmatpush.bf16.msra.mxu0 %v3558
    %4030 = vmatpush.bf16.msra.mxu0 %v3554
    %4031 = vmatpush.bf16.msra.mxu0 %v3550
    %4032 = vmatmul.bf16.gmra.mxu0 %v402
    %v4033 = vpop.f32.mrf.mxu0
    %v4034 = vadd.f32 %v4021, %v4033
    %v4035 = vpop.f32.mrf.mxu0
    %4036 = vdwg.mxu0
    %4037 = vmatpush.bf16.msra.mxu0 %v3610
    %4038 = vmatpush.bf16.msra.mxu0 %v3606
    %4039 = vmatpush.bf16.msra.mxu0 %v3602
    %4040 = vmatpush.bf16.msra.mxu0 %v3598
    %4041 = vmatpush.bf16.msra.mxu0 %v3594
    %4042 = vmatpush.bf16.msra.mxu0 %v3590
    %4043 = vmatpush.bf16.msra.mxu0 %v3586
    %4044 = vmatpush.bf16.msra.mxu0 %v3582
    %4045 = vmatmul.bf16.gmra.mxu0 %v403
    %v4046 = vpop.f32.mrf.mxu0
    %v4047 = vadd.f32 %v4034, %v4046
    %v4048 = vpop.f32.mrf.mxu0
    %4049 = vdwg.mxu0
    %4050 = vmatpush.bf16.msra.mxu0 %v3642
    %4051 = vmatpush.bf16.msra.mxu0 %v3638
    %4052 = vmatpush.bf16.msra.mxu0 %v3634
    %4053 = vmatpush.bf16.msra.mxu0 %v3630
    %4054 = vmatpush.bf16.msra.mxu0 %v3626
    %4055 = vmatpush.bf16.msra.mxu0 %v3622
    %4056 = vmatpush.bf16.msra.mxu0 %v3618
    %4057 = vmatpush.bf16.msra.mxu0 %v3614
    %4058 = vmatmul.bf16.gmra.mxu0 %v404
    %v4059 = vpop.f32.mrf.mxu0
    %v4060 = vadd.f32 %v4047, %v4059
    %v4061 = vpop.f32.mrf.mxu0
    %4062 = vdwg.mxu0
    %4063 = vmatpush.bf16.msra.mxu0 %v3674
    %4064 = vmatpush.bf16.msra.mxu0 %v3670
    %4065 = vmatpush.bf16.msra.mxu0 %v3666
    %4066 = vmatpush.bf16.msra.mxu0 %v3662
    %4067 = vmatpush.bf16.msra.mxu0 %v3658
    %4068 = vmatpush.bf16.msra.mxu0 %v3654
    %4069 = vmatpush.bf16.msra.mxu0 %v3650
    %4070 = vmatpush.bf16.msra.mxu0 %v3646
    %4071 = vmatmul.bf16.gmra.mxu0 %v405
    %v4072 = vpop.f32.mrf.mxu0
    %v4073 = vadd.f32 %v4060, %v4072
    %v4074 = vpop.f32.mrf.mxu0
    %4075 = vdwg.mxu0
    %4076 = vmatpush.bf16.msra.mxu0 %v3706
    %4077 = vmatpush.bf16.msra.mxu0 %v3702
    %4078 = vmatpush.bf16.msra.mxu0 %v3698
    %4079 = vmatpush.bf16.msra.mxu0 %v3694
    %4080 = vmatpush.bf16.msra.mxu0 %v3690
    %4081 = vmatpush.bf16.msra.mxu0 %v3686
    %4082 = vmatpush.bf16.msra.mxu0 %v3682
    %4083 = vmatpush.bf16.msra.mxu0 %v3678
    %4084 = vmatmul.bf16.gmra.mxu0 %v406
    %v4085 = vpop.f32.mrf.mxu0
    %v4086 = vadd.f32 %v4073, %v4085
    %v4087 = vpop.f32.mrf.mxu0
    %4088 = vdwg.mxu0
    %4089 = vmatpush.bf16.msra.mxu0 %v3738
    %4090 = vmatpush.bf16.msra.mxu0 %v3734
    %4091 = vmatpush.bf16.msra.mxu0 %v3730
    %4092 = vmatpush.bf16.msra.mxu0 %v3726
    %4093 = vmatpush.bf16.msra.mxu0 %v3722
    %4094 = vmatpush.bf16.msra.mxu0 %v3718
    %4095 = vmatpush.bf16.msra.mxu0 %v3714
    %4096 = vmatpush.bf16.msra.mxu0 %v3710
    %4097 = vmatmul.bf16.gmra.mxu0 %v407
    %v4098 = vpop.f32.mrf.mxu0
    %v4099 = vadd.f32 %v4086, %v4098
    %v4100 = vpop.f32.mrf.mxu0
    %4101 = vdwg.mxu0
    %4102 = vmatpush.bf16.msra.mxu0 %v3515
    %4103 = vmatpush.bf16.msra.mxu0 %v3511
    %4104 = vmatpush.bf16.msra.mxu0 %v3507
    %4105 = vmatpush.bf16.msra.mxu0 %v3503
    %4106 = vmatpush.bf16.msra.mxu0 %v3499
    %4107 = vmatpush.bf16.msra.mxu0 %v3495
    %4108 = vmatpush.bf16.msra.mxu0 %v3491
    %4109 = vmatpush.bf16.msra.mxu0 %v3487
    %4110 = vmatmul.bf16.gmra.mxu0 %v400
    %v4111 = vpop.f32.mrf.mxu0
    %v4112 = vadd.f32 %v2711, %v4111
    %v4113 = vpop.f32.mrf.mxu0
    %4114 = vdwg.mxu0
    %4115 = vmatpush.bf16.msra.mxu0 %v3547
    %4116 = vmatpush.bf16.msra.mxu0 %v3543
    %4117 = vmatpush.bf16.msra.mxu0 %v3539
    %4118 = vmatpush.bf16.msra.mxu0 %v3535
    %4119 = vmatpush.bf16.msra.mxu0 %v3531
    %4120 = vmatpush.bf16.msra.mxu0 %v3527
    %4121 = vmatpush.bf16.msra.mxu0 %v3523
    %4122 = vmatpush.bf16.msra.mxu0 %v3519
    %4123 = vmatmul.bf16.gmra.mxu0 %v401
    %v4124 = vpop.f32.mrf.mxu0
    %v4125 = vadd.f32 %v4112, %v4124
    %v4126 = vpop.f32.mrf.mxu0
    %4127 = vdwg.mxu0
    %4128 = vmatpush.bf16.msra.mxu0 %v3579
    %4129 = vmatpush.bf16.msra.mxu0 %v3575
    %4130 = vmatpush.bf16.msra.mxu0 %v3571
    %4131 = vmatpush.bf16.msra.mxu0 %v3567
    %4132 = vmatpush.bf16.msra.mxu0 %v3563
    %4133 = vmatpush.bf16.msra.mxu0 %v3559
    %4134 = vmatpush.bf16.msra.mxu0 %v3555
    %4135 = vmatpush.bf16.msra.mxu0 %v3551
    %4136 = vmatmul.bf16.gmra.mxu0 %v402
    %v4137 = vpop.f32.mrf.mxu0
    %v4138 = vadd.f32 %v4125, %v4137
    %v4139 = vpop.f32.mrf.mxu0
    %4140 = vdwg.mxu0
    %4141 = vmatpush.bf16.msra.mxu0 %v3611
    %4142 = vmatpush.bf16.msra.mxu0 %v3607
    %4143 = vmatpush.bf16.msra.mxu0 %v3603
    %4144 = vmatpush.bf16.msra.mxu0 %v3599
    %4145 = vmatpush.bf16.msra.mxu0 %v3595
    %4146 = vmatpush.bf16.msra.mxu0 %v3591
    %4147 = vmatpush.bf16.msra.mxu0 %v3587
    %4148 = vmatpush.bf16.msra.mxu0 %v3583
    %4149 = vmatmul.bf16.gmra.mxu0 %v403
    %v4150 = vpop.f32.mrf.mxu0
    %v4151 = vadd.f32 %v4138, %v4150
    %v4152 = vpop.f32.mrf.mxu0
    %4153 = vdwg.mxu0
    %4154 = vmatpush.bf16.msra.mxu0 %v3643
    %4155 = vmatpush.bf16.msra.mxu0 %v3639
    %4156 = vmatpush.bf16.msra.mxu0 %v3635
    %4157 = vmatpush.bf16.msra.mxu0 %v3631
    %4158 = vmatpush.bf16.msra.mxu0 %v3627
    %4159 = vmatpush.bf16.msra.mxu0 %v3623
    %4160 = vmatpush.bf16.msra.mxu0 %v3619
    %4161 = vmatpush.bf16.msra.mxu0 %v3615
    %4162 = vmatmul.bf16.gmra.mxu0 %v404
    %v4163 = vpop.f32.mrf.mxu0
    %v4164 = vadd.f32 %v4151, %v4163
    %v4165 = vpop.f32.mrf.mxu0
    %4166 = vdwg.mxu0
    %4167 = vmatpush.bf16.msra.mxu0 %v3675
    %4168 = vmatpush.bf16.msra.mxu0 %v3671
    %4169 = vmatpush.bf16.msra.mxu0 %v3667
    %4170 = vmatpush.bf16.msra.mxu0 %v3663
    %4171 = vmatpush.bf16.msra.mxu0 %v3659
    %4172 = vmatpush.bf16.msra.mxu0 %v3655
    %4173 = vmatpush.bf16.msra.mxu0 %v3651
    %4174 = vmatpush.bf16.msra.mxu0 %v3647
    %4175 = vmatmul.bf16.gmra.mxu0 %v405
    %v4176 = vpop.f32.mrf.mxu0
    %v4177 = vadd.f32 %v4164, %v4176
    %v4178 = vpop.f32.mrf.mxu0
    %4179 = vdwg.mxu0
    %4180 = vmatpush.bf16.msra.mxu0 %v3707
    %4181 = vmatpush.bf16.msra.mxu0 %v3703
    %4182 = vmatpush.bf16.msra.mxu0 %v3699
    %4183 = vmatpush.bf16.msra.mxu0 %v3695
    %4184 = vmatpush.bf16.msra.mxu0 %v3691
    %4185 = vmatpush.bf16.msra.mxu0 %v3687
    %4186 = vmatpush.bf16.msra.mxu0 %v3683
    %4187 = vmatpush.bf16.msra.mxu0 %v3679
    %4188 = vmatmul.bf16.gmra.mxu0 %v406
    %v4189 = vpop.f32.mrf.mxu0
    %v4190 = vadd.f32 %v4177, %v4189
    %v4191 = vpop.f32.mrf.mxu0
    %4192 = vdwg.mxu0
    %4193 = vmatpush.bf16.msra.mxu0 %v3739
    %4194 = vmatpush.bf16.msra.mxu0 %v3735
    %4195 = vmatpush.bf16.msra.mxu0 %v3731
    %4196 = vmatpush.bf16.msra.mxu0 %v3727
    %4197 = vmatpush.bf16.msra.mxu0 %v3723
    %4198 = vmatpush.bf16.msra.mxu0 %v3719
    %4199 = vmatpush.bf16.msra.mxu0 %v3715
    %4200 = vmatpush.bf16.msra.mxu0 %v3711
    %4201 = vmatmul.bf16.gmra.mxu0 %v407
    %v4202 = vpop.f32.mrf.mxu0
    %v4203 = vadd.f32 %v4190, %v4202
    %v4204 = vpop.f32.mrf.mxu0
    %4205 = vdwg.mxu0
    %4206 = vmatpush.bf16.msra.mxu0 %v3516
    %4207 = vmatpush.bf16.msra.mxu0 %v3512
    %4208 = vmatpush.bf16.msra.mxu0 %v3508
    %4209 = vmatpush.bf16.msra.mxu0 %v3504
    %4210 = vmatpush.bf16.msra.mxu0 %v3500
    %4211 = vmatpush.bf16.msra.mxu0 %v3496
    %4212 = vmatpush.bf16.msra.mxu0 %v3492
    %4213 = vmatpush.bf16.msra.mxu0 %v3488
    %4214 = vmatmul.bf16.gmra.mxu0 %v400
    %v4215 = vpop.f32.mrf.mxu0
    %v4216 = vadd.f32 %v2712, %v4215
    %v4217 = vpop.f32.mrf.mxu0
    %4218 = vdwg.mxu0
    %4219 = vmatpush.bf16.msra.mxu0 %v3548
    %4220 = vmatpush.bf16.msra.mxu0 %v3544
    %4221 = vmatpush.bf16.msra.mxu0 %v3540
    %4222 = vmatpush.bf16.msra.mxu0 %v3536
    %4223 = vmatpush.bf16.msra.mxu0 %v3532
    %4224 = vmatpush.bf16.msra.mxu0 %v3528
    %4225 = vmatpush.bf16.msra.mxu0 %v3524
    %4226 = vmatpush.bf16.msra.mxu0 %v3520
    %4227 = vmatmul.bf16.gmra.mxu0 %v401
    %v4228 = vpop.f32.mrf.mxu0
    %v4229 = vadd.f32 %v4216, %v4228
    %v4230 = vpop.f32.mrf.mxu0
    %4231 = vdwg.mxu0
    %4232 = vmatpush.bf16.msra.mxu0 %v3580
    %4233 = vmatpush.bf16.msra.mxu0 %v3576
    %4234 = vmatpush.bf16.msra.mxu0 %v3572
    %4235 = vmatpush.bf16.msra.mxu0 %v3568
    %4236 = vmatpush.bf16.msra.mxu0 %v3564
    %4237 = vmatpush.bf16.msra.mxu0 %v3560
    %4238 = vmatpush.bf16.msra.mxu0 %v3556
    %4239 = vmatpush.bf16.msra.mxu0 %v3552
    %4240 = vmatmul.bf16.gmra.mxu0 %v402
    %v4241 = vpop.f32.mrf.mxu0
    %v4242 = vadd.f32 %v4229, %v4241
    %v4243 = vpop.f32.mrf.mxu0
    %4244 = vdwg.mxu0
    %4245 = vmatpush.bf16.msra.mxu0 %v3612
    %4246 = vmatpush.bf16.msra.mxu0 %v3608
    %4247 = vmatpush.bf16.msra.mxu0 %v3604
    %4248 = vmatpush.bf16.msra.mxu0 %v3600
    %4249 = vmatpush.bf16.msra.mxu0 %v3596
    %4250 = vmatpush.bf16.msra.mxu0 %v3592
    %4251 = vmatpush.bf16.msra.mxu0 %v3588
    %4252 = vmatpush.bf16.msra.mxu0 %v3584
    %4253 = vmatmul.bf16.gmra.mxu0 %v403
    %v4254 = vpop.f32.mrf.mxu0
    %v4255 = vadd.f32 %v4242, %v4254
    %v4256 = vpop.f32.mrf.mxu0
    %4257 = vdwg.mxu0
    %4258 = vmatpush.bf16.msra.mxu0 %v3644
    %4259 = vmatpush.bf16.msra.mxu0 %v3640
    %4260 = vmatpush.bf16.msra.mxu0 %v3636
    %4261 = vmatpush.bf16.msra.mxu0 %v3632
    %4262 = vmatpush.bf16.msra.mxu0 %v3628
    %4263 = vmatpush.bf16.msra.mxu0 %v3624
    %4264 = vmatpush.bf16.msra.mxu0 %v3620
    %4265 = vmatpush.bf16.msra.mxu0 %v3616
    %4266 = vmatmul.bf16.gmra.mxu0 %v404
    %v4267 = vpop.f32.mrf.mxu0
    %v4268 = vadd.f32 %v4255, %v4267
    %v4269 = vpop.f32.mrf.mxu0
    %4270 = vdwg.mxu0
    %4271 = vmatpush.bf16.msra.mxu0 %v3676
    %4272 = vmatpush.bf16.msra.mxu0 %v3672
    %4273 = vmatpush.bf16.msra.mxu0 %v3668
    %4274 = vmatpush.bf16.msra.mxu0 %v3664
    %4275 = vmatpush.bf16.msra.mxu0 %v3660
    %4276 = vmatpush.bf16.msra.mxu0 %v3656
    %4277 = vmatpush.bf16.msra.mxu0 %v3652
    %4278 = vmatpush.bf16.msra.mxu0 %v3648
    %4279 = vmatmul.bf16.gmra.mxu0 %v405
    %v4280 = vpop.f32.mrf.mxu0
    %v4281 = vadd.f32 %v4268, %v4280
    %v4282 = vpop.f32.mrf.mxu0
    %4283 = vdwg.mxu0
    %4284 = vmatpush.bf16.msra.mxu0 %v3708
    %4285 = vmatpush.bf16.msra.mxu0 %v3704
    %4286 = vmatpush.bf16.msra.mxu0 %v3700
    %4287 = vmatpush.bf16.msra.mxu0 %v3696
    %4288 = vmatpush.bf16.msra.mxu0 %v3692
    %4289 = vmatpush.bf16.msra.mxu0 %v3688
    %4290 = vmatpush.bf16.msra.mxu0 %v3684
    %4291 = vmatpush.bf16.msra.mxu0 %v3680
    %4292 = vmatmul.bf16.gmra.mxu0 %v406
    %v4293 = vpop.f32.mrf.mxu0
    %v4294 = vadd.f32 %v4281, %v4293
    %v4295 = vpop.f32.mrf.mxu0
    %4296 = vdwg.mxu0
    %4297 = vmatpush.bf16.msra.mxu0 %v3740
    %4298 = vmatpush.bf16.msra.mxu0 %v3736
    %4299 = vmatpush.bf16.msra.mxu0 %v3732
    %4300 = vmatpush.bf16.msra.mxu0 %v3728
    %4301 = vmatpush.bf16.msra.mxu0 %v3724
    %4302 = vmatpush.bf16.msra.mxu0 %v3720
    %4303 = vmatpush.bf16.msra.mxu0 %v3716
    %4304 = vmatpush.bf16.msra.mxu0 %v3712
    %4305 = vmatmul.bf16.gmra.mxu0 %v407
    %v4306 = vpop.f32.mrf.mxu0
    %v4307 = vadd.f32 %v4294, %v4306
    %v4308 = vpop.f32.mrf.mxu0
    %4309 = vdwg.mxu0
    %4310 = vmatpush.bf16.msra.mxu0 %v3517
    %4311 = vmatpush.bf16.msra.mxu0 %v3513
    %4312 = vmatpush.bf16.msra.mxu0 %v3509
    %4313 = vmatpush.bf16.msra.mxu0 %v3505
    %4314 = vmatpush.bf16.msra.mxu0 %v3501
    %4315 = vmatpush.bf16.msra.mxu0 %v3497
    %4316 = vmatpush.bf16.msra.mxu0 %v3493
    %4317 = vmatpush.bf16.msra.mxu0 %v3489
    %4318 = vmatmul.bf16.gmra.mxu0 %v400
    %v4319 = vpop.f32.mrf.mxu0
    %v4320 = vadd.f32 %v2713, %v4319
    %v4321 = vpop.f32.mrf.mxu0
    %4322 = vdwg.mxu0
    %4323 = vmatpush.bf16.msra.mxu0 %v3549
    %4324 = vmatpush.bf16.msra.mxu0 %v3545
    %4325 = vmatpush.bf16.msra.mxu0 %v3541
    %4326 = vmatpush.bf16.msra.mxu0 %v3537
    %4327 = vmatpush.bf16.msra.mxu0 %v3533
    %4328 = vmatpush.bf16.msra.mxu0 %v3529
    %4329 = vmatpush.bf16.msra.mxu0 %v3525
    %4330 = vmatpush.bf16.msra.mxu0 %v3521
    %4331 = vmatmul.bf16.gmra.mxu0 %v401
    %v4332 = vpop.f32.mrf.mxu0
    %v4333 = vadd.f32 %v4320, %v4332
    %v4334 = vpop.f32.mrf.mxu0
    %4335 = vdwg.mxu0
    %4336 = vmatpush.bf16.msra.mxu0 %v3581
    %4337 = vmatpush.bf16.msra.mxu0 %v3577
    %4338 = vmatpush.bf16.msra.mxu0 %v3573
    %4339 = vmatpush.bf16.msra.mxu0 %v3569
    %4340 = vmatpush.bf16.msra.mxu0 %v3565
    %4341 = vmatpush.bf16.msra.mxu0 %v3561
    %4342 = vmatpush.bf16.msra.mxu0 %v3557
    %4343 = vmatpush.bf16.msra.mxu0 %v3553
    %4344 = vmatmul.bf16.gmra.mxu0 %v402
    %v4345 = vpop.f32.mrf.mxu0
    %v4346 = vadd.f32 %v4333, %v4345
    %v4347 = vpop.f32.mrf.mxu0
    %4348 = vdwg.mxu0
    %4349 = vmatpush.bf16.msra.mxu0 %v3613
    %4350 = vmatpush.bf16.msra.mxu0 %v3609
    %4351 = vmatpush.bf16.msra.mxu0 %v3605
    %4352 = vmatpush.bf16.msra.mxu0 %v3601
    %4353 = vmatpush.bf16.msra.mxu0 %v3597
    %4354 = vmatpush.bf16.msra.mxu0 %v3593
    %4355 = vmatpush.bf16.msra.mxu0 %v3589
    %4356 = vmatpush.bf16.msra.mxu0 %v3585
    %4357 = vmatmul.bf16.gmra.mxu0 %v403
    %v4358 = vpop.f32.mrf.mxu0
    %v4359 = vadd.f32 %v4346, %v4358
    %v4360 = vpop.f32.mrf.mxu0
    %4361 = vdwg.mxu0
    %4362 = vmatpush.bf16.msra.mxu0 %v3645
    %4363 = vmatpush.bf16.msra.mxu0 %v3641
    %4364 = vmatpush.bf16.msra.mxu0 %v3637
    %4365 = vmatpush.bf16.msra.mxu0 %v3633
    %4366 = vmatpush.bf16.msra.mxu0 %v3629
    %4367 = vmatpush.bf16.msra.mxu0 %v3625
    %4368 = vmatpush.bf16.msra.mxu0 %v3621
    %4369 = vmatpush.bf16.msra.mxu0 %v3617
    %4370 = vmatmul.bf16.gmra.mxu0 %v404
    %v4371 = vpop.f32.mrf.mxu0
    %v4372 = vadd.f32 %v4359, %v4371
    %v4373 = vpop.f32.mrf.mxu0
    %4374 = vdwg.mxu0
    %4375 = vmatpush.bf16.msra.mxu0 %v3677
    %4376 = vmatpush.bf16.msra.mxu0 %v3673
    %4377 = vmatpush.bf16.msra.mxu0 %v3669
    %4378 = vmatpush.bf16.msra.mxu0 %v3665
    %4379 = vmatpush.bf16.msra.mxu0 %v3661
    %4380 = vmatpush.bf16.msra.mxu0 %v3657
    %4381 = vmatpush.bf16.msra.mxu0 %v3653
    %4382 = vmatpush.bf16.msra.mxu0 %v3649
    %4383 = vmatmul.bf16.gmra.mxu0 %v405
    %v4384 = vpop.f32.mrf.mxu0
    %v4385 = vadd.f32 %v4372, %v4384
    %v4386 = vpop.f32.mrf.mxu0
    %4387 = vdwg.mxu0
    %4388 = vmatpush.bf16.msra.mxu0 %v3709
    %4389 = vmatpush.bf16.msra.mxu0 %v3705
    %4390 = vmatpush.bf16.msra.mxu0 %v3701
    %4391 = vmatpush.bf16.msra.mxu0 %v3697
    %4392 = vmatpush.bf16.msra.mxu0 %v3693
    %4393 = vmatpush.bf16.msra.mxu0 %v3689
    %4394 = vmatpush.bf16.msra.mxu0 %v3685
    %4395 = vmatpush.bf16.msra.mxu0 %v3681
    %4396 = vmatmul.bf16.gmra.mxu0 %v406
    %v4397 = vpop.f32.mrf.mxu0
    %v4398 = vadd.f32 %v4385, %v4397
    %v4399 = vpop.f32.mrf.mxu0
    %4400 = vdwg.mxu0
    %4401 = vmatpush.bf16.msra.mxu0 %v3741
    %4402 = vmatpush.bf16.msra.mxu0 %v3737
    %4403 = vmatpush.bf16.msra.mxu0 %v3733
    %4404 = vmatpush.bf16.msra.mxu0 %v3729
    %4405 = vmatpush.bf16.msra.mxu0 %v3725
    %4406 = vmatpush.bf16.msra.mxu0 %v3721
    %4407 = vmatpush.bf16.msra.mxu0 %v3717
    %4408 = vmatpush.bf16.msra.mxu0 %v3713
    %4409 = vmatmul.bf16.gmra.mxu0 %v407
    %v4410 = vpop.f32.mrf.mxu0
    %v4411 = vadd.f32 %v4398, %v4410
    %v4412 = vpop.f32.mrf.mxu0
    %4413 = vdwg.mxu0
    %v4414 = vmax.f32 %v4099, 0.0
    %v4415 = vmax.f32 %v4203, 0.0
    %v4416 = vmax.f32 %v4307, 0.0
    %v4417 = vmax.f32 %v4411, 0.0
    %v4418 = vpack.c.bf16 %v4414, %v4414
    %v4419 = vpack.c.bf16 %v4415, %v4415
    %v4420 = vpack.c.bf16 %v4416, %v4416
    %v4421 = vpack.c.bf16 %v4417, %v4417
    %s4422 = scalar_lea.vmem [#allocation6], 256
    %v4423 = vld [vmem:[%s4422] sm:$0xf]
    %v4424 = vld [vmem:[%s4422 + $0x4] sm:$0xf]
    %v4425 = vld [vmem:[%s4422 + $0x8] sm:$0xf]
    %v4426 = vld [vmem:[%s4422 + $0xc] sm:$0xf]
    %v4427 = vld [vmem:[%s4422 + $0x10] sm:$0xf]
    %v4428 = vld [vmem:[%s4422 + $0x14] sm:$0xf]
    %v4429 = vld [vmem:[%s4422 + $0x18] sm:$0xf]
    %v4430 = vld [vmem:[%s4422 + $0x1c] sm:$0xf]
    %v4431 = vld [vmem:[%s4422 + $0x20] sm:$0xf]
    %v4432 = vld [vmem:[%s4422 + $0x24] sm:$0xf]
    %v4433 = vld [vmem:[%s4422 + $0x28] sm:$0xf]
    %v4434 = vld [vmem:[%s4422 + $0x2c] sm:$0xf]
    %v4435 = vld [vmem:[%s4422 + $0x30] sm:$0xf]
    %v4436 = vld [vmem:[%s4422 + $0x34] sm:$0xf]
    %v4437 = vld [vmem:[%s4422 + $0x38] sm:$0xf]
    %v4438 = vld [vmem:[%s4422 + $0x3c] sm:$0xf]
    %v4439 = vld [vmem:[%s4422 + $0x40] sm:$0xf]
    %v4440 = vld [vmem:[%s4422 + $0x44] sm:$0xf]
    %v4441 = vld [vmem:[%s4422 + $0x48] sm:$0xf]
    %v4442 = vld [vmem:[%s4422 + $0x4c] sm:$0xf]
    %v4443 = vld [vmem:[%s4422 + $0x50] sm:$0xf]
    %v4444 = vld [vmem:[%s4422 + $0x54] sm:$0xf]
    %v4445 = vld [vmem:[%s4422 + $0x58] sm:$0xf]
    %v4446 = vld [vmem:[%s4422 + $0x5c] sm:$0xf]
    %v4447 = vld [vmem:[%s4422 + $0x60] sm:$0xf]
    %v4448 = vld [vmem:[%s4422 + $0x64] sm:$0xf]
    %v4449 = vld [vmem:[%s4422 + $0x68] sm:$0xf]
    %v4450 = vld [vmem:[%s4422 + $0x6c] sm:$0xf]
    %v4451 = vld [vmem:[%s4422 + $0x70] sm:$0xf]
    %v4452 = vld [vmem:[%s4422 + $0x74] sm:$0xf]
    %v4453 = vld [vmem:[%s4422 + $0x78] sm:$0xf]
    %v4454 = vld [vmem:[%s4422 + $0x7c] sm:$0xf]
    %v4455 = vld [vmem:[%s4422 + $0x80] sm:$0xf]
    %v4456 = vld [vmem:[%s4422 + $0x84] sm:$0xf]
    %v4457 = vld [vmem:[%s4422 + $0x88] sm:$0xf]
    %v4458 = vld [vmem:[%s4422 + $0x8c] sm:$0xf]
    %v4459 = vld [vmem:[%s4422 + $0x90] sm:$0xf]
    %v4460 = vld [vmem:[%s4422 + $0x94] sm:$0xf]
    %v4461 = vld [vmem:[%s4422 + $0x98] sm:$0xf]
    %v4462 = vld [vmem:[%s4422 + $0x9c] sm:$0xf]
    %v4463 = vld [vmem:[%s4422 + $0xa0] sm:$0xf]
    %v4464 = vld [vmem:[%s4422 + $0xa4] sm:$0xf]
    %v4465 = vld [vmem:[%s4422 + $0xa8] sm:$0xf]
    %v4466 = vld [vmem:[%s4422 + $0xac] sm:$0xf]
    %v4467 = vld [vmem:[%s4422 + $0xb0] sm:$0xf]
    %v4468 = vld [vmem:[%s4422 + $0xb4] sm:$0xf]
    %v4469 = vld [vmem:[%s4422 + $0xb8] sm:$0xf]
    %v4470 = vld [vmem:[%s4422 + $0xbc] sm:$0xf]
    %v4471 = vld [vmem:[%s4422 + $0xc0] sm:$0xf]
    %v4472 = vld [vmem:[%s4422 + $0xc4] sm:$0xf]
    %v4473 = vld [vmem:[%s4422 + $0xc8] sm:$0xf]
    %v4474 = vld [vmem:[%s4422 + $0xcc] sm:$0xf]
    %v4475 = vld [vmem:[%s4422 + $0xd0] sm:$0xf]
    %v4476 = vld [vmem:[%s4422 + $0xd4] sm:$0xf]
    %v4477 = vld [vmem:[%s4422 + $0xd8] sm:$0xf]
    %v4478 = vld [vmem:[%s4422 + $0xdc] sm:$0xf]
    %v4479 = vld [vmem:[%s4422 + $0xe0] sm:$0xf]
    %v4480 = vld [vmem:[%s4422 + $0xe4] sm:$0xf]
    %v4481 = vld [vmem:[%s4422 + $0xe8] sm:$0xf]
    %v4482 = vld [vmem:[%s4422 + $0xec] sm:$0xf]
    %v4483 = vld [vmem:[%s4422 + $0xf0] sm:$0xf]
    %v4484 = vld [vmem:[%s4422 + $0xf4] sm:$0xf]
    %v4485 = vld [vmem:[%s4422 + $0xf8] sm:$0xf]
    %v4486 = vld [vmem:[%s4422 + $0xfc] sm:$0xf]
    %s4487 = scalar_lea.vmem [#allocation7], 1
    %v4488 = vld [vmem:[%s4487] sm:$0x1]
    %v4490 = vperm.slane %v4488, 0
    %v4556 = vunpack.c.l.b16 %v4423
    %v4557 = vunpack.c.l.b16 %v4424
    %v4558 = vunpack.c.l.b16 %v4425
    %v4559 = vunpack.c.l.b16 %v4426
    %v4560 = vunpack.c.l.b16 %v4427
    %v4561 = vunpack.c.l.b16 %v4428
    %v4562 = vunpack.c.l.b16 %v4429
    %v4563 = vunpack.c.l.b16 %v4430
    %v4564 = vunpack.c.l.b16 %v4431
    %v4565 = vunpack.c.l.b16 %v4432
    %v4566 = vunpack.c.l.b16 %v4433
    %v4567 = vunpack.c.l.b16 %v4434
    %v4568 = vunpack.c.l.b16 %v4435
    %v4569 = vunpack.c.l.b16 %v4436
    %v4570 = vunpack.c.l.b16 %v4437
    %v4571 = vunpack.c.l.b16 %v4438
    %v4572 = vunpack.c.l.b16 %v4439
    %v4573 = vunpack.c.l.b16 %v4440
    %v4574 = vunpack.c.l.b16 %v4441
    %v4575 = vunpack.c.l.b16 %v4442
    %v4576 = vunpack.c.l.b16 %v4443
    %v4577 = vunpack.c.l.b16 %v4444
    %v4578 = vunpack.c.l.b16 %v4445
    %v4579 = vunpack.c.l.b16 %v4446
    %v4580 = vunpack.c.l.b16 %v4447
    %v4581 = vunpack.c.l.b16 %v4448
    %v4582 = vunpack.c.l.b16 %v4449
    %v4583 = vunpack.c.l.b16 %v4450
    %v4584 = vunpack.c.l.b16 %v4451
    %v4585 = vunpack.c.l.b16 %v4452
    %v4586 = vunpack.c.l.b16 %v4453
    %v4587 = vunpack.c.l.b16 %v4454
    %v4588 = vunpack.c.l.b16 %v4455
    %v4589 = vunpack.c.l.b16 %v4456
    %v4590 = vunpack.c.l.b16 %v4457
    %v4591 = vunpack.c.l.b16 %v4458
    %v4592 = vunpack.c.l.b16 %v4459
    %v4593 = vunpack.c.l.b16 %v4460
    %v4594 = vunpack.c.l.b16 %v4461
    %v4595 = vunpack.c.l.b16 %v4462
    %v4596 = vunpack.c.l.b16 %v4463
    %v4597 = vunpack.c.l.b16 %v4464
    %v4598 = vunpack.c.l.b16 %v4465
    %v4599 = vunpack.c.l.b16 %v4466
    %v4600 = vunpack.c.l.b16 %v4467
    %v4601 = vunpack.c.l.b16 %v4468
    %v4602 = vunpack.c.l.b16 %v4469
    %v4603 = vunpack.c.l.b16 %v4470
    %v4604 = vunpack.c.l.b16 %v4471
    %v4605 = vunpack.c.l.b16 %v4472
    %v4606 = vunpack.c.l.b16 %v4473
    %v4607 = vunpack.c.l.b16 %v4474
    %v4608 = vunpack.c.l.b16 %v4475
    %v4609 = vunpack.c.l.b16 %v4476
    %v4610 = vunpack.c.l.b16 %v4477
    %v4611 = vunpack.c.l.b16 %v4478
    %v4612 = vunpack.c.l.b16 %v4479
    %v4613 = vunpack.c.l.b16 %v4480
    %v4614 = vunpack.c.l.b16 %v4481
    %v4615 = vunpack.c.l.b16 %v4482
    %v4616 = vunpack.c.l.b16 %v4483
    %v4617 = vunpack.c.l.b16 %v4484
    %v4618 = vunpack.c.l.b16 %v4485
    %v4619 = vunpack.c.l.b16 %v4486
    %v4620 = vpack.c.b16 %v4557, %v4556
    %v4621 = vpack.c.b16 %v4559, %v4558
    %v4622 = vpack.c.b16 %v4561, %v4560
    %v4623 = vpack.c.b16 %v4563, %v4562
    %v4624 = vpack.c.b16 %v4565, %v4564
    %v4625 = vpack.c.b16 %v4567, %v4566
    %v4626 = vpack.c.b16 %v4569, %v4568
    %v4627 = vpack.c.b16 %v4571, %v4570
    %v4628 = vpack.c.b16 %v4573, %v4572
    %v4629 = vpack.c.b16 %v4575, %v4574
    %v4630 = vpack.c.b16 %v4577, %v4576
    %v4631 = vpack.c.b16 %v4579, %v4578
    %v4632 = vpack.c.b16 %v4581, %v4580
    %v4633 = vpack.c.b16 %v4583, %v4582
    %v4634 = vpack.c.b16 %v4585, %v4584
    %v4635 = vpack.c.b16 %v4587, %v4586
    %v4636 = vpack.c.b16 %v4589, %v4588
    %v4637 = vpack.c.b16 %v4591, %v4590
    %v4638 = vpack.c.b16 %v4593, %v4592
    %v4639 = vpack.c.b16 %v4595, %v4594
    %v4640 = vpack.c.b16 %v4597, %v4596
    %v4641 = vpack.c.b16 %v4599, %v4598
    %v4642 = vpack.c.b16 %v4601, %v4600
    %v4643 = vpack.c.b16 %v4603, %v4602
    %v4644 = vpack.c.b16 %v4605, %v4604
    %v4645 = vpack.c.b16 %v4607, %v4606
    %v4646 = vpack.c.b16 %v4609, %v4608
    %v4647 = vpack.c.b16 %v4611, %v4610
    %v4648 = vpack.c.b16 %v4613, %v4612
    %v4649 = vpack.c.b16 %v4615, %v4614
    %v4650 = vpack.c.b16 %v4617, %v4616
    %v4651 = vpack.c.b16 %v4619, %v4618
    %4684 = vmatpush.bf16.msra.mxu0 %v4627
    %4685 = vmatpush.bf16.msra.mxu0 %v4626
    %4686 = vmatpush.bf16.msra.mxu0 %v4625
    %4687 = vmatpush.bf16.msra.mxu0 %v4624
    %4688 = vmatpush.bf16.msra.mxu0 %v4623
    %4689 = vmatpush.bf16.msra.mxu0 %v4622
    %4690 = vmatpush.bf16.msra.mxu0 %v4621
    %4691 = vmatpush.bf16.msra.mxu0 %v4620
    %4692 = vmatmul.bf16.gmra.mxu0 %v4418
    %v4693 = vpop.f32.mrf.mxu0
    %v4694 = vadd.f32 %v4490, %v4693
    %v4695 = vpop.f32.mrf.mxu0
    %4696 = vdwg.mxu0
    %4697 = vmatpush.bf16.msra.mxu0 %v4635
    %4698 = vmatpush.bf16.msra.mxu0 %v4634
    %4699 = vmatpush.bf16.msra.mxu0 %v4633
    %4700 = vmatpush.bf16.msra.mxu0 %v4632
    %4701 = vmatpush.bf16.msra.mxu0 %v4631
    %4702 = vmatpush.bf16.msra.mxu0 %v4630
    %4703 = vmatpush.bf16.msra.mxu0 %v4629
    %4704 = vmatpush.bf16.msra.mxu0 %v4628
    %4705 = vmatmul.bf16.gmra.mxu0 %v4419
    %v4706 = vpop.f32.mrf.mxu0
    %v4707 = vadd.f32 %v4694, %v4706
    %v4708 = vpop.f32.mrf.mxu0
    %4709 = vdwg.mxu0
    %4710 = vmatpush.bf16.msra.mxu0 %v4643
    %4711 = vmatpush.bf16.msra.mxu0 %v4642
    %4712 = vmatpush.bf16.msra.mxu0 %v4641
    %4713 = vmatpush.bf16.msra.mxu0 %v4640
    %4714 = vmatpush.bf16.msra.mxu0 %v4639
    %4715 = vmatpush.bf16.msra.mxu0 %v4638
    %4716 = vmatpush.bf16.msra.mxu0 %v4637
    %4717 = vmatpush.bf16.msra.mxu0 %v4636
    %4718 = vmatmul.bf16.gmra.mxu0 %v4420
    %v4719 = vpop.f32.mrf.mxu0
    %v4720 = vadd.f32 %v4707, %v4719
    %v4721 = vpop.f32.mrf.mxu0
    %4722 = vdwg.mxu0
    %4723 = vmatpush.bf16.msra.mxu0 %v4651
    %4724 = vmatpush.bf16.msra.mxu0 %v4650
    %4725 = vmatpush.bf16.msra.mxu0 %v4649
    %4726 = vmatpush.bf16.msra.mxu0 %v4648
    %4727 = vmatpush.bf16.msra.mxu0 %v4647
    %4728 = vmatpush.bf16.msra.mxu0 %v4646
    %4729 = vmatpush.bf16.msra.mxu0 %v4645
    %4730 = vmatpush.bf16.msra.mxu0 %v4644
    %4731 = vmatmul.bf16.gmra.mxu0 %v4421
    %v4732 = vpop.f32.mrf.mxu0
    %v4733 = vadd.f32 %v4720, %v4732
    %v4734 = vpop.f32.mrf.mxu0
    %4735 = vdwg.mxu0
    %v4736 = vmax.f32 %v4733, 0.0
    %v4737 = vpack.c.bf16 %v4736, %v4736
    %s4738 = scalar_lea.vmem [#allocation9], 64
    %v4739 = vld [vmem:[%s4738] sm:$0xf]
    %v4740 = vld [vmem:[%s4738 + $0x4] sm:$0xf]
    %v4741 = vld [vmem:[%s4738 + $0x8] sm:$0xf]
    %v4742 = vld [vmem:[%s4738 + $0xc] sm:$0xf]
    %v4743 = vld [vmem:[%s4738 + $0x10] sm:$0xf]
    %v4744 = vld [vmem:[%s4738 + $0x14] sm:$0xf]
    %v4745 = vld [vmem:[%s4738 + $0x18] sm:$0xf]
    %v4746 = vld [vmem:[%s4738 + $0x1c] sm:$0xf]
    %v4747 = vld [vmem:[%s4738 + $0x20] sm:$0xf]
    %v4748 = vld [vmem:[%s4738 + $0x24] sm:$0xf]
    %v4749 = vld [vmem:[%s4738 + $0x28] sm:$0xf]
    %v4750 = vld [vmem:[%s4738 + $0x2c] sm:$0xf]
    %v4751 = vld [vmem:[%s4738 + $0x30] sm:$0xf]
    %v4752 = vld [vmem:[%s4738 + $0x34] sm:$0xf]
    %v4753 = vld [vmem:[%s4738 + $0x38] sm:$0xf]
    %v4754 = vld [vmem:[%s4738 + $0x3c] sm:$0xf]
    %v4771 = vunpack.c.l.b16 %v4739
    %v4772 = vunpack.c.l.b16 %v4740
    %v4773 = vunpack.c.l.b16 %v4741
    %v4774 = vunpack.c.l.b16 %v4742
    %v4775 = vunpack.c.l.b16 %v4743
    %v4776 = vunpack.c.l.b16 %v4744
    %v4777 = vunpack.c.l.b16 %v4745
    %v4778 = vunpack.c.l.b16 %v4746
    %v4779 = vunpack.c.l.b16 %v4747
    %v4780 = vunpack.c.l.b16 %v4748
    %v4781 = vunpack.c.l.b16 %v4749
    %v4782 = vunpack.c.l.b16 %v4750
    %v4783 = vunpack.c.l.b16 %v4751
    %v4784 = vunpack.c.l.b16 %v4752
    %v4785 = vunpack.c.l.b16 %v4753
    %v4786 = vunpack.c.l.b16 %v4754
    %v4787 = vpack.c.b16 %v4772, %v4771
    %v4788 = vpack.c.b16 %v4774, %v4773
    %v4789 = vpack.c.b16 %v4776, %v4775
    %v4790 = vpack.c.b16 %v4778, %v4777
    %v4791 = vpack.c.b16 %v4780, %v4779
    %v4792 = vpack.c.b16 %v4782, %v4781
    %v4793 = vpack.c.b16 %v4784, %v4783
    %v4794 = vpack.c.b16 %v4786, %v4785
    %4803 = vmatpush.bf16.msra.mxu0 %v4794
    %4804 = vmatpush.bf16.msra.mxu0 %v4793
    %4805 = vmatpush.bf16.msra.mxu0 %v4792
    %4806 = vmatpush.bf16.msra.mxu0 %v4791
    %4807 = vmatpush.bf16.msra.mxu0 %v4790
    %4808 = vmatpush.bf16.msra.mxu0 %v4789
    %4809 = vmatpush.bf16.msra.mxu0 %v4788
    %4810 = vmatpush.bf16.msra.mxu0 %v4787
    %4811 = vmatmul.bf16.gmra.mxu0 %v4737
    %v4812 = vpop.f32.mrf.mxu0
    %v4813 = vadd.f32 0.0, %v4812
    %v4814 = vpop.f32.mrf.mxu0
    %4815 = vdwg.mxu0
    %v4832 = vunpack.c.l.b16 %v2434
    %v4833 = vunpack.c.l.b16 %v2435
    %v4834 = vunpack.c.l.b16 %v2436
    %v4835 = vunpack.c.l.b16 %v2437
    %v4836 = vunpack.c.l.b16 %v2438
    %v4837 = vunpack.c.l.b16 %v2439
    %v4838 = vunpack.c.l.b16 %v2440
    %v4839 = vunpack.c.l.b16 %v2441
    %v4840 = vunpack.c.l.b16 %v2442
    %v4841 = vunpack.c.l.b16 %v2443
    %v4842 = vunpack.c.l.b16 %v2444
    %v4843 = vunpack.c.l.b16 %v2445
    %v4844 = vunpack.c.l.b16 %v2446
    %v4845 = vunpack.c.l.b16 %v2447
    %v4846 = vunpack.c.l.b16 %v2448
    %v4847 = vunpack.c.l.b16 %v2449
    %v4848 = vpack.c.b16 %v4833, %v4832
    %v4849 = vpack.c.b16 %v4835, %v4834
    %v4850 = vpack.c.b16 %v4837, %v4836
    %v4851 = vpack.c.b16 %v4839, %v4838
    %v4852 = vpack.c.b16 %v4841, %v4840
    %v4853 = vpack.c.b16 %v4843, %v4842
    %v4854 = vpack.c.b16 %v4845, %v4844
    %v4855 = vpack.c.b16 %v4847, %v4846
    %4864 = vmatpush.bf16.msra.mxu0 %v4855
    %4865 = vmatpush.bf16.msra.mxu0 %v4854
    %4866 = vmatpush.bf16.msra.mxu0 %v4853
    %4867 = vmatpush.bf16.msra.mxu0 %v4852
    %4868 = vmatpush.bf16.msra.mxu0 %v4851
    %4869 = vmatpush.bf16.msra.mxu0 %v4850
    %4870 = vmatpush.bf16.msra.mxu0 %v4849
    %4871 = vmatpush.bf16.msra.mxu0 %v4848
    %4872 = vmatmul.bf16.gmra.mxu0 %v2433
    %v4873 = vpop.f32.mrf.mxu0
    %v4874 = vadd.f32 %v4813, %v4873
    %v4875 = vpop.f32.mrf.mxu0
    %4876 = vdwg.mxu0
    %v4877 = vld [vmem:[#allocation10] sm:$0x1]
    %v4879 = vperm.slane %v4877, 0
    %v4881 = vadd.f32 %v4874, %v4879
    %4882 = vst [vmem:[%s7] sm:$0xff] %v4881
    // Predicated region
    $region54: #{forward.1} parent=1 // pred_check
      _
    $region55: #{forward.1} parent=1 // pred_check_branch
      %4884 = sbr.rel (0) target = $region57
    $region56: #{forward.1} parent=1 // pred_region
      _
    $region57: #{forward.1} parent=1 // pred_fallthru
      _
    // Predicated region
    $region58: #{forward.1} parent=1 // pred_check
      _
    $region59: #{forward.1} parent=1 // pred_check_branch
      %4886 = sbr.rel (0) target = $region61
    $region60: #{forward.1} parent=1 // pred_region
      _
    $region61: #{forward.1} parent=1 // pred_fallthru
      _
    %4887 = vsyncpa [#allocation3], 1
    %4888 = vsyncpa [#allocation5], 1
    %4889 = vsyncpa [#allocation8], 1
    %4890 = vsyncpa [#allocation11], 1

</llo_original>
